<compile_context>
chip_gen: v7x
topology: tpu7x:2x2x1
jax: 0.10.0
libtpu: 0.0.40
codegen_flags: <defaults>
</compile_context>

<pallas_src>
import functools

import jax
import jax.numpy as jnp
from jax import lax
from jax.experimental import pallas as pl
from jax.experimental.pallas import tpu as pltpu


# 3x3 tap enumeration: k = (dy + 1) * 3 + (dx + 1); k == 4 is the (unshifted) center.
_TAPS = tuple((dy, dx) for dy in (-1, 0, 1) for dx in (-1, 0, 1))


def bottleneck_kernel(x_ref, mask_ref, w2_ref, b2_ref, w3_ref, wsc_ref, b3sc_ref,
                      o_ref, *, H, W):
    # x_ref:    (Bn, C, H*W)      f32  Bn images, channels-first, spatially flattened
    # mask_ref: (9, H*W)          f32  per-tap border-validity masks (row 4 unused)
    # w2_ref:   (9, C2P, C)       bf16 per-tap 3x3 conv2 weights, bn2 scale folded in
    # b2_ref:   (C2P, 1)          f32  bn2 shift
    # w3_ref:   (CexpP, C2P)      bf16 conv3 weights, bn3 scale folded in
    # wsc_ref:  (CexpP, C)        bf16 shortcut 1x1 weights, shortcut-bn scale folded in
    # b3sc_ref: (CexpP, 1)        f32  bn3 shift + shortcut-bn shift
    # o_ref:    (Bn, CexpP, H*W)  f32  lane-dense output (last dim multiple of 128 here)
    Bn, _, HW = x_ref.shape

    def one_image(i, carry):
        xi = x_ref[i]                                         # (C, HW) f32

        # conv2 (3x3, pad=1) + bn2 + relu: 9 per-tap MXU contractions accumulated in
        # f32.  Each tap is a lane rotation of the flat image (XLU slot, cheap) times a
        # precomputed border mask, cast to bf16 right before the MXU.  The circular
        # wrap positions of the roll are always border-invalid, so the masks zero them.
        acc = None
        for k, (dy, dx) in enumerate(_TAPS):
            off = dy * W + dx
            tap = xi if off == 0 else pltpu.roll(xi, shift=(-off) % HW, axis=1)
            if k != 4:                                        # center tap needs no mask
                tap = tap * mask_ref[k:k + 1, :]
            d = jnp.dot(w2_ref[k], tap.astype(jnp.bfloat16),
                        preferred_element_type=jnp.float32)
            acc = d if acc is None else acc + d
        out2 = jnp.maximum(acc + b2_ref[...], 0.0)            # (C2P, HW) f32

        # conv3 (1x1)*bn3 + 1x1 shortcut*bn_sc + residual + relu: two MXU contractions
        # (no concat copy) and a single fused bias; the residual add is the sum of the
        # two contraction results.
        y = jnp.dot(w3_ref[...], out2.astype(jnp.bfloat16),
                    preferred_element_type=jnp.float32)
        y = y + jnp.dot(wsc_ref[...], xi.astype(jnp.bfloat16),
                        preferred_element_type=jnp.float32)
        o_ref[i] = jnp.maximum(y + b3sc_ref[...], 0.0)        # (CexpP, HW) f32
        return carry

    # Amortize per-grid-step overhead over the Bn images in this block.
    lax.fori_loop(0, Bn, one_image, None, unroll=True)


def _round_up(x, m):
    return ((x + m - 1) // m) * m


def _border_masks(H, W):
    """(9, H*W) f32 validity masks, one per 3x3 tap (row 4 is all-ones / unused)."""
    HW = H * W
    row = jnp.arange(HW, dtype=jnp.int32) // W
    col = jnp.arange(HW, dtype=jnp.int32) % W
    rows = []
    for dy, dx in _TAPS:
        ok = ((row + dy >= 0) & (row + dy < H) & (col + dx >= 0) & (col + dx < W))
        rows.append(ok.astype(jnp.float32))
    return jnp.stack(rows, axis=0)


def _fold_params(params, c2p, cexp_p):
    """Fold BN scales into bf16 conv weights / BN shifts into f32 biases; pad the
    weight-side channel dims (conv2 out-channels -> c2p, expansion -> cexp_p)."""
    w2, s2, b2, w3, s3, b3, wsc, ssc, bsc = params
    C = w2.shape[1]
    Cexp = w3.shape[0]

    # conv2: (O, I, 3, 3) scaled by s2 -> (kh, kw, O, I) -> (9, C2P, C).  The tap index
    # k = kh*3 + kw matches the kernel's (dy, dx) enumeration (dy = kh-1, dx = kw-1).
    w2f = jnp.transpose(w2 * s2[:, None, None, None], (2, 3, 0, 1))
    w2f = jnp.pad(w2f, ((0, 0), (0, 0), (0, c2p - C), (0, 0))).reshape(9, c2p, C)
    b2f = jnp.pad(b2, (0, c2p - C)).reshape(c2p, 1)

    # conv3 / shortcut 1x1: fold BN scales into the rows; the two BN shifts (both sit
    # before the final ReLU) are summed into a single bias.
    w3f = jnp.pad(w3 * s3[:, None], ((0, cexp_p - Cexp), (0, c2p - C)))
    wscf = jnp.pad(wsc * ssc[:, None], ((0, cexp_p - Cexp), (0, 0)))
    b3sc = jnp.pad(b3 + bsc, (0, cexp_p - Cexp)).reshape(cexp_p, 1)

    return (w2f.astype(jnp.bfloat16), b2f.astype(jnp.float32),
            w3f.astype(jnp.bfloat16), wscf.astype(jnp.bfloat16),
            b3sc.astype(jnp.float32))


def _pick_block_n(N, max_per_block=8):
    """Images per grid step: amortize per-step overhead (up to 8 images per block) but
    keep >= 2 grid steps when possible so both of v7x's TensorCores get work."""
    bn = min(N, max_per_block)
    while N % bn:
        bn -= 1
    if N // bn < 2 and N > 1:
        bn = max(1, N // 2)
        while N % bn:
            bn -= 1
    return bn


def bottleneck_pallas(x_nchw, params, *, images_per_block=None):
    """x_nchw: (N, C, H, W) float32. Returns (N, 4C, H, W) float32."""
    N, C, H, W = x_nchw.shape
    HW = H * W
    Cexp = params[3].shape[0]
    C2P = _round_up(C, 8)              # conv2 out-channel pad (f32 sublane tile)
    CexpP = _round_up(Cexp, 8)
    Bn = images_per_block or _pick_block_n(N)
    assert N % Bn == 0

    w2f, b2f, w3f, wscf, b3sc = _fold_params(params, C2P, CexpP)
    masks = _border_masks(H, W)

    # x stays unpadded in HBM: (N, C, H, W) -> (N, C, H*W) is a pure reshape.  The 3x3
    # halo is built inside the kernel (lane rolls + masks), so there is no extra
    # host-side pad pass over the activation.
    x = x_nchw.reshape(N, C, HW)

    kernel = functools.partial(bottleneck_kernel, H=H, W=W)

    flops = 2 * N * HW * (9 * C2P * C + CexpP * C2P + CexpP * C)
    bytes_accessed = (x.size * 4 + N * CexpP * HW * 4 + masks.size * 4
                      + w2f.size * 2 + w3f.size * 2 + wscf.size * 2
                      + b2f.size * 4 + b3sc.size * 4)

    out = pl.pallas_call(
        kernel,
        out_shape=jax.ShapeDtypeStruct((N, CexpP, HW), jnp.float32),
        grid_spec=pltpu.PrefetchScalarGridSpec(
            num_scalar_prefetch=0,
            grid=(N // Bn,),
            in_specs=[
                pl.BlockSpec((Bn, C, HW), lambda n: (n, 0, 0)),
                pl.BlockSpec((9, HW), lambda n: (0, 0)),
                pl.BlockSpec((9, C2P, C), lambda n: (0, 0, 0)),
                pl.BlockSpec((C2P, 1), lambda n: (0, 0)),
                pl.BlockSpec((CexpP, C2P), lambda n: (0, 0)),
                pl.BlockSpec((CexpP, C), lambda n: (0, 0)),
                pl.BlockSpec((CexpP, 1), lambda n: (0, 0)),
            ],
            out_specs=pl.BlockSpec((Bn, CexpP, HW), lambda n: (n, 0, 0)),
        ),
        compiler_params=pltpu.CompilerParams(
            dimension_semantics=("parallel",)),
        cost_estimate=pl.CostEstimate(
            flops=flops, transcendentals=0, bytes_accessed=bytes_accessed),
    )(x, masks, w2f, b2f, w3f, wscf, b3sc)

    if CexpP != Cexp:
        out = out[:, :Cexp, :]
    # Lane-dense channels-first output -> NCHW is again just a reshape (no transpose).
    return out.reshape(N, Cexp, H, W)


def make_params(key, in_channels, out_channels, factor=4, eps=1e-5):
    """Deterministic synthetic parameters in PyTorch-like layouts.

    Conv weights: 3x3 as (O, I, 3, 3); 1x1 convs as (O, I).  BatchNorm (inference) is
    represented by a folded per-channel (scale, shift)."""
    assert in_channels == out_channels, \
        "reference forward applies conv2 (C->C) directly to x, so Cin must equal Cout"
    C = out_channels
    Cexp = out_channels * factor
    ks = jax.random.split(key, 6)

    def bn_fold(k, ch):
        kg, kb, km, kv = jax.random.split(k, 4)
        gamma = 1.0 + 0.1 * jax.random.normal(kg, (ch,), jnp.float32)
        beta = 0.1 * jax.random.normal(kb, (ch,), jnp.float32)
        mean = 0.1 * jax.random.normal(km, (ch,), jnp.float32)
        var = jnp.abs(jax.random.normal(kv, (ch,), jnp.float32)) + 0.5
        scale = gamma / jnp.sqrt(var + eps)
        shift = beta - mean * scale
        return scale, shift

    w2 = 0.1 * jax.random.normal(ks[0], (C, C, 3, 3), jnp.float32)       # OIHW
    s2, b2 = bn_fold(ks[1], C)
    w3 = 0.1 * jax.random.normal(ks[2], (Cexp, C), jnp.float32)          # 1x1 (O, I)
    s3, b3 = bn_fold(ks[3], Cexp)
    wsc = 0.1 * jax.random.normal(ks[4], (Cexp, C), jnp.float32)         # 1x1 (O, I)
    ssc, bsc = bn_fold(ks[5], Cexp)

    return (w2, s2, b2, w3, s3, b3, wsc, ssc, bsc)


def bottleneck_reference(x_nchw, params):
    """Pure-JAX f32 reference (same folded-BN / dead-conv1 semantics), NCHW throughout."""
    w2, s2, b2, w3, s3, b3, wsc, ssc, bsc = params
    out2 = lax.conv_general_dilated(
        x_nchw, w2, window_strides=(1, 1), padding="SAME",
        dimension_numbers=("NCHW", "OIHW", "NCHW"))
    out2 = jnp.maximum(out2 * s2[None, :, None, None] + b2[None, :, None, None], 0.0)
    out3 = (jnp.einsum("nchw,oc->nohw", out2, w3)
            * s3[None, :, None, None] + b3[None, :, None, None])
    sc = (jnp.einsum("nchw,oc->nohw", x_nchw, wsc)
          * ssc[None, :, None, None] + bsc[None, :, None, None])
    return jnp.maximum(out3 + sc, 0.0)


if __name__ == "__main__":
    key = jax.random.PRNGKey(0)
    kx, kp = jax.random.split(key)

    # Small shapes consistent with the module: batch=8 exercises both the multi-image
    # in-kernel loop (Bn=4) and a 2-wide parallel grid; in_channels == out_channels == 4.
    N, C, H, W = 8, 4, 16, 16
    x = jax.random.normal(kx, (N, C, H, W), jnp.float32)
    params = make_params(kp, in_channels=C, out_channels=C, factor=4)

    # TODO(synk): conv1/bn1 of the reference module are dead code (their output is
    # overwritten before use in forward()) and are intentionally not computed.

    y = jax.block_until_ready(bottleneck_pallas(x, params))
    y_ref = bottleneck_reference(x, params)

    assert y.shape == (N, 4 * C, H, W)
    # MXU operands are bf16 (f32 accumulation), so compare to the f32 reference with a
    # correspondingly loosened tolerance.
    assert jnp.allclose(y, y_ref, atol=2e-2, rtol=2e-2), "mismatch vs reference"

    print("KERNEL_OK")
</pallas_src>

<mosaic_0001>
module attributes {stable_mosaic.version = 11 : i64} {
  func.func @bottleneck_kernel(%arg0: i32, %arg1: memref<4x4x256xf32, #tpu.memory_space<vmem>>, %arg2: memref<9x256xf32, #tpu.memory_space<vmem>>, %arg3: memref<9x8x4xbf16, #tpu.memory_space<vmem>>, %arg4: memref<8x1xf32, #tpu.memory_space<vmem>>, %arg5: memref<16x8xbf16, #tpu.memory_space<vmem>>, %arg6: memref<16x4xbf16, #tpu.memory_space<vmem>>, %arg7: memref<16x1xf32, #tpu.memory_space<vmem>>, %arg8: memref<4x16x256xf32, #tpu.memory_space<vmem>>) attributes {dimension_semantics = [#tpu.dimension_semantics<parallel>], iteration_bounds = array<i64: 2>, scalar_prefetch = 0 : i64, scratch_operands = 0 : i64, tpu.core_type = #tpu.core_type<tc>, window_params = [{transform_indices = @transform_0, window_bounds = array<i64: 4, 4, 256>}, {pipeline_mode = #tpu.pipeline_mode<synchronous>, transform_indices = @transform_1, window_bounds = array<i64: 9, 256>}, {pipeline_mode = #tpu.pipeline_mode<synchronous>, transform_indices = @transform_2, window_bounds = array<i64: 9, 8, 4>}, {pipeline_mode = #tpu.pipeline_mode<synchronous>, transform_indices = @transform_3, window_bounds = array<i64: 8, 1>}, {pipeline_mode = #tpu.pipeline_mode<synchronous>, transform_indices = @transform_4, window_bounds = array<i64: 16, 8>}, {pipeline_mode = #tpu.pipeline_mode<synchronous>, transform_indices = @transform_5, window_bounds = array<i64: 16, 4>}, {pipeline_mode = #tpu.pipeline_mode<synchronous>, transform_indices = @transform_6, window_bounds = array<i64: 16, 1>}, {transform_indices = @transform_7, window_bounds = array<i64: 4, 16, 256>}]} {
    %c0_i32 = arith.constant 0 : i32
    %0 = arith.index_cast %c0_i32 : i32 to index
    %c0 = arith.constant 0 : index
    %c0_0 = arith.constant 0 : index
    %1 = vector.load %arg1[%0, %c0, %c0_0] : memref<4x4x256xf32, #tpu.memory_space<vmem>>, vector<1x4x256xf32>
    %2 = vector.shape_cast %1 : vector<1x4x256xf32> to vector<4x256xf32>
    %c17_i32 = arith.constant 17 : i32
    %3 = tpu.dynamic_rotate %2 by %c17_i32 dim 1 : vector<4x256xf32>, i32 -> vector<4x256xf32>
    %c0_1 = arith.constant 0 : index
    %c0_2 = arith.constant 0 : index
    %4 = vector.load %arg2[%c0_1, %c0_2] : memref<9x256xf32, #tpu.memory_space<vmem>>, vector<1x256xf32>
    %5 = vector.broadcast %4 : vector<1x256xf32> to vector<4x256xf32>
    %6 = arith.mulf %3, %5 : vector<4x256xf32>
    %c0_3 = arith.constant 0 : index
    %c0_4 = arith.constant 0 : index
    %c0_5 = arith.constant 0 : index
    %7 = vector.load %arg3[%c0_3, %c0_4, %c0_5] : memref<9x8x4xbf16, #tpu.memory_space<vmem>>, vector<1x8x4xbf16>
    %8 = vector.shape_cast %7 : vector<1x8x4xbf16> to vector<8x4xbf16>
    %9 = arith.truncf %6 : vector<4x256xf32> to vector<4x256xbf16>
    %cst = arith.constant dense<0.000000e+00> : vector<8x256xf32>
    %10 = tpu.matmul %8, %9, %cst {dimension_numbers = #tpu.dot_dimension_numbers<[1], [0], [0], [1], [0, 0, 1, 1], [], []>} : vector<8x4xbf16>, vector<4x256xbf16>, vector<8x256xf32> -> vector<8x256xf32>
    %c16_i32 = arith.constant 16 : i32
    %11 = tpu.dynamic_rotate %2 by %c16_i32 dim 1 : vector<4x256xf32>, i32 -> vector<4x256xf32>
    %c1 = arith.constant 1 : index
    %c0_6 = arith.constant 0 : index
    %12 = vector.load %arg2[%c1, %c0_6] : memref<9x256xf32, #tpu.memory_space<vmem>>, vector<1x256xf32>
    %13 = vector.broadcast %12 : vector<1x256xf32> to vector<4x256xf32>
    %14 = arith.mulf %11, %13 : vector<4x256xf32>
    %c1_7 = arith.constant 1 : index
    %c0_8 = arith.constant 0 : index
    %c0_9 = arith.constant 0 : index
    %15 = vector.load %arg3[%c1_7, %c0_8, %c0_9] : memref<9x8x4xbf16, #tpu.memory_space<vmem>>, vector<1x8x4xbf16>
    %16 = vector.shape_cast %15 : vector<1x8x4xbf16> to vector<8x4xbf16>
    %17 = arith.truncf %14 : vector<4x256xf32> to vector<4x256xbf16>
    %cst_10 = arith.constant dense<0.000000e+00> : vector<8x256xf32>
    %18 = tpu.matmul %16, %17, %cst_10 {dimension_numbers = #tpu.dot_dimension_numbers<[1], [0], [0], [1], [0, 0, 1, 1], [], []>} : vector<8x4xbf16>, vector<4x256xbf16>, vector<8x256xf32> -> vector<8x256xf32>
    %19 = arith.addf %10, %18 : vector<8x256xf32>
    %c15_i32 = arith.constant 15 : i32
    %20 = tpu.dynamic_rotate %2 by %c15_i32 dim 1 : vector<4x256xf32>, i32 -> vector<4x256xf32>
    %c2 = arith.constant 2 : index
    %c0_11 = arith.constant 0 : index
    %21 = vector.load %arg2[%c2, %c0_11] : memref<9x256xf32, #tpu.memory_space<vmem>>, vector<1x256xf32>
    %22 = vector.broadcast %21 : vector<1x256xf32> to vector<4x256xf32>
    %23 = arith.mulf %20, %22 : vector<4x256xf32>
    %c2_12 = arith.constant 2 : index
    %c0_13 = arith.constant 0 : index
    %c0_14 = arith.constant 0 : index
    %24 = vector.load %arg3[%c2_12, %c0_13, %c0_14] : memref<9x8x4xbf16, #tpu.memory_space<vmem>>, vector<1x8x4xbf16>
    %25 = vector.shape_cast %24 : vector<1x8x4xbf16> to vector<8x4xbf16>
    %26 = arith.truncf %23 : vector<4x256xf32> to vector<4x256xbf16>
    %cst_15 = arith.constant dense<0.000000e+00> : vector<8x256xf32>
    %27 = tpu.matmul %25, %26, %cst_15 {dimension_numbers = #tpu.dot_dimension_numbers<[1], [0], [0], [1], [0, 0, 1, 1], [], []>} : vector<8x4xbf16>, vector<4x256xbf16>, vector<8x256xf32> -> vector<8x256xf32>
    %28 = arith.addf %19, %27 : vector<8x256xf32>
    %c1_i32 = arith.constant 1 : i32
    %29 = tpu.dynamic_rotate %2 by %c1_i32 dim 1 : vector<4x256xf32>, i32 -> vector<4x256xf32>
    %c3 = arith.constant 3 : index
    %c0_16 = arith.constant 0 : index
    %30 = vector.load %arg2[%c3, %c0_16] : memref<9x256xf32, #tpu.memory_space<vmem>>, vector<1x256xf32>
    %31 = vector.broadcast %30 : vector<1x256xf32> to vector<4x256xf32>
    %32 = arith.mulf %29, %31 : vector<4x256xf32>
    %c3_17 = arith.constant 3 : index
    %c0_18 = arith.constant 0 : index
    %c0_19 = arith.constant 0 : index
    %33 = vector.load %arg3[%c3_17, %c0_18, %c0_19] : memref<9x8x4xbf16, #tpu.memory_space<vmem>>, vector<1x8x4xbf16>
    %34 = vector.shape_cast %33 : vector<1x8x4xbf16> to vector<8x4xbf16>
    %35 = arith.truncf %32 : vector<4x256xf32> to vector<4x256xbf16>
    %cst_20 = arith.constant dense<0.000000e+00> : vector<8x256xf32>
    %36 = tpu.matmul %34, %35, %cst_20 {dimension_numbers = #tpu.dot_dimension_numbers<[1], [0], [0], [1], [0, 0, 1, 1], [], []>} : vector<8x4xbf16>, vector<4x256xbf16>, vector<8x256xf32> -> vector<8x256xf32>
    %37 = arith.addf %28, %36 : vector<8x256xf32>
    %c4 = arith.constant 4 : index
    %c0_21 = arith.constant 0 : index
    %c0_22 = arith.constant 0 : index
    %38 = vector.load %arg3[%c4, %c0_21, %c0_22] : memref<9x8x4xbf16, #tpu.memory_space<vmem>>, vector<1x8x4xbf16>
    %39 = vector.shape_cast %38 : vector<1x8x4xbf16> to vector<8x4xbf16>
    %40 = arith.truncf %2 : vector<4x256xf32> to vector<4x256xbf16>
    %cst_23 = arith.constant dense<0.000000e+00> : vector<8x256xf32>
    %41 = tpu.matmul %39, %40, %cst_23 {dimension_numbers = #tpu.dot_dimension_numbers<[1], [0], [0], [1], [0, 0, 1, 1], [], []>} : vector<8x4xbf16>, vector<4x256xbf16>, vector<8x256xf32> -> vector<8x256xf32>
    %42 = arith.addf %37, %41 : vector<8x256xf32>
    %c255_i32 = arith.constant 255 : i32
    %43 = tpu.dynamic_rotate %2 by %c255_i32 dim 1 : vector<4x256xf32>, i32 -> vector<4x256xf32>
    %c5 = arith.constant 5 : index
    %c0_24 = arith.constant 0 : index
    %44 = vector.load %arg2[%c5, %c0_24] : memref<9x256xf32, #tpu.memory_space<vmem>>, vector<1x256xf32>
    %45 = vector.broadcast %44 : vector<1x256xf32> to vector<4x256xf32>
    %46 = arith.mulf %43, %45 : vector<4x256xf32>
    %c5_25 = arith.constant 5 : index
    %c0_26 = arith.constant 0 : index
    %c0_27 = arith.constant 0 : index
    %47 = vector.load %arg3[%c5_25, %c0_26, %c0_27] : memref<9x8x4xbf16, #tpu.memory_space<vmem>>, vector<1x8x4xbf16>
    %48 = vector.shape_cast %47 : vector<1x8x4xbf16> to vector<8x4xbf16>
    %49 = arith.truncf %46 : vector<4x256xf32> to vector<4x256xbf16>
    %cst_28 = arith.constant dense<0.000000e+00> : vector<8x256xf32>
    %50 = tpu.matmul %48, %49, %cst_28 {dimension_numbers = #tpu.dot_dimension_numbers<[1], [0], [0], [1], [0, 0, 1, 1], [], []>} : vector<8x4xbf16>, vector<4x256xbf16>, vector<8x256xf32> -> vector<8x256xf32>
    %51 = arith.addf %42, %50 : vector<8x256xf32>
    %c241_i32 = arith.constant 241 : i32
    %52 = tpu.dynamic_rotate %2 by %c241_i32 dim 1 : vector<4x256xf32>, i32 -> vector<4x256xf32>
    %c6 = arith.constant 6 : index
    %c0_29 = arith.constant 0 : index
    %53 = vector.load %arg2[%c6, %c0_29] : memref<9x256xf32, #tpu.memory_space<vmem>>, vector<1x256xf32>
    %54 = vector.broadcast %53 : vector<1x256xf32> to vector<4x256xf32>
    %55 = arith.mulf %52, %54 : vector<4x256xf32>
    %c6_30 = arith.constant 6 : index
    %c0_31 = arith.constant 0 : index
    %c0_32 = arith.constant 0 : index
    %56 = vector.load %arg3[%c6_30, %c0_31, %c0_32] : memref<9x8x4xbf16, #tpu.memory_space<vmem>>, vector<1x8x4xbf16>
    %57 = vector.shape_cast %56 : vector<1x8x4xbf16> to vector<8x4xbf16>
    %58 = arith.truncf %55 : vector<4x256xf32> to vector<4x256xbf16>
    %cst_33 = arith.constant dense<0.000000e+00> : vector<8x256xf32>
    %59 = tpu.matmul %57, %58, %cst_33 {dimension_numbers = #tpu.dot_dimension_numbers<[1], [0], [0], [1], [0, 0, 1, 1], [], []>} : vector<8x4xbf16>, vector<4x256xbf16>, vector<8x256xf32> -> vector<8x256xf32>
    %60 = arith.addf %51, %59 : vector<8x256xf32>
    %c240_i32 = arith.constant 240 : i32
    %61 = tpu.dynamic_rotate %2 by %c240_i32 dim 1 : vector<4x256xf32>, i32 -> vector<4x256xf32>
    %c7 = arith.constant 7 : index
    %c0_34 = arith.constant 0 : index
    %62 = vector.load %arg2[%c7, %c0_34] : memref<9x256xf32, #tpu.memory_space<vmem>>, vector<1x256xf32>
    %63 = vector.broadcast %62 : vector<1x256xf32> to vector<4x256xf32>
    %64 = arith.mulf %61, %63 : vector<4x256xf32>
    %c7_35 = arith.constant 7 : index
    %c0_36 = arith.constant 0 : index
    %c0_37 = arith.constant 0 : index
    %65 = vector.load %arg3[%c7_35, %c0_36, %c0_37] : memref<9x8x4xbf16, #tpu.memory_space<vmem>>, vector<1x8x4xbf16>
    %66 = vector.shape_cast %65 : vector<1x8x4xbf16> to vector<8x4xbf16>
    %67 = arith.truncf %64 : vector<4x256xf32> to vector<4x256xbf16>
    %cst_38 = arith.constant dense<0.000000e+00> : vector<8x256xf32>
    %68 = tpu.matmul %66, %67, %cst_38 {dimension_numbers = #tpu.dot_dimension_numbers<[1], [0], [0], [1], [0, 0, 1, 1], [], []>} : vector<8x4xbf16>, vector<4x256xbf16>, vector<8x256xf32> -> vector<8x256xf32>
    %69 = arith.addf %60, %68 : vector<8x256xf32>
    %c239_i32 = arith.constant 239 : i32
    %70 = tpu.dynamic_rotate %2 by %c239_i32 dim 1 : vector<4x256xf32>, i32 -> vector<4x256xf32>
    %c8 = arith.constant 8 : index
    %c0_39 = arith.constant 0 : index
    %71 = vector.load %arg2[%c8, %c0_39] : memref<9x256xf32, #tpu.memory_space<vmem>>, vector<1x256xf32>
    %72 = vector.broadcast %71 : vector<1x256xf32> to vector<4x256xf32>
    %73 = arith.mulf %70, %72 : vector<4x256xf32>
    %c8_40 = arith.constant 8 : index
    %c0_41 = arith.constant 0 : index
    %c0_42 = arith.constant 0 : index
    %74 = vector.load %arg3[%c8_40, %c0_41, %c0_42] : memref<9x8x4xbf16, #tpu.memory_space<vmem>>, vector<1x8x4xbf16>
    %75 = vector.shape_cast %74 : vector<1x8x4xbf16> to vector<8x4xbf16>
    %76 = arith.truncf %73 : vector<4x256xf32> to vector<4x256xbf16>
    %cst_43 = arith.constant dense<0.000000e+00> : vector<8x256xf32>
    %77 = tpu.matmul %75, %76, %cst_43 {dimension_numbers = #tpu.dot_dimension_numbers<[1], [0], [0], [1], [0, 0, 1, 1], [], []>} : vector<8x4xbf16>, vector<4x256xbf16>, vector<8x256xf32> -> vector<8x256xf32>
    %78 = arith.addf %69, %77 : vector<8x256xf32>
    %c0_44 = arith.constant 0 : index
    %c0_45 = arith.constant 0 : index
    %79 = vector.load %arg4[%c0_44, %c0_45] : memref<8x1xf32, #tpu.memory_space<vmem>>, vector<8x1xf32>
    %80 = vector.broadcast %79 : vector<8x1xf32> to vector<8x256xf32>
    %81 = arith.addf %78, %80 : vector<8x256xf32>
    %cst_46 = arith.constant 0.000000e+00 : f32
    %82 = vector.broadcast %cst_46 : f32 to vector<8x256xf32>
    %83 = arith.maximumf %81, %82 : vector<8x256xf32>
    %c0_47 = arith.constant 0 : index
    %c0_48 = arith.constant 0 : index
    %84 = vector.load %arg5[%c0_47, %c0_48] : memref<16x8xbf16, #tpu.memory_space<vmem>>, vector<16x8xbf16>
    %85 = arith.truncf %83 : vector<8x256xf32> to vector<8x256xbf16>
    %cst_49 = arith.constant dense<0.000000e+00> : vector<16x256xf32>
    %86 = tpu.matmul %84, %85, %cst_49 {dimension_numbers = #tpu.dot_dimension_numbers<[1], [0], [0], [1], [0, 0, 1, 1], [], []>} : vector<16x8xbf16>, vector<8x256xbf16>, vector<16x256xf32> -> vector<16x256xf32>
    %c0_50 = arith.constant 0 : index
    %c0_51 = arith.constant 0 : index
    %87 = vector.load %arg6[%c0_50, %c0_51] : memref<16x4xbf16, #tpu.memory_space<vmem>>, vector<16x4xbf16>
    %88 = arith.truncf %2 : vector<4x256xf32> to vector<4x256xbf16>
    %cst_52 = arith.constant dense<0.000000e+00> : vector<16x256xf32>
    %89 = tpu.matmul %87, %88, %cst_52 {dimension_numbers = #tpu.dot_dimension_numbers<[1], [0], [0], [1], [0, 0, 1, 1], [], []>} : vector<16x4xbf16>, vector<4x256xbf16>, vector<16x256xf32> -> vector<16x256xf32>
    %90 = arith.addf %86, %89 : vector<16x256xf32>
    %c0_53 = arith.constant 0 : index
    %c0_54 = arith.constant 0 : index
    %91 = vector.load %arg7[%c0_53, %c0_54] : memref<16x1xf32, #tpu.memory_space<vmem>>, vector<16x1xf32>
    %92 = vector.broadcast %91 : vector<16x1xf32> to vector<16x256xf32>
    %93 = arith.addf %90, %92 : vector<16x256xf32>
    %cst_55 = arith.constant 0.000000e+00 : f32
    %94 = vector.broadcast %cst_55 : f32 to vector<16x256xf32>
    %95 = arith.maximumf %93, %94 : vector<16x256xf32>
    %96 = arith.index_cast %c0_i32 : i32 to index
    %c0_56 = arith.constant 0 : index
    %c0_57 = arith.constant 0 : index
    %97 = vector.load %arg8[%96, %c0_56, %c0_57] : memref<4x16x256xf32, #tpu.memory_space<vmem>>, vector<1x16x256xf32>
    %98 = vector.shape_cast %97 : vector<1x16x256xf32> to vector<16x256xf32>
    %99 = vector.shape_cast %95 : vector<16x256xf32> to vector<1x16x256xf32>
    tpu.vector_store %arg8[%96, %c0_56, %c0_57], %99 {strides = array<i32>} : memref<4x16x256xf32, #tpu.memory_space<vmem>>, vector<1x16x256xf32>,
    %c1_i32_58 = arith.constant 1 : i32
    %100 = arith.index_cast %c1_i32_58 : i32 to index
    %c0_59 = arith.constant 0 : index
    %c0_60 = arith.constant 0 : index
    %101 = vector.load %arg1[%100, %c0_59, %c0_60] : memref<4x4x256xf32, #tpu.memory_space<vmem>>, vector<1x4x256xf32>
    %102 = vector.shape_cast %101 : vector<1x4x256xf32> to vector<4x256xf32>
    %c17_i32_61 = arith.constant 17 : i32
    %103 = tpu.dynamic_rotate %102 by %c17_i32_61 dim 1 : vector<4x256xf32>, i32 -> vector<4x256xf32>
    %c0_62 = arith.constant 0 : index
    %c0_63 = arith.constant 0 : index
    %104 = vector.load %arg2[%c0_62, %c0_63] : memref<9x256xf32, #tpu.memory_space<vmem>>, vector<1x256xf32>
    %105 = vector.broadcast %104 : vector<1x256xf32> to vector<4x256xf32>
    %106 = arith.mulf %103, %105 : vector<4x256xf32>
    %c0_64 = arith.constant 0 : index
    %c0_65 = arith.constant 0 : index
    %c0_66 = arith.constant 0 : index
    %107 = vector.load %arg3[%c0_64, %c0_65, %c0_66] : memref<9x8x4xbf16, #tpu.memory_space<vmem>>, vector<1x8x4xbf16>
    %108 = vector.shape_cast %107 : vector<1x8x4xbf16> to vector<8x4xbf16>
    %109 = arith.truncf %106 : vector<4x256xf32> to vector<4x256xbf16>
    %cst_67 = arith.constant dense<0.000000e+00> : vector<8x256xf32>
    %110 = tpu.matmul %108, %109, %cst_67 {dimension_numbers = #tpu.dot_dimension_numbers<[1], [0], [0], [1], [0, 0, 1, 1], [], []>} : vector<8x4xbf16>, vector<4x256xbf16>, vector<8x256xf32> -> vector<8x256xf32>
    %c16_i32_68 = arith.constant 16 : i32
    %111 = tpu.dynamic_rotate %102 by %c16_i32_68 dim 1 : vector<4x256xf32>, i32 -> vector<4x256xf32>
    %c1_69 = arith.constant 1 : index
    %c0_70 = arith.constant 0 : index
    %112 = vector.load %arg2[%c1_69, %c0_70] : memref<9x256xf32, #tpu.memory_space<vmem>>, vector<1x256xf32>
    %113 = vector.broadcast %112 : vector<1x256xf32> to vector<4x256xf32>
    %114 = arith.mulf %111, %113 : vector<4x256xf32>
    %c1_71 = arith.constant 1 : index
    %c0_72 = arith.constant 0 : index
    %c0_73 = arith.constant 0 : index
    %115 = vector.load %arg3[%c1_71, %c0_72, %c0_73] : memref<9x8x4xbf16, #tpu.memory_space<vmem>>, vector<1x8x4xbf16>
    %116 = vector.shape_cast %115 : vector<1x8x4xbf16> to vector<8x4xbf16>
    %117 = arith.truncf %114 : vector<4x256xf32> to vector<4x256xbf16>
    %cst_74 = arith.constant dense<0.000000e+00> : vector<8x256xf32>
    %118 = tpu.matmul %116, %117, %cst_74 {dimension_numbers = #tpu.dot_dimension_numbers<[1], [0], [0], [1], [0, 0, 1, 1], [], []>} : vector<8x4xbf16>, vector<4x256xbf16>, vector<8x256xf32> -> vector<8x256xf32>
    %119 = arith.addf %110, %118 : vector<8x256xf32>
    %c15_i32_75 = arith.constant 15 : i32
    %120 = tpu.dynamic_rotate %102 by %c15_i32_75 dim 1 : vector<4x256xf32>, i32 -> vector<4x256xf32>
    %c2_76 = arith.constant 2 : index
    %c0_77 = arith.constant 0 : index
    %121 = vector.load %arg2[%c2_76, %c0_77] : memref<9x256xf32, #tpu.memory_space<vmem>>, vector<1x256xf32>
    %122 = vector.broadcast %121 : vector<1x256xf32> to vector<4x256xf32>
    %123 = arith.mulf %120, %122 : vector<4x256xf32>
    %c2_78 = arith.constant 2 : index
    %c0_79 = arith.constant 0 : index
    %c0_80 = arith.constant 0 : index
    %124 = vector.load %arg3[%c2_78, %c0_79, %c0_80] : memref<9x8x4xbf16, #tpu.memory_space<vmem>>, vector<1x8x4xbf16>
    %125 = vector.shape_cast %124 : vector<1x8x4xbf16> to vector<8x4xbf16>
    %126 = arith.truncf %123 : vector<4x256xf32> to vector<4x256xbf16>
    %cst_81 = arith.constant dense<0.000000e+00> : vector<8x256xf32>
    %127 = tpu.matmul %125, %126, %cst_81 {dimension_numbers = #tpu.dot_dimension_numbers<[1], [0], [0], [1], [0, 0, 1, 1], [], []>} : vector<8x4xbf16>, vector<4x256xbf16>, vector<8x256xf32> -> vector<8x256xf32>
    %128 = arith.addf %119, %127 : vector<8x256xf32>
    %c1_i32_82 = arith.constant 1 : i32
    %129 = tpu.dynamic_rotate %102 by %c1_i32_82 dim 1 : vector<4x256xf32>, i32 -> vector<4x256xf32>
    %c3_83 = arith.constant 3 : index
    %c0_84 = arith.constant 0 : index
    %130 = vector.load %arg2[%c3_83, %c0_84] : memref<9x256xf32, #tpu.memory_space<vmem>>, vector<1x256xf32>
    %131 = vector.broadcast %130 : vector<1x256xf32> to vector<4x256xf32>
    %132 = arith.mulf %129, %131 : vector<4x256xf32>
    %c3_85 = arith.constant 3 : index
    %c0_86 = arith.constant 0 : index
    %c0_87 = arith.constant 0 : index
    %133 = vector.load %arg3[%c3_85, %c0_86, %c0_87] : memref<9x8x4xbf16, #tpu.memory_space<vmem>>, vector<1x8x4xbf16>
    %134 = vector.shape_cast %133 : vector<1x8x4xbf16> to vector<8x4xbf16>
    %135 = arith.truncf %132 : vector<4x256xf32> to vector<4x256xbf16>
    %cst_88 = arith.constant dense<0.000000e+00> : vector<8x256xf32>
    %136 = tpu.matmul %134, %135, %cst_88 {dimension_numbers = #tpu.dot_dimension_numbers<[1], [0], [0], [1], [0, 0, 1, 1], [], []>} : vector<8x4xbf16>, vector<4x256xbf16>, vector<8x256xf32> -> vector<8x256xf32>
    %137 = arith.addf %128, %136 : vector<8x256xf32>
    %c4_89 = arith.constant 4 : index
    %c0_90 = arith.constant 0 : index
    %c0_91 = arith.constant 0 : index
    %138 = vector.load %arg3[%c4_89, %c0_90, %c0_91] : memref<9x8x4xbf16, #tpu.memory_space<vmem>>, vector<1x8x4xbf16>
    %139 = vector.shape_cast %138 : vector<1x8x4xbf16> to vector<8x4xbf16>
    %140 = arith.truncf %102 : vector<4x256xf32> to vector<4x256xbf16>
    %cst_92 = arith.constant dense<0.000000e+00> : vector<8x256xf32>
    %141 = tpu.matmul %139, %140, %cst_92 {dimension_numbers = #tpu.dot_dimension_numbers<[1], [0], [0], [1], [0, 0, 1, 1], [], []>} : vector<8x4xbf16>, vector<4x256xbf16>, vector<8x256xf32> -> vector<8x256xf32>
    %142 = arith.addf %137, %141 : vector<8x256xf32>
    %c255_i32_93 = arith.constant 255 : i32
    %143 = tpu.dynamic_rotate %102 by %c255_i32_93 dim 1 : vector<4x256xf32>, i32 -> vector<4x256xf32>
    %c5_94 = arith.constant 5 : index
    %c0_95 = arith.constant 0 : index
    %144 = vector.load %arg2[%c5_94, %c0_95] : memref<9x256xf32, #tpu.memory_space<vmem>>, vector<1x256xf32>
    %145 = vector.broadcast %144 : vector<1x256xf32> to vector<4x256xf32>
    %146 = arith.mulf %143, %145 : vector<4x256xf32>
    %c5_96 = arith.constant 5 : index
    %c0_97 = arith.constant 0 : index
    %c0_98 = arith.constant 0 : index
    %147 = vector.load %arg3[%c5_96, %c0_97, %c0_98] : memref<9x8x4xbf16, #tpu.memory_space<vmem>>, vector<1x8x4xbf16>
    %148 = vector.shape_cast %147 : vector<1x8x4xbf16> to vector<8x4xbf16>
    %149 = arith.truncf %146 : vector<4x256xf32> to vector<4x256xbf16>
    %cst_99 = arith.constant dense<0.000000e+00> : vector<8x256xf32>
    %150 = tpu.matmul %148, %149, %cst_99 {dimension_numbers = #tpu.dot_dimension_numbers<[1], [0], [0], [1], [0, 0, 1, 1], [], []>} : vector<8x4xbf16>, vector<4x256xbf16>, vector<8x256xf32> -> vector<8x256xf32>
    %151 = arith.addf %142, %150 : vector<8x256xf32>
    %c241_i32_100 = arith.constant 241 : i32
    %152 = tpu.dynamic_rotate %102 by %c241_i32_100 dim 1 : vector<4x256xf32>, i32 -> vector<4x256xf32>
    %c6_101 = arith.constant 6 : index
    %c0_102 = arith.constant 0 : index
    %153 = vector.load %arg2[%c6_101, %c0_102] : memref<9x256xf32, #tpu.memory_space<vmem>>, vector<1x256xf32>
    %154 = vector.broadcast %153 : vector<1x256xf32> to vector<4x256xf32>
    %155 = arith.mulf %152, %154 : vector<4x256xf32>
    %c6_103 = arith.constant 6 : index
    %c0_104 = arith.constant 0 : index
    %c0_105 = arith.constant 0 : index
    %156 = vector.load %arg3[%c6_103, %c0_104, %c0_105] : memref<9x8x4xbf16, #tpu.memory_space<vmem>>, vector<1x8x4xbf16>
    %157 = vector.shape_cast %156 : vector<1x8x4xbf16> to vector<8x4xbf16>
    %158 = arith.truncf %155 : vector<4x256xf32> to vector<4x256xbf16>
    %cst_106 = arith.constant dense<0.000000e+00> : vector<8x256xf32>
    %159 = tpu.matmul %157, %158, %cst_106 {dimension_numbers = #tpu.dot_dimension_numbers<[1], [0], [0], [1], [0, 0, 1, 1], [], []>} : vector<8x4xbf16>, vector<4x256xbf16>, vector<8x256xf32> -> vector<8x256xf32>
    %160 = arith.addf %151, %159 : vector<8x256xf32>
    %c240_i32_107 = arith.constant 240 : i32
    %161 = tpu.dynamic_rotate %102 by %c240_i32_107 dim 1 : vector<4x256xf32>, i32 -> vector<4x256xf32>
    %c7_108 = arith.constant 7 : index
    %c0_109 = arith.constant 0 : index
    %162 = vector.load %arg2[%c7_108, %c0_109] : memref<9x256xf32, #tpu.memory_space<vmem>>, vector<1x256xf32>
    %163 = vector.broadcast %162 : vector<1x256xf32> to vector<4x256xf32>
    %164 = arith.mulf %161, %163 : vector<4x256xf32>
    %c7_110 = arith.constant 7 : index
    %c0_111 = arith.constant 0 : index
    %c0_112 = arith.constant 0 : index
    %165 = vector.load %arg3[%c7_110, %c0_111, %c0_112] : memref<9x8x4xbf16, #tpu.memory_space<vmem>>, vector<1x8x4xbf16>
    %166 = vector.shape_cast %165 : vector<1x8x4xbf16> to vector<8x4xbf16>
    %167 = arith.truncf %164 : vector<4x256xf32> to vector<4x256xbf16>
    %cst_113 = arith.constant dense<0.000000e+00> : vector<8x256xf32>
    %168 = tpu.matmul %166, %167, %cst_113 {dimension_numbers = #tpu.dot_dimension_numbers<[1], [0], [0], [1], [0, 0, 1, 1], [], []>} : vector<8x4xbf16>, vector<4x256xbf16>, vector<8x256xf32> -> vector<8x256xf32>
    %169 = arith.addf %160, %168 : vector<8x256xf32>
    %c239_i32_114 = arith.constant 239 : i32
    %170 = tpu.dynamic_rotate %102 by %c239_i32_114 dim 1 : vector<4x256xf32>, i32 -> vector<4x256xf32>
    %c8_115 = arith.constant 8 : index
    %c0_116 = arith.constant 0 : index
    %171 = vector.load %arg2[%c8_115, %c0_116] : memref<9x256xf32, #tpu.memory_space<vmem>>, vector<1x256xf32>
    %172 = vector.broadcast %171 : vector<1x256xf32> to vector<4x256xf32>
    %173 = arith.mulf %170, %172 : vector<4x256xf32>
    %c8_117 = arith.constant 8 : index
    %c0_118 = arith.constant 0 : index
    %c0_119 = arith.constant 0 : index
    %174 = vector.load %arg3[%c8_117, %c0_118, %c0_119] : memref<9x8x4xbf16, #tpu.memory_space<vmem>>, vector<1x8x4xbf16>
    %175 = vector.shape_cast %174 : vector<1x8x4xbf16> to vector<8x4xbf16>
    %176 = arith.truncf %173 : vector<4x256xf32> to vector<4x256xbf16>
    %cst_120 = arith.constant dense<0.000000e+00> : vector<8x256xf32>
    %177 = tpu.matmul %175, %176, %cst_120 {dimension_numbers = #tpu.dot_dimension_numbers<[1], [0], [0], [1], [0, 0, 1, 1], [], []>} : vector<8x4xbf16>, vector<4x256xbf16>, vector<8x256xf32> -> vector<8x256xf32>
    %178 = arith.addf %169, %177 : vector<8x256xf32>
    %c0_121 = arith.constant 0 : index
    %c0_122 = arith.constant 0 : index
    %179 = vector.load %arg4[%c0_121, %c0_122] : memref<8x1xf32, #tpu.memory_space<vmem>>, vector<8x1xf32>
    %180 = vector.broadcast %179 : vector<8x1xf32> to vector<8x256xf32>
    %181 = arith.addf %178, %180 : vector<8x256xf32>
    %cst_123 = arith.constant 0.000000e+00 : f32
    %182 = vector.broadcast %cst_123 : f32 to vector<8x256xf32>
    %183 = arith.maximumf %181, %182 : vector<8x256xf32>
    %c0_124 = arith.constant 0 : index
    %c0_125 = arith.constant 0 : index
    %184 = vector.load %arg5[%c0_124, %c0_125] : memref<16x8xbf16, #tpu.memory_space<vmem>>, vector<16x8xbf16>
    %185 = arith.truncf %183 : vector<8x256xf32> to vector<8x256xbf16>
    %cst_126 = arith.constant dense<0.000000e+00> : vector<16x256xf32>
    %186 = tpu.matmul %184, %185, %cst_126 {dimension_numbers = #tpu.dot_dimension_numbers<[1], [0], [0], [1], [0, 0, 1, 1], [], []>} : vector<16x8xbf16>, vector<8x256xbf16>, vector<16x256xf32> -> vector<16x256xf32>
    %c0_127 = arith.constant 0 : index
    %c0_128 = arith.constant 0 : index
    %187 = vector.load %arg6[%c0_127, %c0_128] : memref<16x4xbf16, #tpu.memory_space<vmem>>, vector<16x4xbf16>
    %188 = arith.truncf %102 : vector<4x256xf32> to vector<4x256xbf16>
    %cst_129 = arith.constant dense<0.000000e+00> : vector<16x256xf32>
    %189 = tpu.matmul %187, %188, %cst_129 {dimension_numbers = #tpu.dot_dimension_numbers<[1], [0], [0], [1], [0, 0, 1, 1], [], []>} : vector<16x4xbf16>, vector<4x256xbf16>, vector<16x256xf32> -> vector<16x256xf32>
    %190 = arith.addf %186, %189 : vector<16x256xf32>
    %c0_130 = arith.constant 0 : index
    %c0_131 = arith.constant 0 : index
    %191 = vector.load %arg7[%c0_130, %c0_131] : memref<16x1xf32, #tpu.memory_space<vmem>>, vector<16x1xf32>
    %192 = vector.broadcast %191 : vector<16x1xf32> to vector<16x256xf32>
    %193 = arith.addf %190, %192 : vector<16x256xf32>
    %cst_132 = arith.constant 0.000000e+00 : f32
    %194 = vector.broadcast %cst_132 : f32 to vector<16x256xf32>
    %195 = arith.maximumf %193, %194 : vector<16x256xf32>
    %196 = arith.index_cast %c1_i32_58 : i32 to index
    %c0_133 = arith.constant 0 : index
    %c0_134 = arith.constant 0 : index
    %197 = vector.load %arg8[%196, %c0_133, %c0_134] : memref<4x16x256xf32, #tpu.memory_space<vmem>>, vector<1x16x256xf32>
    %198 = vector.shape_cast %197 : vector<1x16x256xf32> to vector<16x256xf32>
    %199 = vector.shape_cast %195 : vector<16x256xf32> to vector<1x16x256xf32>
    tpu.vector_store %arg8[%196, %c0_133, %c0_134], %199 {strides = array<i32>} : memref<4x16x256xf32, #tpu.memory_space<vmem>>, vector<1x16x256xf32>,
    %c2_i32 = arith.constant 2 : i32
    %200 = arith.index_cast %c2_i32 : i32 to index
    %c0_135 = arith.constant 0 : index
    %c0_136 = arith.constant 0 : index
    %201 = vector.load %arg1[%200, %c0_135, %c0_136] : memref<4x4x256xf32, #tpu.memory_space<vmem>>, vector<1x4x256xf32>
    %202 = vector.shape_cast %201 : vector<1x4x256xf32> to vector<4x256xf32>
    %c17_i32_137 = arith.constant 17 : i32
    %203 = tpu.dynamic_rotate %202 by %c17_i32_137 dim 1 : vector<4x256xf32>, i32 -> vector<4x256xf32>
    %c0_138 = arith.constant 0 : index
    %c0_139 = arith.constant 0 : index
    %204 = vector.load %arg2[%c0_138, %c0_139] : memref<9x256xf32, #tpu.memory_space<vmem>>, vector<1x256xf32>
    %205 = vector.broadcast %204 : vector<1x256xf32> to vector<4x256xf32>
    %206 = arith.mulf %203, %205 : vector<4x256xf32>
    %c0_140 = arith.constant 0 : index
    %c0_141 = arith.constant 0 : index
    %c0_142 = arith.constant 0 : index
    %207 = vector.load %arg3[%c0_140, %c0_141, %c0_142] : memref<9x8x4xbf16, #tpu.memory_space<vmem>>, vector<1x8x4xbf16>
    %208 = vector.shape_cast %207 : vector<1x8x4xbf16> to vector<8x4xbf16>
    %209 = arith.truncf %206 : vector<4x256xf32> to vector<4x256xbf16>
    %cst_143 = arith.constant dense<0.000000e+00> : vector<8x256xf32>
    %210 = tpu.matmul %208, %209, %cst_143 {dimension_numbers = #tpu.dot_dimension_numbers<[1], [0], [0], [1], [0, 0, 1, 1], [], []>} : vector<8x4xbf16>, vector<4x256xbf16>, vector<8x256xf32> -> vector<8x256xf32>
    %c16_i32_144 = arith.constant 16 : i32
    %211 = tpu.dynamic_rotate %202 by %c16_i32_144 dim 1 : vector<4x256xf32>, i32 -> vector<4x256xf32>
    %c1_145 = arith.constant 1 : index
    %c0_146 = arith.constant 0 : index
    %212 = vector.load %arg2[%c1_145, %c0_146] : memref<9x256xf32, #tpu.memory_space<vmem>>, vector<1x256xf32>
    %213 = vector.broadcast %212 : vector<1x256xf32> to vector<4x256xf32>
    %214 = arith.mulf %211, %213 : vector<4x256xf32>
    %c1_147 = arith.constant 1 : index
    %c0_148 = arith.constant 0 : index
    %c0_149 = arith.constant 0 : index
    %215 = vector.load %arg3[%c1_147, %c0_148, %c0_149] : memref<9x8x4xbf16, #tpu.memory_space<vmem>>, vector<1x8x4xbf16>
    %216 = vector.shape_cast %215 : vector<1x8x4xbf16> to vector<8x4xbf16>
    %217 = arith.truncf %214 : vector<4x256xf32> to vector<4x256xbf16>
    %cst_150 = arith.constant dense<0.000000e+00> : vector<8x256xf32>
    %218 = tpu.matmul %216, %217, %cst_150 {dimension_numbers = #tpu.dot_dimension_numbers<[1], [0], [0], [1], [0, 0, 1, 1], [], []>} : vector<8x4xbf16>, vector<4x256xbf16>, vector<8x256xf32> -> vector<8x256xf32>
    %219 = arith.addf %210, %218 : vector<8x256xf32>
    %c15_i32_151 = arith.constant 15 : i32
    %220 = tpu.dynamic_rotate %202 by %c15_i32_151 dim 1 : vector<4x256xf32>, i32 -> vector<4x256xf32>
    %c2_152 = arith.constant 2 : index
    %c0_153 = arith.constant 0 : index
    %221 = vector.load %arg2[%c2_152, %c0_153] : memref<9x256xf32, #tpu.memory_space<vmem>>, vector<1x256xf32>
    %222 = vector.broadcast %221 : vector<1x256xf32> to vector<4x256xf32>
    %223 = arith.mulf %220, %222 : vector<4x256xf32>
    %c2_154 = arith.constant 2 : index
    %c0_155 = arith.constant 0 : index
    %c0_156 = arith.constant 0 : index
    %224 = vector.load %arg3[%c2_154, %c0_155, %c0_156] : memref<9x8x4xbf16, #tpu.memory_space<vmem>>, vector<1x8x4xbf16>
    %225 = vector.shape_cast %224 : vector<1x8x4xbf16> to vector<8x4xbf16>
    %226 = arith.truncf %223 : vector<4x256xf32> to vector<4x256xbf16>
    %cst_157 = arith.constant dense<0.000000e+00> : vector<8x256xf32>
    %227 = tpu.matmul %225, %226, %cst_157 {dimension_numbers = #tpu.dot_dimension_numbers<[1], [0], [0], [1], [0, 0, 1, 1], [], []>} : vector<8x4xbf16>, vector<4x256xbf16>, vector<8x256xf32> -> vector<8x256xf32>
    %228 = arith.addf %219, %227 : vector<8x256xf32>
    %c1_i32_158 = arith.constant 1 : i32
    %229 = tpu.dynamic_rotate %202 by %c1_i32_158 dim 1 : vector<4x256xf32>, i32 -> vector<4x256xf32>
    %c3_159 = arith.constant 3 : index
    %c0_160 = arith.constant 0 : index
    %230 = vector.load %arg2[%c3_159, %c0_160] : memref<9x256xf32, #tpu.memory_space<vmem>>, vector<1x256xf32>
    %231 = vector.broadcast %230 : vector<1x256xf32> to vector<4x256xf32>
    %232 = arith.mulf %229, %231 : vector<4x256xf32>
    %c3_161 = arith.constant 3 : index
    %c0_162 = arith.constant 0 : index
    %c0_163 = arith.constant 0 : index
    %233 = vector.load %arg3[%c3_161, %c0_162, %c0_163] : memref<9x8x4xbf16, #tpu.memory_space<vmem>>, vector<1x8x4xbf16>
    %234 = vector.shape_cast %233 : vector<1x8x4xbf16> to vector<8x4xbf16>
    %235 = arith.truncf %232 : vector<4x256xf32> to vector<4x256xbf16>
    %cst_164 = arith.constant dense<0.000000e+00> : vector<8x256xf32>
    %236 = tpu.matmul %234, %235, %cst_164 {dimension_numbers = #tpu.dot_dimension_numbers<[1], [0], [0], [1], [0, 0, 1, 1], [], []>} : vector<8x4xbf16>, vector<4x256xbf16>, vector<8x256xf32> -> vector<8x256xf32>
    %237 = arith.addf %228, %236 : vector<8x256xf32>
    %c4_165 = arith.constant 4 : index
    %c0_166 = arith.constant 0 : index
    %c0_167 = arith.constant 0 : index
    %238 = vector.load %arg3[%c4_165, %c0_166, %c0_167] : memref<9x8x4xbf16, #tpu.memory_space<vmem>>, vector<1x8x4xbf16>
    %239 = vector.shape_cast %238 : vector<1x8x4xbf16> to vector<8x4xbf16>
    %240 = arith.truncf %202 : vector<4x256xf32> to vector<4x256xbf16>
    %cst_168 = arith.constant dense<0.000000e+00> : vector<8x256xf32>
    %241 = tpu.matmul %239, %240, %cst_168 {dimension_numbers = #tpu.dot_dimension_numbers<[1], [0], [0], [1], [0, 0, 1, 1], [], []>} : vector<8x4xbf16>, vector<4x256xbf16>, vector<8x256xf32> -> vector<8x256xf32>
    %242 = arith.addf %237, %241 : vector<8x256xf32>
    %c255_i32_169 = arith.constant 255 : i32
    %243 = tpu.dynamic_rotate %202 by %c255_i32_169 dim 1 : vector<4x256xf32>, i32 -> vector<4x256xf32>
    %c5_170 = arith.constant 5 : index
    %c0_171 = arith.constant 0 : index
    %244 = vector.load %arg2[%c5_170, %c0_171] : memref<9x256xf32, #tpu.memory_space<vmem>>, vector<1x256xf32>
    %245 = vector.broadcast %244 : vector<1x256xf32> to vector<4x256xf32>
    %246 = arith.mulf %243, %245 : vector<4x256xf32>
    %c5_172 = arith.constant 5 : index
    %c0_173 = arith.constant 0 : index
    %c0_174 = arith.constant 0 : index
    %247 = vector.load %arg3[%c5_172, %c0_173, %c0_174] : memref<9x8x4xbf16, #tpu.memory_space<vmem>>, vector<1x8x4xbf16>
    %248 = vector.shape_cast %247 : vector<1x8x4xbf16> to vector<8x4xbf16>
    %249 = arith.truncf %246 : vector<4x256xf32> to vector<4x256xbf16>
    %cst_175 = arith.constant dense<0.000000e+00> : vector<8x256xf32>
    %250 = tpu.matmul %248, %249, %cst_175 {dimension_numbers = #tpu.dot_dimension_numbers<[1], [0], [0], [1], [0, 0, 1, 1], [], []>} : vector<8x4xbf16>, vector<4x256xbf16>, vector<8x256xf32> -> vector<8x256xf32>
    %251 = arith.addf %242, %250 : vector<8x256xf32>
    %c241_i32_176 = arith.constant 241 : i32
    %252 = tpu.dynamic_rotate %202 by %c241_i32_176 dim 1 : vector<4x256xf32>, i32 -> vector<4x256xf32>
    %c6_177 = arith.constant 6 : index
    %c0_178 = arith.constant 0 : index
    %253 = vector.load %arg2[%c6_177, %c0_178] : memref<9x256xf32, #tpu.memory_space<vmem>>, vector<1x256xf32>
    %254 = vector.broadcast %253 : vector<1x256xf32> to vector<4x256xf32>
    %255 = arith.mulf %252, %254 : vector<4x256xf32>
    %c6_179 = arith.constant 6 : index
    %c0_180 = arith.constant 0 : index
    %c0_181 = arith.constant 0 : index
    %256 = vector.load %arg3[%c6_179, %c0_180, %c0_181] : memref<9x8x4xbf16, #tpu.memory_space<vmem>>, vector<1x8x4xbf16>
    %257 = vector.shape_cast %256 : vector<1x8x4xbf16> to vector<8x4xbf16>
    %258 = arith.truncf %255 : vector<4x256xf32> to vector<4x256xbf16>
    %cst_182 = arith.constant dense<0.000000e+00> : vector<8x256xf32>
    %259 = tpu.matmul %257, %258, %cst_182 {dimension_numbers = #tpu.dot_dimension_numbers<[1], [0], [0], [1], [0, 0, 1, 1], [], []>} : vector<8x4xbf16>, vector<4x256xbf16>, vector<8x256xf32> -> vector<8x256xf32>
    %260 = arith.addf %251, %259 : vector<8x256xf32>
    %c240_i32_183 = arith.constant 240 : i32
    %261 = tpu.dynamic_rotate %202 by %c240_i32_183 dim 1 : vector<4x256xf32>, i32 -> vector<4x256xf32>
    %c7_184 = arith.constant 7 : index
    %c0_185 = arith.constant 0 : index
    %262 = vector.load %arg2[%c7_184, %c0_185] : memref<9x256xf32, #tpu.memory_space<vmem>>, vector<1x256xf32>
    %263 = vector.broadcast %262 : vector<1x256xf32> to vector<4x256xf32>
    %264 = arith.mulf %261, %263 : vector<4x256xf32>
    %c7_186 = arith.constant 7 : index
    %c0_187 = arith.constant 0 : index
    %c0_188 = arith.constant 0 : index
    %265 = vector.load %arg3[%c7_186, %c0_187, %c0_188] : memref<9x8x4xbf16, #tpu.memory_space<vmem>>, vector<1x8x4xbf16>
    %266 = vector.shape_cast %265 : vector<1x8x4xbf16> to vector<8x4xbf16>
    %267 = arith.truncf %264 : vector<4x256xf32> to vector<4x256xbf16>
    %cst_189 = arith.constant dense<0.000000e+00> : vector<8x256xf32>
    %268 = tpu.matmul %266, %267, %cst_189 {dimension_numbers = #tpu.dot_dimension_numbers<[1], [0], [0], [1], [0, 0, 1, 1], [], []>} : vector<8x4xbf16>, vector<4x256xbf16>, vector<8x256xf32> -> vector<8x256xf32>
    %269 = arith.addf %260, %268 : vector<8x256xf32>
    %c239_i32_190 = arith.constant 239 : i32
    %270 = tpu.dynamic_rotate %202 by %c239_i32_190 dim 1 : vector<4x256xf32>, i32 -> vector<4x256xf32>
    %c8_191 = arith.constant 8 : index
    %c0_192 = arith.constant 0 : index
    %271 = vector.load %arg2[%c8_191, %c0_192] : memref<9x256xf32, #tpu.memory_space<vmem>>, vector<1x256xf32>
    %272 = vector.broadcast %271 : vector<1x256xf32> to vector<4x256xf32>
    %273 = arith.mulf %270, %272 : vector<4x256xf32>
    %c8_193 = arith.constant 8 : index
    %c0_194 = arith.constant 0 : index
    %c0_195 = arith.constant 0 : index
    %274 = vector.load %arg3[%c8_193, %c0_194, %c0_195] : memref<9x8x4xbf16, #tpu.memory_space<vmem>>, vector<1x8x4xbf16>
    %275 = vector.shape_cast %274 : vector<1x8x4xbf16> to vector<8x4xbf16>
    %276 = arith.truncf %273 : vector<4x256xf32> to vector<4x256xbf16>
    %cst_196 = arith.constant dense<0.000000e+00> : vector<8x256xf32>
    %277 = tpu.matmul %275, %276, %cst_196 {dimension_numbers = #tpu.dot_dimension_numbers<[1], [0], [0], [1], [0, 0, 1, 1], [], []>} : vector<8x4xbf16>, vector<4x256xbf16>, vector<8x256xf32> -> vector<8x256xf32>
    %278 = arith.addf %269, %277 : vector<8x256xf32>
    %c0_197 = arith.constant 0 : index
    %c0_198 = arith.constant 0 : index
    %279 = vector.load %arg4[%c0_197, %c0_198] : memref<8x1xf32, #tpu.memory_space<vmem>>, vector<8x1xf32>
    %280 = vector.broadcast %279 : vector<8x1xf32> to vector<8x256xf32>
    %281 = arith.addf %278, %280 : vector<8x256xf32>
    %cst_199 = arith.constant 0.000000e+00 : f32
    %282 = vector.broadcast %cst_199 : f32 to vector<8x256xf32>
    %283 = arith.maximumf %281, %282 : vector<8x256xf32>
    %c0_200 = arith.constant 0 : index
    %c0_201 = arith.constant 0 : index
    %284 = vector.load %arg5[%c0_200, %c0_201] : memref<16x8xbf16, #tpu.memory_space<vmem>>, vector<16x8xbf16>
    %285 = arith.truncf %283 : vector<8x256xf32> to vector<8x256xbf16>
    %cst_202 = arith.constant dense<0.000000e+00> : vector<16x256xf32>
    %286 = tpu.matmul %284, %285, %cst_202 {dimension_numbers = #tpu.dot_dimension_numbers<[1], [0], [0], [1], [0, 0, 1, 1], [], []>} : vector<16x8xbf16>, vector<8x256xbf16>, vector<16x256xf32> -> vector<16x256xf32>
    %c0_203 = arith.constant 0 : index
    %c0_204 = arith.constant 0 : index
    %287 = vector.load %arg6[%c0_203, %c0_204] : memref<16x4xbf16, #tpu.memory_space<vmem>>, vector<16x4xbf16>
    %288 = arith.truncf %202 : vector<4x256xf32> to vector<4x256xbf16>
    %cst_205 = arith.constant dense<0.000000e+00> : vector<16x256xf32>
    %289 = tpu.matmul %287, %288, %cst_205 {dimension_numbers = #tpu.dot_dimension_numbers<[1], [0], [0], [1], [0, 0, 1, 1], [], []>} : vector<16x4xbf16>, vector<4x256xbf16>, vector<16x256xf32> -> vector<16x256xf32>
    %290 = arith.addf %286, %289 : vector<16x256xf32>
    %c0_206 = arith.constant 0 : index
    %c0_207 = arith.constant 0 : index
    %291 = vector.load %arg7[%c0_206, %c0_207] : memref<16x1xf32, #tpu.memory_space<vmem>>, vector<16x1xf32>
    %292 = vector.broadcast %291 : vector<16x1xf32> to vector<16x256xf32>
    %293 = arith.addf %290, %292 : vector<16x256xf32>
    %cst_208 = arith.constant 0.000000e+00 : f32
    %294 = vector.broadcast %cst_208 : f32 to vector<16x256xf32>
    %295 = arith.maximumf %293, %294 : vector<16x256xf32>
    %296 = arith.index_cast %c2_i32 : i32 to index
    %c0_209 = arith.constant 0 : index
    %c0_210 = arith.constant 0 : index
    %297 = vector.load %arg8[%296, %c0_209, %c0_210] : memref<4x16x256xf32, #tpu.memory_space<vmem>>, vector<1x16x256xf32>
    %298 = vector.shape_cast %297 : vector<1x16x256xf32> to vector<16x256xf32>
    %299 = vector.shape_cast %295 : vector<16x256xf32> to vector<1x16x256xf32>
    tpu.vector_store %arg8[%296, %c0_209, %c0_210], %299 {strides = array<i32>} : memref<4x16x256xf32, #tpu.memory_space<vmem>>, vector<1x16x256xf32>,
    %c3_i32 = arith.constant 3 : i32
    %300 = arith.index_cast %c3_i32 : i32 to index
    %c0_211 = arith.constant 0 : index
    %c0_212 = arith.constant 0 : index
    %301 = vector.load %arg1[%300, %c0_211, %c0_212] : memref<4x4x256xf32, #tpu.memory_space<vmem>>, vector<1x4x256xf32>
    %302 = vector.shape_cast %301 : vector<1x4x256xf32> to vector<4x256xf32>
    %c17_i32_213 = arith.constant 17 : i32
    %303 = tpu.dynamic_rotate %302 by %c17_i32_213 dim 1 : vector<4x256xf32>, i32 -> vector<4x256xf32>
    %c0_214 = arith.constant 0 : index
    %c0_215 = arith.constant 0 : index
    %304 = vector.load %arg2[%c0_214, %c0_215] : memref<9x256xf32, #tpu.memory_space<vmem>>, vector<1x256xf32>
    %305 = vector.broadcast %304 : vector<1x256xf32> to vector<4x256xf32>
    %306 = arith.mulf %303, %305 : vector<4x256xf32>
    %c0_216 = arith.constant 0 : index
    %c0_217 = arith.constant 0 : index
    %c0_218 = arith.constant 0 : index
    %307 = vector.load %arg3[%c0_216, %c0_217, %c0_218] : memref<9x8x4xbf16, #tpu.memory_space<vmem>>, vector<1x8x4xbf16>
    %308 = vector.shape_cast %307 : vector<1x8x4xbf16> to vector<8x4xbf16>
    %309 = arith.truncf %306 : vector<4x256xf32> to vector<4x256xbf16>
    %cst_219 = arith.constant dense<0.000000e+00> : vector<8x256xf32>
    %310 = tpu.matmul %308, %309, %cst_219 {dimension_numbers = #tpu.dot_dimension_numbers<[1], [0], [0], [1], [0, 0, 1, 1], [], []>} : vector<8x4xbf16>, vector<4x256xbf16>, vector<8x256xf32> -> vector<8x256xf32>
    %c16_i32_220 = arith.constant 16 : i32
    %311 = tpu.dynamic_rotate %302 by %c16_i32_220 dim 1 : vector<4x256xf32>, i32 -> vector<4x256xf32>
    %c1_221 = arith.constant 1 : index
    %c0_222 = arith.constant 0 : index
    %312 = vector.load %arg2[%c1_221, %c0_222] : memref<9x256xf32, #tpu.memory_space<vmem>>, vector<1x256xf32>
    %313 = vector.broadcast %312 : vector<1x256xf32> to vector<4x256xf32>
    %314 = arith.mulf %311, %313 : vector<4x256xf32>
    %c1_223 = arith.constant 1 : index
    %c0_224 = arith.constant 0 : index
    %c0_225 = arith.constant 0 : index
    %315 = vector.load %arg3[%c1_223, %c0_224, %c0_225] : memref<9x8x4xbf16, #tpu.memory_space<vmem>>, vector<1x8x4xbf16>
    %316 = vector.shape_cast %315 : vector<1x8x4xbf16> to vector<8x4xbf16>
    %317 = arith.truncf %314 : vector<4x256xf32> to vector<4x256xbf16>
    %cst_226 = arith.constant dense<0.000000e+00> : vector<8x256xf32>
    %318 = tpu.matmul %316, %317, %cst_226 {dimension_numbers = #tpu.dot_dimension_numbers<[1], [0], [0], [1], [0, 0, 1, 1], [], []>} : vector<8x4xbf16>, vector<4x256xbf16>, vector<8x256xf32> -> vector<8x256xf32>
    %319 = arith.addf %310, %318 : vector<8x256xf32>
    %c15_i32_227 = arith.constant 15 : i32
    %320 = tpu.dynamic_rotate %302 by %c15_i32_227 dim 1 : vector<4x256xf32>, i32 -> vector<4x256xf32>
    %c2_228 = arith.constant 2 : index
    %c0_229 = arith.constant 0 : index
    %321 = vector.load %arg2[%c2_228, %c0_229] : memref<9x256xf32, #tpu.memory_space<vmem>>, vector<1x256xf32>
    %322 = vector.broadcast %321 : vector<1x256xf32> to vector<4x256xf32>
    %323 = arith.mulf %320, %322 : vector<4x256xf32>
    %c2_230 = arith.constant 2 : index
    %c0_231 = arith.constant 0 : index
    %c0_232 = arith.constant 0 : index
    %324 = vector.load %arg3[%c2_230, %c0_231, %c0_232] : memref<9x8x4xbf16, #tpu.memory_space<vmem>>, vector<1x8x4xbf16>
    %325 = vector.shape_cast %324 : vector<1x8x4xbf16> to vector<8x4xbf16>
    %326 = arith.truncf %323 : vector<4x256xf32> to vector<4x256xbf16>
    %cst_233 = arith.constant dense<0.000000e+00> : vector<8x256xf32>
    %327 = tpu.matmul %325, %326, %cst_233 {dimension_numbers = #tpu.dot_dimension_numbers<[1], [0], [0], [1], [0, 0, 1, 1], [], []>} : vector<8x4xbf16>, vector<4x256xbf16>, vector<8x256xf32> -> vector<8x256xf32>
    %328 = arith.addf %319, %327 : vector<8x256xf32>
    %c1_i32_234 = arith.constant 1 : i32
    %329 = tpu.dynamic_rotate %302 by %c1_i32_234 dim 1 : vector<4x256xf32>, i32 -> vector<4x256xf32>
    %c3_235 = arith.constant 3 : index
    %c0_236 = arith.constant 0 : index
    %330 = vector.load %arg2[%c3_235, %c0_236] : memref<9x256xf32, #tpu.memory_space<vmem>>, vector<1x256xf32>
    %331 = vector.broadcast %330 : vector<1x256xf32> to vector<4x256xf32>
    %332 = arith.mulf %329, %331 : vector<4x256xf32>
    %c3_237 = arith.constant 3 : index
    %c0_238 = arith.constant 0 : index
    %c0_239 = arith.constant 0 : index
    %333 = vector.load %arg3[%c3_237, %c0_238, %c0_239] : memref<9x8x4xbf16, #tpu.memory_space<vmem>>, vector<1x8x4xbf16>
    %334 = vector.shape_cast %333 : vector<1x8x4xbf16> to vector<8x4xbf16>
    %335 = arith.truncf %332 : vector<4x256xf32> to vector<4x256xbf16>
    %cst_240 = arith.constant dense<0.000000e+00> : vector<8x256xf32>
    %336 = tpu.matmul %334, %335, %cst_240 {dimension_numbers = #tpu.dot_dimension_numbers<[1], [0], [0], [1], [0, 0, 1, 1], [], []>} : vector<8x4xbf16>, vector<4x256xbf16>, vector<8x256xf32> -> vector<8x256xf32>
    %337 = arith.addf %328, %336 : vector<8x256xf32>
    %c4_241 = arith.constant 4 : index
    %c0_242 = arith.constant 0 : index
    %c0_243 = arith.constant 0 : index
    %338 = vector.load %arg3[%c4_241, %c0_242, %c0_243] : memref<9x8x4xbf16, #tpu.memory_space<vmem>>, vector<1x8x4xbf16>
    %339 = vector.shape_cast %338 : vector<1x8x4xbf16> to vector<8x4xbf16>
    %340 = arith.truncf %302 : vector<4x256xf32> to vector<4x256xbf16>
    %cst_244 = arith.constant dense<0.000000e+00> : vector<8x256xf32>
    %341 = tpu.matmul %339, %340, %cst_244 {dimension_numbers = #tpu.dot_dimension_numbers<[1], [0], [0], [1], [0, 0, 1, 1], [], []>} : vector<8x4xbf16>, vector<4x256xbf16>, vector<8x256xf32> -> vector<8x256xf32>
    %342 = arith.addf %337, %341 : vector<8x256xf32>
    %c255_i32_245 = arith.constant 255 : i32
    %343 = tpu.dynamic_rotate %302 by %c255_i32_245 dim 1 : vector<4x256xf32>, i32 -> vector<4x256xf32>
    %c5_246 = arith.constant 5 : index
    %c0_247 = arith.constant 0 : index
    %344 = vector.load %arg2[%c5_246, %c0_247] : memref<9x256xf32, #tpu.memory_space<vmem>>, vector<1x256xf32>
    %345 = vector.broadcast %344 : vector<1x256xf32> to vector<4x256xf32>
    %346 = arith.mulf %343, %345 : vector<4x256xf32>
    %c5_248 = arith.constant 5 : index
    %c0_249 = arith.constant 0 : index
    %c0_250 = arith.constant 0 : index
    %347 = vector.load %arg3[%c5_248, %c0_249, %c0_250] : memref<9x8x4xbf16, #tpu.memory_space<vmem>>, vector<1x8x4xbf16>
    %348 = vector.shape_cast %347 : vector<1x8x4xbf16> to vector<8x4xbf16>
    %349 = arith.truncf %346 : vector<4x256xf32> to vector<4x256xbf16>
    %cst_251 = arith.constant dense<0.000000e+00> : vector<8x256xf32>
    %350 = tpu.matmul %348, %349, %cst_251 {dimension_numbers = #tpu.dot_dimension_numbers<[1], [0], [0], [1], [0, 0, 1, 1], [], []>} : vector<8x4xbf16>, vector<4x256xbf16>, vector<8x256xf32> -> vector<8x256xf32>
    %351 = arith.addf %342, %350 : vector<8x256xf32>
    %c241_i32_252 = arith.constant 241 : i32
    %352 = tpu.dynamic_rotate %302 by %c241_i32_252 dim 1 : vector<4x256xf32>, i32 -> vector<4x256xf32>
    %c6_253 = arith.constant 6 : index
    %c0_254 = arith.constant 0 : index
    %353 = vector.load %arg2[%c6_253, %c0_254] : memref<9x256xf32, #tpu.memory_space<vmem>>, vector<1x256xf32>
    %354 = vector.broadcast %353 : vector<1x256xf32> to vector<4x256xf32>
    %355 = arith.mulf %352, %354 : vector<4x256xf32>
    %c6_255 = arith.constant 6 : index
    %c0_256 = arith.constant 0 : index
    %c0_257 = arith.constant 0 : index
    %356 = vector.load %arg3[%c6_255, %c0_256, %c0_257] : memref<9x8x4xbf16, #tpu.memory_space<vmem>>, vector<1x8x4xbf16>
    %357 = vector.shape_cast %356 : vector<1x8x4xbf16> to vector<8x4xbf16>
    %358 = arith.truncf %355 : vector<4x256xf32> to vector<4x256xbf16>
    %cst_258 = arith.constant dense<0.000000e+00> : vector<8x256xf32>
    %359 = tpu.matmul %357, %358, %cst_258 {dimension_numbers = #tpu.dot_dimension_numbers<[1], [0], [0], [1], [0, 0, 1, 1], [], []>} : vector<8x4xbf16>, vector<4x256xbf16>, vector<8x256xf32> -> vector<8x256xf32>
    %360 = arith.addf %351, %359 : vector<8x256xf32>
    %c240_i32_259 = arith.constant 240 : i32
    %361 = tpu.dynamic_rotate %302 by %c240_i32_259 dim 1 : vector<4x256xf32>, i32 -> vector<4x256xf32>
    %c7_260 = arith.constant 7 : index
    %c0_261 = arith.constant 0 : index
    %362 = vector.load %arg2[%c7_260, %c0_261] : memref<9x256xf32, #tpu.memory_space<vmem>>, vector<1x256xf32>
    %363 = vector.broadcast %362 : vector<1x256xf32> to vector<4x256xf32>
    %364 = arith.mulf %361, %363 : vector<4x256xf32>
    %c7_262 = arith.constant 7 : index
    %c0_263 = arith.constant 0 : index
    %c0_264 = arith.constant 0 : index
    %365 = vector.load %arg3[%c7_262, %c0_263, %c0_264] : memref<9x8x4xbf16, #tpu.memory_space<vmem>>, vector<1x8x4xbf16>
    %366 = vector.shape_cast %365 : vector<1x8x4xbf16> to vector<8x4xbf16>
    %367 = arith.truncf %364 : vector<4x256xf32> to vector<4x256xbf16>
    %cst_265 = arith.constant dense<0.000000e+00> : vector<8x256xf32>
    %368 = tpu.matmul %366, %367, %cst_265 {dimension_numbers = #tpu.dot_dimension_numbers<[1], [0], [0], [1], [0, 0, 1, 1], [], []>} : vector<8x4xbf16>, vector<4x256xbf16>, vector<8x256xf32> -> vector<8x256xf32>
    %369 = arith.addf %360, %368 : vector<8x256xf32>
    %c239_i32_266 = arith.constant 239 : i32
    %370 = tpu.dynamic_rotate %302 by %c239_i32_266 dim 1 : vector<4x256xf32>, i32 -> vector<4x256xf32>
    %c8_267 = arith.constant 8 : index
    %c0_268 = arith.constant 0 : index
    %371 = vector.load %arg2[%c8_267, %c0_268] : memref<9x256xf32, #tpu.memory_space<vmem>>, vector<1x256xf32>
    %372 = vector.broadcast %371 : vector<1x256xf32> to vector<4x256xf32>
    %373 = arith.mulf %370, %372 : vector<4x256xf32>
    %c8_269 = arith.constant 8 : index
    %c0_270 = arith.constant 0 : index
    %c0_271 = arith.constant 0 : index
    %374 = vector.load %arg3[%c8_269, %c0_270, %c0_271] : memref<9x8x4xbf16, #tpu.memory_space<vmem>>, vector<1x8x4xbf16>
    %375 = vector.shape_cast %374 : vector<1x8x4xbf16> to vector<8x4xbf16>
    %376 = arith.truncf %373 : vector<4x256xf32> to vector<4x256xbf16>
    %cst_272 = arith.constant dense<0.000000e+00> : vector<8x256xf32>
    %377 = tpu.matmul %375, %376, %cst_272 {dimension_numbers = #tpu.dot_dimension_numbers<[1], [0], [0], [1], [0, 0, 1, 1], [], []>} : vector<8x4xbf16>, vector<4x256xbf16>, vector<8x256xf32> -> vector<8x256xf32>
    %378 = arith.addf %369, %377 : vector<8x256xf32>
    %c0_273 = arith.constant 0 : index
    %c0_274 = arith.constant 0 : index
    %379 = vector.load %arg4[%c0_273, %c0_274] : memref<8x1xf32, #tpu.memory_space<vmem>>, vector<8x1xf32>
    %380 = vector.broadcast %379 : vector<8x1xf32> to vector<8x256xf32>
    %381 = arith.addf %378, %380 : vector<8x256xf32>
    %cst_275 = arith.constant 0.000000e+00 : f32
    %382 = vector.broadcast %cst_275 : f32 to vector<8x256xf32>
    %383 = arith.maximumf %381, %382 : vector<8x256xf32>
    %c0_276 = arith.constant 0 : index
    %c0_277 = arith.constant 0 : index
    %384 = vector.load %arg5[%c0_276, %c0_277] : memref<16x8xbf16, #tpu.memory_space<vmem>>, vector<16x8xbf16>
    %385 = arith.truncf %383 : vector<8x256xf32> to vector<8x256xbf16>
    %cst_278 = arith.constant dense<0.000000e+00> : vector<16x256xf32>
    %386 = tpu.matmul %384, %385, %cst_278 {dimension_numbers = #tpu.dot_dimension_numbers<[1], [0], [0], [1], [0, 0, 1, 1], [], []>} : vector<16x8xbf16>, vector<8x256xbf16>, vector<16x256xf32> -> vector<16x256xf32>
    %c0_279 = arith.constant 0 : index
    %c0_280 = arith.constant 0 : index
    %387 = vector.load %arg6[%c0_279, %c0_280] : memref<16x4xbf16, #tpu.memory_space<vmem>>, vector<16x4xbf16>
    %388 = arith.truncf %302 : vector<4x256xf32> to vector<4x256xbf16>
    %cst_281 = arith.constant dense<0.000000e+00> : vector<16x256xf32>
    %389 = tpu.matmul %387, %388, %cst_281 {dimension_numbers = #tpu.dot_dimension_numbers<[1], [0], [0], [1], [0, 0, 1, 1], [], []>} : vector<16x4xbf16>, vector<4x256xbf16>, vector<16x256xf32> -> vector<16x256xf32>
    %390 = arith.addf %386, %389 : vector<16x256xf32>
    %c0_282 = arith.constant 0 : index
    %c0_283 = arith.constant 0 : index
    %391 = vector.load %arg7[%c0_282, %c0_283] : memref<16x1xf32, #tpu.memory_space<vmem>>, vector<16x1xf32>
    %392 = vector.broadcast %391 : vector<16x1xf32> to vector<16x256xf32>
    %393 = arith.addf %390, %392 : vector<16x256xf32>
    %cst_284 = arith.constant 0.000000e+00 : f32
    %394 = vector.broadcast %cst_284 : f32 to vector<16x256xf32>
    %395 = arith.maximumf %393, %394 : vector<16x256xf32>
    %396 = arith.index_cast %c3_i32 : i32 to index
    %c0_285 = arith.constant 0 : index
    %c0_286 = arith.constant 0 : index
    %397 = vector.load %arg8[%396, %c0_285, %c0_286] : memref<4x16x256xf32, #tpu.memory_space<vmem>>, vector<1x16x256xf32>
    %398 = vector.shape_cast %397 : vector<1x16x256xf32> to vector<16x256xf32>
    %399 = vector.shape_cast %395 : vector<16x256xf32> to vector<1x16x256xf32>
    tpu.vector_store %arg8[%396, %c0_285, %c0_286], %399 {strides = array<i32>} : memref<4x16x256xf32, #tpu.memory_space<vmem>>, vector<1x16x256xf32>,
    %c4_i32 = arith.constant 4 : i32
    return
  }
  func.func @transform_0(%arg0: i32) -> (i32, i32, i32) {
    %c0_i32 = arith.constant 0 : i32
    %c0_i32_0 = arith.constant 0 : i32
    %c0_i32_1 = arith.constant 0 : i32
    return %arg0, %c0_i32, %c0_i32_0 : i32, i32, i32
  }
  func.func @transform_1(%arg0: i32) -> (i32, i32) {
    %c0_i32 = arith.constant 0 : i32
    %c0_i32_0 = arith.constant 0 : i32
    %c0_i32_1 = arith.constant 0 : i32
    return %c0_i32, %c0_i32_0 : i32, i32
  }
  func.func @transform_2(%arg0: i32) -> (i32, i32, i32) {
    %c0_i32 = arith.constant 0 : i32
    %c0_i32_0 = arith.constant 0 : i32
    %c0_i32_1 = arith.constant 0 : i32
    %c0_i32_2 = arith.constant 0 : i32
    return %c0_i32, %c0_i32_0, %c0_i32_1 : i32, i32, i32
  }
  func.func @transform_3(%arg0: i32) -> (i32, i32) {
    %c0_i32 = arith.constant 0 : i32
    %c0_i32_0 = arith.constant 0 : i32
    %c0_i32_1 = arith.constant 0 : i32
    return %c0_i32, %c0_i32_0 : i32, i32
  }
  func.func @transform_4(%arg0: i32) -> (i32, i32) {
    %c0_i32 = arith.constant 0 : i32
    %c0_i32_0 = arith.constant 0 : i32
    %c0_i32_1 = arith.constant 0 : i32
    return %c0_i32, %c0_i32_0 : i32, i32
  }
  func.func @transform_5(%arg0: i32) -> (i32, i32) {
    %c0_i32 = arith.constant 0 : i32
    %c0_i32_0 = arith.constant 0 : i32
    %c0_i32_1 = arith.constant 0 : i32
    return %c0_i32, %c0_i32_0 : i32, i32
  }
  func.func @transform_6(%arg0: i32) -> (i32, i32) {
    %c0_i32 = arith.constant 0 : i32
    %c0_i32_0 = arith.constant 0 : i32
    %c0_i32_1 = arith.constant 0 : i32
    return %c0_i32, %c0_i32_0 : i32, i32
  }
  func.func @transform_7(%arg0: i32) -> (i32, i32, i32) {
    %c0_i32 = arith.constant 0 : i32
    %c0_i32_0 = arith.constant 0 : i32
    %c0_i32_1 = arith.constant 0 : i32
    return %arg0, %c0_i32, %c0_i32_0 : i32, i32, i32
  }
}

</mosaic_0001>

<llo_original>
// kernel: tpu_custom_call.1
$region0: #{tpu_custom_call.1}
  #allocation0 [shape = 'u32[]', space=smem, size = 0x4, offset = 0x4, fixed_abs, tag = 'smem constant byte address 0x4 - core index']
  #allocation1 [shape = 'u32[144,128]{1,0:T(1,128)}', space=vmem, size = 0x12000, scoped, tag = 'internal scratch']
  %s0 = inlined_call_operand.vmem [shape: f32[8,4,256], index: 0, kind: input, shape index: {}]
  %s1 = inlined_call_operand.vmem [shape: f32[9,256], index: 1, kind: input, shape index: {}]
  %s2 = inlined_call_operand.vmem [shape: bf16[9,8,4], index: 2, kind: input, shape index: {}]
  %s3 = inlined_call_operand.vmem [shape: f32[8,1], index: 3, kind: input, shape index: {}]
  %s4 = inlined_call_operand.vmem [shape: bf16[16,8], index: 4, kind: input, shape index: {}]
  %s5 = inlined_call_operand.vmem [shape: bf16[16,4], index: 5, kind: input, shape index: {}]
  %s6 = inlined_call_operand.vmem [shape: f32[16,1], index: 6, kind: input, shape index: {}]
  %s7 = inlined_call_operand.hbm [shape: f32[8,16,256], index: 7, kind: output, shape index: {}]
  %s8 = sld [smem:[#allocation0]]
  $region61: #{tpu_custom_call.1} parent=0
    _
  %s10 = ssub.s32 1, %s8
  %s11 = scalar_select 0, %s10, %s8
  $region1: #{tpu_custom_call.1} parent=0
    #allocation2 [shape = 'u8[131072]{0}', space=vmem, size = 0x20000, scoped, tag = 'output window, operand 0']
    #allocation3 [shape = 's32[2]{0}', space=sflag, size = 0x8, scoped, tag = 'scoped memory for tpu_custom_call.1']
    %12 = vsyncpa [#allocation3], 0
    %s13 = scalar_lea.sflag [#allocation3], 1
    %14 = vsyncpa %s13, 0
    loop: start=0, step=1, limit=4
    $region2: #{tpu_custom_call.1} parent=1 // loop_pre_header
      _
    $region3: #{tpu_custom_call.1} parent=1 // loop_header
      %s16 = sphi 0, %s20
      %p17 = scmp.ge.s32.totalorder %s16, 4
      %s26 = sphi 0, %s28
      %s29 = sphi 0, %s26
      %s30 = sphi 0, %s29
      %s46 = sphi 0, %s30
      %s50 = sphi 0, %s50
      %s52 = sphi 0, %s50
      %s53 = sphi 0, %s52
      %s67 = sphi 0, %s53
      %s71 = sphi 0, %s71
      %s73 = sphi 0, %s71
      %s74 = sphi 0, %s73
      %s88 = sphi 0, %s74
      %s92 = sphi 0, %s92
      %s94 = sphi 0, %s92
      %s95 = sphi 0, %s94
      %s109 = sphi 0, %s95
      %s113 = sphi 0, %s113
      %s115 = sphi 0, %s113
      %s116 = sphi 0, %s115
      %s130 = sphi 0, %s116
      %s134 = sphi 0, %s134
      %s136 = sphi 0, %s134
      %s137 = sphi 0, %s136
      %s151 = sphi 0, %s137
      %s155 = sphi 0, %s155
      %s157 = sphi 0, %s155
      %s158 = sphi 0, %s157
      %s172 = sphi 0, %s158
      %s178 = sphi 0, %s180
      %s181 = sphi 0, %s178
      %s182 = sphi 0, %s181
      %s198 = sphi 0, %s182
    $region4: #{tpu_custom_call.1} parent=1 // loop_header_branch
      %19 = sbr.rel (%p17) target = $region8
    $region5: #{tpu_custom_call.1} parent=1 // loop_body
      %s21 = ssub.s32 %s16, 1
      %s22 = ssub.s32 %s16, 2
      %s23 = sadd.s32 %s16, 1
      %s24 = ssub.s32 %s16, %s23
      %p25 = scmp.eq.s32.totalorder %s24, 0
      %s27 = sadd.s32 %s26, 1
      %s28 = scalar_select %p25, %s26, %s27
      %p31 = pneg %p25
      %p32 = scmp.eq.s32.totalorder %s16, 1
      %p33 = por %p31, %p32
      %p34 = scmp.ne.s32.totalorder %s26, %s29
      %p35 = scmp.eq.s32.totalorder %s16, 0
      %p36 = por %p34, %p35
      %p37 = scmp.ne.s32.totalorder %s26, %s29
      %p38 = scmp.eq.s32.totalorder %s21, 1
      %p39 = por %p37, %p38
      %p40 = scmp.ne.s32.totalorder %s29, %s30
      %p41 = scmp.eq.s32.totalorder %s21, 0
      %p42 = por %p40, %p41
      %p43 = scmp.ne.s32.totalorder %s29, %s30
      %p44 = scmp.eq.s32.totalorder %s22, 1
      %p45 = por %p43, %p44
      %p47 = scmp.ne.s32.totalorder %s30, %s46
      %p48 = scmp.eq.s32.totalorder %s22, 0
      %p49 = por %p47, %p48
      %s51 = sadd.s32 %s50, 1
      %p54 = scmp.eq.s32.totalorder %s16, 1
      %p55 = scmp.ne.s32.totalorder %s50, %s52
      %p56 = scmp.eq.s32.totalorder %s16, 0
      %p57 = por %p55, %p56
      %p58 = scmp.ne.s32.totalorder %s50, %s52
      %p59 = scmp.eq.s32.totalorder %s21, 1
      %p60 = por %p58, %p59
      %p61 = scmp.ne.s32.totalorder %s52, %s53
      %p62 = scmp.eq.s32.totalorder %s21, 0
      %p63 = por %p61, %p62
      %p64 = scmp.ne.s32.totalorder %s52, %s53
      %p65 = scmp.eq.s32.totalorder %s22, 1
      %p66 = por %p64, %p65
      %p68 = scmp.ne.s32.totalorder %s53, %s67
      %p69 = scmp.eq.s32.totalorder %s22, 0
      %p70 = por %p68, %p69
      %s72 = sadd.s32 %s71, 1
      %p75 = scmp.eq.s32.totalorder %s16, 1
      %p76 = scmp.ne.s32.totalorder %s71, %s73
      %p77 = scmp.eq.s32.totalorder %s16, 0
      %p78 = por %p76, %p77
      %p79 = scmp.ne.s32.totalorder %s71, %s73
      %p80 = scmp.eq.s32.totalorder %s21, 1
      %p81 = por %p79, %p80
      %p82 = scmp.ne.s32.totalorder %s73, %s74
      %p83 = scmp.eq.s32.totalorder %s21, 0
      %p84 = por %p82, %p83
      %p85 = scmp.ne.s32.totalorder %s73, %s74
      %p86 = scmp.eq.s32.totalorder %s22, 1
      %p87 = por %p85, %p86
      %p89 = scmp.ne.s32.totalorder %s74, %s88
      %p90 = scmp.eq.s32.totalorder %s22, 0
      %p91 = por %p89, %p90
      %s93 = sadd.s32 %s92, 1
      %p96 = scmp.eq.s32.totalorder %s16, 1
      %p97 = scmp.ne.s32.totalorder %s92, %s94
      %p98 = scmp.eq.s32.totalorder %s16, 0
      %p99 = por %p97, %p98
      %p100 = scmp.ne.s32.totalorder %s92, %s94
      %p101 = scmp.eq.s32.totalorder %s21, 1
      %p102 = por %p100, %p101
      %p103 = scmp.ne.s32.totalorder %s94, %s95
      %p104 = scmp.eq.s32.totalorder %s21, 0
      %p105 = por %p103, %p104
      %p106 = scmp.ne.s32.totalorder %s94, %s95
      %p107 = scmp.eq.s32.totalorder %s22, 1
      %p108 = por %p106, %p107
      %p110 = scmp.ne.s32.totalorder %s95, %s109
      %p111 = scmp.eq.s32.totalorder %s22, 0
      %p112 = por %p110, %p111
      %s114 = sadd.s32 %s113, 1
      %p117 = scmp.eq.s32.totalorder %s16, 1
      %p118 = scmp.ne.s32.totalorder %s113, %s115
      %p119 = scmp.eq.s32.totalorder %s16, 0
      %p120 = por %p118, %p119
      %p121 = scmp.ne.s32.totalorder %s113, %s115
      %p122 = scmp.eq.s32.totalorder %s21, 1
      %p123 = por %p121, %p122
      %p124 = scmp.ne.s32.totalorder %s115, %s116
      %p125 = scmp.eq.s32.totalorder %s21, 0
      %p126 = por %p124, %p125
      %p127 = scmp.ne.s32.totalorder %s115, %s116
      %p128 = scmp.eq.s32.totalorder %s22, 1
      %p129 = por %p127, %p128
      %p131 = scmp.ne.s32.totalorder %s116, %s130
      %p132 = scmp.eq.s32.totalorder %s22, 0
      %p133 = por %p131, %p132
      %s135 = sadd.s32 %s134, 1
      %p138 = scmp.eq.s32.totalorder %s16, 1
      %p139 = scmp.ne.s32.totalorder %s134, %s136
      %p140 = scmp.eq.s32.totalorder %s16, 0
      %p141 = por %p139, %p140
      %p142 = scmp.ne.s32.totalorder %s134, %s136
      %p143 = scmp.eq.s32.totalorder %s21, 1
      %p144 = por %p142, %p143
      %p145 = scmp.ne.s32.totalorder %s136, %s137
      %p146 = scmp.eq.s32.totalorder %s21, 0
      %p147 = por %p145, %p146
      %p148 = scmp.ne.s32.totalorder %s136, %s137
      %p149 = scmp.eq.s32.totalorder %s22, 1
      %p150 = por %p148, %p149
      %p152 = scmp.ne.s32.totalorder %s137, %s151
      %p153 = scmp.eq.s32.totalorder %s22, 0
      %p154 = por %p152, %p153
      %s156 = sadd.s32 %s155, 1
      %p159 = scmp.eq.s32.totalorder %s16, 1
      %p160 = scmp.ne.s32.totalorder %s155, %s157
      %p161 = scmp.eq.s32.totalorder %s16, 0
      %p162 = por %p160, %p161
      %p163 = scmp.ne.s32.totalorder %s155, %s157
      %p164 = scmp.eq.s32.totalorder %s21, 1
      %p165 = por %p163, %p164
      %p166 = scmp.ne.s32.totalorder %s157, %s158
      %p167 = scmp.eq.s32.totalorder %s21, 0
      %p168 = por %p166, %p167
      %p169 = scmp.ne.s32.totalorder %s157, %s158
      %p170 = scmp.eq.s32.totalorder %s22, 1
      %p171 = por %p169, %p170
      %p173 = scmp.ne.s32.totalorder %s158, %s172
      %p174 = scmp.eq.s32.totalorder %s22, 0
      %p175 = por %p173, %p174
      %s176 = ssub.s32 %s16, %s23
      %p177 = scmp.eq.s32.totalorder %s176, 0
      %s179 = sadd.s32 %s178, 1
      %s180 = scalar_select %p177, %s178, %s179
      %p183 = pneg %p177
      %p184 = scmp.eq.s32.totalorder %s16, 1
      %p185 = por %p183, %p184
      %p186 = scmp.ne.s32.totalorder %s178, %s181
      %p187 = scmp.eq.s32.totalorder %s16, 0
      %p188 = por %p186, %p187
      %p189 = scmp.ne.s32.totalorder %s178, %s181
      %p190 = scmp.eq.s32.totalorder %s21, 1
      %p191 = por %p189, %p190
      %p192 = scmp.ne.s32.totalorder %s181, %s182
      %p193 = scmp.eq.s32.totalorder %s21, 0
      %p194 = por %p192, %p193
      %p195 = scmp.ne.s32.totalorder %s181, %s182
      %p196 = scmp.eq.s32.totalorder %s22, 1
      %p197 = por %p195, %p196
      %p199 = scmp.ne.s32.totalorder %s182, %s198
      %p200 = scmp.eq.s32.totalorder %s22, 0
      %p201 = por %p199, %p200
      %p202 = scmp.le.s32.totalorder 1, %s16
      %p203 = scmp.lt.s32.totalorder %s16, 3
      %p204 = pnand %p202, %p203
      %p205 = pneg %p204
      // Predicated region
      $region9: #{tpu_custom_call.1} parent=5 // pred_check
        _
      $region10: #{tpu_custom_call.1} parent=5 // pred_check_branch
        %207 = sbr.rel (%p204) target = $region12
      $region11: #{tpu_custom_call.1} parent=5 // pred_region
        %s208 = ssub.s32 %s16, 1
        // Predicated region
        $region13: #{tpu_custom_call.1} parent=11 // pred_check
          %p209 = pneg %p63
        $region14: #{tpu_custom_call.1} parent=11 // pred_check_branch
          %211 = sbr.rel (%p209) target = $region16
        $region15: #{tpu_custom_call.1} parent=11 // pred_region
          _
        $region16: #{tpu_custom_call.1} parent=11 // pred_fallthru
          _
        // Predicated region
        $region17: #{tpu_custom_call.1} parent=11 // pred_check
          %p212 = pneg %p84
        $region18: #{tpu_custom_call.1} parent=11 // pred_check_branch
          %214 = sbr.rel (%p212) target = $region20
        $region19: #{tpu_custom_call.1} parent=11 // pred_region
          _
        $region20: #{tpu_custom_call.1} parent=11 // pred_fallthru
          _
        // Predicated region
        $region21: #{tpu_custom_call.1} parent=11 // pred_check
          %p215 = pneg %p105
        $region22: #{tpu_custom_call.1} parent=11 // pred_check_branch
          %217 = sbr.rel (%p215) target = $region24
        $region23: #{tpu_custom_call.1} parent=11 // pred_region
          _
        $region24: #{tpu_custom_call.1} parent=11 // pred_fallthru
          _
        // Predicated region
        $region25: #{tpu_custom_call.1} parent=11 // pred_check
          %p218 = pneg %p126
        $region26: #{tpu_custom_call.1} parent=11 // pred_check_branch
          %220 = sbr.rel (%p218) target = $region28
        $region27: #{tpu_custom_call.1} parent=11 // pred_region
          _
        $region28: #{tpu_custom_call.1} parent=11 // pred_fallthru
          _
        // Predicated region
        $region29: #{tpu_custom_call.1} parent=11 // pred_check
          %p221 = pneg %p147
        $region30: #{tpu_custom_call.1} parent=11 // pred_check_branch
          %223 = sbr.rel (%p221) target = $region32
        $region31: #{tpu_custom_call.1} parent=11 // pred_region
          _
        $region32: #{tpu_custom_call.1} parent=11 // pred_fallthru
          _
        // Predicated region
        $region33: #{tpu_custom_call.1} parent=11 // pred_check
          %p224 = pneg %p168
        $region34: #{tpu_custom_call.1} parent=11 // pred_check_branch
          %226 = sbr.rel (%p224) target = $region36
        $region35: #{tpu_custom_call.1} parent=11 // pred_region
          _
        $region36: #{tpu_custom_call.1} parent=11 // pred_fallthru
          _
      $region12: #{tpu_custom_call.1} parent=5 // pred_fallthru
        _
      %p227 = scmp.lt.s32.totalorder %s16, 2
      // Predicated region
      $region37: #{tpu_custom_call.1} parent=5 // pred_check
        %p228 = pneg %p227
      $region38: #{tpu_custom_call.1} parent=5 // pred_check_branch
        %230 = sbr.rel (%p228) target = $region40
      $region39: #{tpu_custom_call.1} parent=5 // pred_region
        // Predicated region
        $region41: #{tpu_custom_call.1} parent=39 // pred_check
          %p231 = pneg %p36
        $region42: #{tpu_custom_call.1} parent=39 // pred_check_branch
          %233 = sbr.rel (%p231) target = $region44
        $region43: #{tpu_custom_call.1} parent=39 // pred_region
          %s234 = smul.u32 4, %s16
          %p235 = scmp.lt.s32.totalorder %s234, 7
          %s236 = scalar_select %p235, %s234, 7
          %s237 = smul.addr %s236, 2
          %s238 = smul.addr %s237, 4
          %s239 = scalar_lea.vmem %s0, %s238
          %s240 = smul.u32 4, %s16
        $region44: #{tpu_custom_call.1} parent=39 // pred_fallthru
          _
      $region40: #{tpu_custom_call.1} parent=5 // pred_fallthru
        _
      %p241 = scmp.le.s32.totalorder 1, %s16
      %p242 = scmp.lt.s32.totalorder %s16, 3
      %p243 = pnand %p241, %p242
      %p244 = pneg %p243
      // Predicated region
      $region45: #{tpu_custom_call.1} parent=5 // pred_check
        _
      $region46: #{tpu_custom_call.1} parent=5 // pred_check_branch
        %246 = sbr.rel (%p243) target = $region48
      $region47: #{tpu_custom_call.1} parent=5 // pred_region
        %s247 = ssub.s32 %s16, 1
        %s248 = smul.u32 4, %s21
        %p249 = scmp.lt.s32.totalorder %s248, 7
        %s250 = scalar_select %p249, %s248, 7
        %s251 = smul.addr %s250, 2
        %s252 = smul.addr %s251, 4
        %s253 = scalar_lea.vmem %s0, %s252
        %p254 = pneg %p42
        %p255 = pneg %p39
        %p256 = pneg %p63
        %p257 = pneg %p60
        %p258 = pneg %p84
        %p259 = pneg %p81
        %p260 = pneg %p105
        %p261 = pneg %p102
        %p262 = pneg %p126
        %p263 = pneg %p123
        %p264 = pneg %p147
        %p265 = pneg %p144
        %p266 = pneg %p168
        %p267 = pneg %p165
        %p268 = pneg %p194
        %p269 = pneg %p191
        %s270 = sand.u32 %s181, 1
        %s271 = scalar_lea.sflag [#allocation3], %s270
        %s272 = sand.u32 %s181, 1
        %s273 = smul.addr %s272, 128
        %s274 = scalar_lea.vmem [#allocation2], %s273
        %s275 = smul.u32 4, %s21
        %p276 = scmp.lt.s32.totalorder %s275, 7
        %s277 = scalar_select %p276, %s275, 7
        %s278 = smul.addr %s277, 2
        %s279 = smul.addr %s278, 4
        %s280 = scalar_lea.vmem %s0, %s279
        %s281 = smul.u32 4, %s21
        %s282 = smul.u32 4, %s21
        %v284 = vld [vmem:[%s280] sm:$0xff]
        %v286 = vcombine.high %v284, %v284
        %288 = vrot.lane.b32.xlu0 %v284, 17
        %v289 = vpop.permute.xlu0 %288
        %290 = vrot.lane.b32.xlu0 %v286, 17
        %v291 = vpop.permute.xlu0 %290
        %v292 = vlaneseq
        %v293 = vand.u32 %v292, 127
        %vm294 = vcmp.lt.s32.totalorder %v293, 17
        %v295 = vsel %vm294, %v289, %v291
        %v296 = vsel %vm294, %v291, %v289
        %v297 = vld [vmem:[%s1] ss:$8 sm:$0x3]
        %v299 = vlaneseq
        %v300 = vshrl.u32 %v299, 7
        %v301 = vsub.s32 0, %v300
        %v302 = vrot.slane %v297, %v301
        %v303 = vlaneseq
        %v304 = vshrl.u32 %v303, 7
        %v305 = vsub.s32 1, %v304
        %v306 = vrot.slane %v297, %v305
        %v309 = vmul.f32 %v296, %v302
        %v310 = vmul.f32 %v295, %v306
        %v311 = vld [vmem:[%s2] sm:$0xf]
        %v312 = vpack.c.bf16 %v309, %v309
        %v313 = vpack.c.bf16 %v310, %v310
        %314 = vrot.lane.b32.xlu0 %v284, 16
        %v315 = vpop.permute.xlu0 %314
        %316 = vrot.lane.b32.xlu0 %v286, 16
        %v317 = vpop.permute.xlu0 %316
        %vm318 = vcmp.lt.s32.totalorder %v293, 16
        %v319 = vsel %vm318, %v315, %v317
        %v320 = vsel %vm318, %v317, %v315
        %s321 = scalar_lea.vmem %s1, 1
        %v322 = vld [vmem:[%s321] ss:$8 sm:$0x3]
        %v324 = vlaneseq
        %v325 = vshrl.u32 %v324, 7
        %v326 = vsub.s32 0, %v325
        %v327 = vrot.slane %v322, %v326
        %v328 = vlaneseq
        %v329 = vshrl.u32 %v328, 7
        %v330 = vsub.s32 1, %v329
        %v331 = vrot.slane %v322, %v330
        %v334 = vmul.f32 %v320, %v327
        %v335 = vmul.f32 %v319, %v331
        %s336 = scalar_lea.vmem %s2, 4
        %v337 = vld [vmem:[%s336] sm:$0xf]
        %v338 = vpack.c.bf16 %v334, %v334
        %v339 = vpack.c.bf16 %v335, %v335
        %vm340 = vcmask 31744
        %v342 = vsel %vm340, %v337, 0
        %vm344 = vcmask 1041408
        %v346 = vsel %vm344, %v338, 0
        %v349 = vsel %vm344, %v339, 0
        %351 = vmatprep.subr.bf16.mxu0 %v349
        %352 = vmatpush1.bf16.msra.mxu0 %v346
        %353 = vmatprep.subr.bf16.mxu0 0
        %354 = vmatpush1.bf16.msra.mxu0 0
        %355 = vmatprep.subr.bf16.mxu0 0
        %356 = vmatpush1.bf16.msra.mxu0 0
        %357 = vmatprep.subr.bf16.mxu0 0
        %358 = vmatpush1.bf16.msra.mxu0 0
        %359 = vmatprep.subr.bf16.mxu0 0
        %360 = vmatpush1.bf16.msra.mxu0 0
        %361 = vmatprep.subr.bf16.mxu0 0
        %362 = vmatpush1.bf16.msra.mxu0 0
        %363 = vmatprep.subr.bf16.mxu0 0
        %364 = vmatpush1.bf16.msra.mxu0 0
        %365 = vmatprep.subr.bf16.mxu0 0
        %366 = vmatpush1.bf16.msra.mxu0 0
        %367 = vmatprep.subr.bf16.mxu0 0
        %368 = vmatpush1.bf16.msra.mxu0 0
        %369 = vmatprep.subr.bf16.mxu0 0
        %370 = vmatpush1.bf16.msra.mxu0 0
        %371 = vmatprep.subr.bf16.mxu0 0
        %372 = vmatpush1.bf16.msra.mxu0 0
        %373 = vmatprep.subr.bf16.mxu0 0
        %374 = vmatpush1.bf16.msra.mxu0 0
        %375 = vmatprep.subr.bf16.mxu0 0
        %376 = vmatpush1.bf16.msra.mxu0 0
        %377 = vmatprep.subr.bf16.mxu0 0
        %378 = vmatpush1.bf16.msra.mxu0 0
        %379 = vmatprep.subr.bf16.mxu0 0
        %380 = vmatpush1.bf16.msra.mxu0 0
        %381 = vmatprep.subr.bf16.mxu0 0
        %382 = vmatpush1.bf16.msra.mxu0 0
        %383 = vmatprep.mubr.bf16.mxu0 0
        %384 = vmatmul.mubr.bf16.gmra.mrb[0].mxu0 %v342
        %v385 = vpop.f32.mrb[0].mxu0
        %v386 = vadd.f32 0.0, %v385
        %v387 = vpop.f32.mrb[0].mxu0
        %v388 = vadd.f32 0.0, %v387
        %v389 = vpop.f32.mrb[0].mxu0
        %v390 = vpop.f32.mrb[0].mxu0
        %391 = vdwg.mxu0
        %v393 = vsel %vm340, %v311, 0
        %v396 = vsel %vm344, %v312, 0
        %v399 = vsel %vm344, %v313, 0
        %401 = vmatprep.subr.bf16.mxu0 %v399
        %402 = vmatpush1.bf16.msra.mxu0 %v396
        %403 = vmatprep.subr.bf16.mxu0 0
        %404 = vmatpush1.bf16.msra.mxu0 0
        %405 = vmatprep.subr.bf16.mxu0 0
        %406 = vmatpush1.bf16.msra.mxu0 0
        %407 = vmatprep.subr.bf16.mxu0 0
        %408 = vmatpush1.bf16.msra.mxu0 0
        %409 = vmatprep.subr.bf16.mxu0 0
        %410 = vmatpush1.bf16.msra.mxu0 0
        %411 = vmatprep.subr.bf16.mxu0 0
        %412 = vmatpush1.bf16.msra.mxu0 0
        %413 = vmatprep.subr.bf16.mxu0 0
        %414 = vmatpush1.bf16.msra.mxu0 0
        %415 = vmatprep.subr.bf16.mxu0 0
        %416 = vmatpush1.bf16.msra.mxu0 0
        %417 = vmatprep.subr.bf16.mxu0 0
        %418 = vmatpush1.bf16.msra.mxu0 0
        %419 = vmatprep.subr.bf16.mxu0 0
        %420 = vmatpush1.bf16.msra.mxu0 0
        %421 = vmatprep.subr.bf16.mxu0 0
        %422 = vmatpush1.bf16.msra.mxu0 0
        %423 = vmatprep.subr.bf16.mxu0 0
        %424 = vmatpush1.bf16.msra.mxu0 0
        %425 = vmatprep.subr.bf16.mxu0 0
        %426 = vmatpush1.bf16.msra.mxu0 0
        %427 = vmatprep.subr.bf16.mxu0 0
        %428 = vmatpush1.bf16.msra.mxu0 0
        %429 = vmatprep.subr.bf16.mxu0 0
        %430 = vmatpush1.bf16.msra.mxu0 0
        %431 = vmatprep.subr.bf16.mxu0 0
        %432 = vmatpush1.bf16.msra.mxu0 0
        %433 = vmatprep.mubr.bf16.mxu0 0
        %434 = vmatmul.mubr.bf16.gmra.mrb[0].mxu0 %v393
        %v435 = vpop.f32.mrb[0].mxu0
        %v436 = vadd.f32 %v386, %v435
        %v437 = vpop.f32.mrb[0].mxu0
        %v438 = vadd.f32 %v388, %v437
        %v439 = vpop.f32.mrb[0].mxu0
        %v440 = vpop.f32.mrb[0].mxu0
        %441 = vdwg.mxu0
        %442 = vrot.lane.b32.xlu0 %v284, 15
        %v443 = vpop.permute.xlu0 %442
        %444 = vrot.lane.b32.xlu0 %v286, 15
        %v445 = vpop.permute.xlu0 %444
        %vm446 = vcmp.lt.s32.totalorder %v293, 15
        %v447 = vsel %vm446, %v443, %v445
        %v448 = vsel %vm446, %v445, %v443
        %s449 = scalar_lea.vmem %s1, 2
        %v450 = vld [vmem:[%s449] ss:$8 sm:$0x3]
        %v452 = vlaneseq
        %v453 = vshrl.u32 %v452, 7
        %v454 = vsub.s32 0, %v453
        %v455 = vrot.slane %v450, %v454
        %v456 = vlaneseq
        %v457 = vshrl.u32 %v456, 7
        %v458 = vsub.s32 1, %v457
        %v459 = vrot.slane %v450, %v458
        %v462 = vmul.f32 %v448, %v455
        %v463 = vmul.f32 %v447, %v459
        %s464 = scalar_lea.vmem %s2, 8
        %v465 = vld [vmem:[%s464] sm:$0xf]
        %v466 = vpack.c.bf16 %v462, %v462
        %v467 = vpack.c.bf16 %v463, %v463
        %v469 = vsel %vm340, %v465, 0
        %v472 = vsel %vm344, %v466, 0
        %v475 = vsel %vm344, %v467, 0
        %477 = vmatprep.subr.bf16.mxu0 %v475
        %478 = vmatpush1.bf16.msra.mxu0 %v472
        %479 = vmatprep.subr.bf16.mxu0 0
        %480 = vmatpush1.bf16.msra.mxu0 0
        %481 = vmatprep.subr.bf16.mxu0 0
        %482 = vmatpush1.bf16.msra.mxu0 0
        %483 = vmatprep.subr.bf16.mxu0 0
        %484 = vmatpush1.bf16.msra.mxu0 0
        %485 = vmatprep.subr.bf16.mxu0 0
        %486 = vmatpush1.bf16.msra.mxu0 0
        %487 = vmatprep.subr.bf16.mxu0 0
        %488 = vmatpush1.bf16.msra.mxu0 0
        %489 = vmatprep.subr.bf16.mxu0 0
        %490 = vmatpush1.bf16.msra.mxu0 0
        %491 = vmatprep.subr.bf16.mxu0 0
        %492 = vmatpush1.bf16.msra.mxu0 0
        %493 = vmatprep.subr.bf16.mxu0 0
        %494 = vmatpush1.bf16.msra.mxu0 0
        %495 = vmatprep.subr.bf16.mxu0 0
        %496 = vmatpush1.bf16.msra.mxu0 0
        %497 = vmatprep.subr.bf16.mxu0 0
        %498 = vmatpush1.bf16.msra.mxu0 0
        %499 = vmatprep.subr.bf16.mxu0 0
        %500 = vmatpush1.bf16.msra.mxu0 0
        %501 = vmatprep.subr.bf16.mxu0 0
        %502 = vmatpush1.bf16.msra.mxu0 0
        %503 = vmatprep.subr.bf16.mxu0 0
        %504 = vmatpush1.bf16.msra.mxu0 0
        %505 = vmatprep.subr.bf16.mxu0 0
        %506 = vmatpush1.bf16.msra.mxu0 0
        %507 = vmatprep.subr.bf16.mxu0 0
        %508 = vmatpush1.bf16.msra.mxu0 0
        %509 = vmatprep.mubr.bf16.mxu0 0
        %510 = vmatmul.mubr.bf16.gmra.mrb[0].mxu0 %v469
        %v511 = vpop.f32.mrb[0].mxu0
        %v512 = vadd.f32 0.0, %v511
        %v513 = vpop.f32.mrb[0].mxu0
        %v514 = vadd.f32 0.0, %v513
        %v515 = vpop.f32.mrb[0].mxu0
        %v516 = vpop.f32.mrb[0].mxu0
        %517 = vdwg.mxu0
        %v518 = vadd.f32 %v436, %v512
        %v519 = vadd.f32 %v438, %v514
        %520 = vrot.lane.b32.xlu0 %v284, 1
        %v521 = vpop.permute.xlu0 %520
        %522 = vrot.lane.b32.xlu0 %v286, 1
        %v523 = vpop.permute.xlu0 %522
        %vm524 = vcmp.lt.s32.totalorder %v293, 1
        %v525 = vsel %vm524, %v521, %v523
        %v526 = vsel %vm524, %v523, %v521
        %s527 = scalar_lea.vmem %s1, 3
        %v528 = vld [vmem:[%s527] ss:$8 sm:$0x3]
        %v530 = vlaneseq
        %v531 = vshrl.u32 %v530, 7
        %v532 = vsub.s32 0, %v531
        %v533 = vrot.slane %v528, %v532
        %v534 = vlaneseq
        %v535 = vshrl.u32 %v534, 7
        %v536 = vsub.s32 1, %v535
        %v537 = vrot.slane %v528, %v536
        %v540 = vmul.f32 %v526, %v533
        %v541 = vmul.f32 %v525, %v537
        %s542 = scalar_lea.vmem %s2, 12
        %v543 = vld [vmem:[%s542] sm:$0xf]
        %v544 = vpack.c.bf16 %v540, %v540
        %v545 = vpack.c.bf16 %v541, %v541
        %v547 = vsel %vm340, %v543, 0
        %v550 = vsel %vm344, %v544, 0
        %v553 = vsel %vm344, %v545, 0
        %555 = vmatprep.subr.bf16.mxu0 %v553
        %556 = vmatpush1.bf16.msra.mxu0 %v550
        %557 = vmatprep.subr.bf16.mxu0 0
        %558 = vmatpush1.bf16.msra.mxu0 0
        %559 = vmatprep.subr.bf16.mxu0 0
        %560 = vmatpush1.bf16.msra.mxu0 0
        %561 = vmatprep.subr.bf16.mxu0 0
        %562 = vmatpush1.bf16.msra.mxu0 0
        %563 = vmatprep.subr.bf16.mxu0 0
        %564 = vmatpush1.bf16.msra.mxu0 0
        %565 = vmatprep.subr.bf16.mxu0 0
        %566 = vmatpush1.bf16.msra.mxu0 0
        %567 = vmatprep.subr.bf16.mxu0 0
        %568 = vmatpush1.bf16.msra.mxu0 0
        %569 = vmatprep.subr.bf16.mxu0 0
        %570 = vmatpush1.bf16.msra.mxu0 0
        %571 = vmatprep.subr.bf16.mxu0 0
        %572 = vmatpush1.bf16.msra.mxu0 0
        %573 = vmatprep.subr.bf16.mxu0 0
        %574 = vmatpush1.bf16.msra.mxu0 0
        %575 = vmatprep.subr.bf16.mxu0 0
        %576 = vmatpush1.bf16.msra.mxu0 0
        %577 = vmatprep.subr.bf16.mxu0 0
        %578 = vmatpush1.bf16.msra.mxu0 0
        %579 = vmatprep.subr.bf16.mxu0 0
        %580 = vmatpush1.bf16.msra.mxu0 0
        %581 = vmatprep.subr.bf16.mxu0 0
        %582 = vmatpush1.bf16.msra.mxu0 0
        %583 = vmatprep.subr.bf16.mxu0 0
        %584 = vmatpush1.bf16.msra.mxu0 0
        %585 = vmatprep.subr.bf16.mxu0 0
        %586 = vmatpush1.bf16.msra.mxu0 0
        %587 = vmatprep.mubr.bf16.mxu0 0
        %588 = vmatmul.mubr.bf16.gmra.mrb[0].mxu0 %v547
        %v589 = vpop.f32.mrb[0].mxu0
        %v590 = vadd.f32 0.0, %v589
        %v591 = vpop.f32.mrb[0].mxu0
        %v592 = vadd.f32 0.0, %v591
        %v593 = vpop.f32.mrb[0].mxu0
        %v594 = vpop.f32.mrb[0].mxu0
        %595 = vdwg.mxu0
        %v596 = vadd.f32 %v518, %v590
        %v597 = vadd.f32 %v519, %v592
        %s598 = scalar_lea.vmem %s2, 16
        %v599 = vld [vmem:[%s598] sm:$0xf]
        %v600 = vpack.c.bf16 %v284, %v284
        %v601 = vpack.c.bf16 %v286, %v286
        %v603 = vsel %vm340, %v599, 0
        %v606 = vsel %vm344, %v600, 0
        %v609 = vsel %vm344, %v601, 0
        %611 = vmatprep.subr.bf16.mxu0 %v609
        %612 = vmatpush1.bf16.msra.mxu0 %v606
        %613 = vmatprep.subr.bf16.mxu0 0
        %614 = vmatpush1.bf16.msra.mxu0 0
        %615 = vmatprep.subr.bf16.mxu0 0
        %616 = vmatpush1.bf16.msra.mxu0 0
        %617 = vmatprep.subr.bf16.mxu0 0
        %618 = vmatpush1.bf16.msra.mxu0 0
        %619 = vmatprep.subr.bf16.mxu0 0
        %620 = vmatpush1.bf16.msra.mxu0 0
        %621 = vmatprep.subr.bf16.mxu0 0
        %622 = vmatpush1.bf16.msra.mxu0 0
        %623 = vmatprep.subr.bf16.mxu0 0
        %624 = vmatpush1.bf16.msra.mxu0 0
        %625 = vmatprep.subr.bf16.mxu0 0
        %626 = vmatpush1.bf16.msra.mxu0 0
        %627 = vmatprep.subr.bf16.mxu0 0
        %628 = vmatpush1.bf16.msra.mxu0 0
        %629 = vmatprep.subr.bf16.mxu0 0
        %630 = vmatpush1.bf16.msra.mxu0 0
        %631 = vmatprep.subr.bf16.mxu0 0
        %632 = vmatpush1.bf16.msra.mxu0 0
        %633 = vmatprep.subr.bf16.mxu0 0
        %634 = vmatpush1.bf16.msra.mxu0 0
        %635 = vmatprep.subr.bf16.mxu0 0
        %636 = vmatpush1.bf16.msra.mxu0 0
        %637 = vmatprep.subr.bf16.mxu0 0
        %638 = vmatpush1.bf16.msra.mxu0 0
        %639 = vmatprep.subr.bf16.mxu0 0
        %640 = vmatpush1.bf16.msra.mxu0 0
        %641 = vmatprep.subr.bf16.mxu0 0
        %642 = vmatpush1.bf16.msra.mxu0 0
        %643 = vmatprep.mubr.bf16.mxu0 0
        %644 = vmatmul.mubr.bf16.gmra.mrb[0].mxu0 %v603
        %v645 = vpop.f32.mrb[0].mxu0
        %v646 = vadd.f32 0.0, %v645
        %v647 = vpop.f32.mrb[0].mxu0
        %v648 = vadd.f32 0.0, %v647
        %v649 = vpop.f32.mrb[0].mxu0
        %v650 = vpop.f32.mrb[0].mxu0
        %651 = vdwg.mxu0
        %v652 = vadd.f32 %v596, %v646
        %v653 = vadd.f32 %v597, %v648
        %654 = vrot.lane.b32.xlu0 %v284, 127
        %v655 = vpop.permute.xlu0 %654
        %656 = vrot.lane.b32.xlu0 %v286, 127
        %v657 = vpop.permute.xlu0 %656
        %vm658 = vcmp.lt.s32.totalorder %v293, 127
        %v659 = vsel %vm658, %v655, %v657
        %v660 = vsel %vm658, %v657, %v655
        %s661 = scalar_lea.vmem %s1, 5
        %v662 = vld [vmem:[%s661] ss:$8 sm:$0x3]
        %v664 = vlaneseq
        %v665 = vshrl.u32 %v664, 7
        %v666 = vsub.s32 0, %v665
        %v667 = vrot.slane %v662, %v666
        %v668 = vlaneseq
        %v669 = vshrl.u32 %v668, 7
        %v670 = vsub.s32 1, %v669
        %v671 = vrot.slane %v662, %v670
        %v674 = vmul.f32 %v659, %v667
        %v675 = vmul.f32 %v660, %v671
        %s676 = scalar_lea.vmem %s2, 20
        %v677 = vld [vmem:[%s676] sm:$0xf]
        %v678 = vpack.c.bf16 %v674, %v674
        %v679 = vpack.c.bf16 %v675, %v675
        %v681 = vsel %vm340, %v677, 0
        %v684 = vsel %vm344, %v678, 0
        %v687 = vsel %vm344, %v679, 0
        %689 = vmatprep.subr.bf16.mxu0 %v687
        %690 = vmatpush1.bf16.msra.mxu0 %v684
        %691 = vmatprep.subr.bf16.mxu0 0
        %692 = vmatpush1.bf16.msra.mxu0 0
        %693 = vmatprep.subr.bf16.mxu0 0
        %694 = vmatpush1.bf16.msra.mxu0 0
        %695 = vmatprep.subr.bf16.mxu0 0
        %696 = vmatpush1.bf16.msra.mxu0 0
        %697 = vmatprep.subr.bf16.mxu0 0
        %698 = vmatpush1.bf16.msra.mxu0 0
        %699 = vmatprep.subr.bf16.mxu0 0
        %700 = vmatpush1.bf16.msra.mxu0 0
        %701 = vmatprep.subr.bf16.mxu0 0
        %702 = vmatpush1.bf16.msra.mxu0 0
        %703 = vmatprep.subr.bf16.mxu0 0
        %704 = vmatpush1.bf16.msra.mxu0 0
        %705 = vmatprep.subr.bf16.mxu0 0
        %706 = vmatpush1.bf16.msra.mxu0 0
        %707 = vmatprep.subr.bf16.mxu0 0
        %708 = vmatpush1.bf16.msra.mxu0 0
        %709 = vmatprep.subr.bf16.mxu0 0
        %710 = vmatpush1.bf16.msra.mxu0 0
        %711 = vmatprep.subr.bf16.mxu0 0
        %712 = vmatpush1.bf16.msra.mxu0 0
        %713 = vmatprep.subr.bf16.mxu0 0
        %714 = vmatpush1.bf16.msra.mxu0 0
        %715 = vmatprep.subr.bf16.mxu0 0
        %716 = vmatpush1.bf16.msra.mxu0 0
        %717 = vmatprep.subr.bf16.mxu0 0
        %718 = vmatpush1.bf16.msra.mxu0 0
        %719 = vmatprep.subr.bf16.mxu0 0
        %720 = vmatpush1.bf16.msra.mxu0 0
        %721 = vmatprep.mubr.bf16.mxu0 0
        %722 = vmatmul.mubr.bf16.gmra.mrb[0].mxu0 %v681
        %v723 = vpop.f32.mrb[0].mxu0
        %v724 = vadd.f32 0.0, %v723
        %v725 = vpop.f32.mrb[0].mxu0
        %v726 = vadd.f32 0.0, %v725
        %v727 = vpop.f32.mrb[0].mxu0
        %v728 = vpop.f32.mrb[0].mxu0
        %729 = vdwg.mxu0
        %v730 = vadd.f32 %v652, %v724
        %v731 = vadd.f32 %v653, %v726
        %732 = vrot.lane.b32.xlu0 %v284, 113
        %v733 = vpop.permute.xlu0 %732
        %734 = vrot.lane.b32.xlu0 %v286, 113
        %v735 = vpop.permute.xlu0 %734
        %vm736 = vcmp.lt.s32.totalorder %v293, 113
        %v737 = vsel %vm736, %v733, %v735
        %v738 = vsel %vm736, %v735, %v733
        %s739 = scalar_lea.vmem %s1, 6
        %v740 = vld [vmem:[%s739] ss:$8 sm:$0x3]
        %v742 = vlaneseq
        %v743 = vshrl.u32 %v742, 7
        %v744 = vsub.s32 0, %v743
        %v745 = vrot.slane %v740, %v744
        %v746 = vlaneseq
        %v747 = vshrl.u32 %v746, 7
        %v748 = vsub.s32 1, %v747
        %v749 = vrot.slane %v740, %v748
        %v752 = vmul.f32 %v737, %v745
        %v753 = vmul.f32 %v738, %v749
        %s754 = scalar_lea.vmem %s2, 24
        %v755 = vld [vmem:[%s754] sm:$0xf]
        %v756 = vpack.c.bf16 %v752, %v752
        %v757 = vpack.c.bf16 %v753, %v753
        %v759 = vsel %vm340, %v755, 0
        %v762 = vsel %vm344, %v756, 0
        %v765 = vsel %vm344, %v757, 0
        %767 = vmatprep.subr.bf16.mxu0 %v765
        %768 = vmatpush1.bf16.msra.mxu0 %v762
        %769 = vmatprep.subr.bf16.mxu0 0
        %770 = vmatpush1.bf16.msra.mxu0 0
        %771 = vmatprep.subr.bf16.mxu0 0
        %772 = vmatpush1.bf16.msra.mxu0 0
        %773 = vmatprep.subr.bf16.mxu0 0
        %774 = vmatpush1.bf16.msra.mxu0 0
        %775 = vmatprep.subr.bf16.mxu0 0
        %776 = vmatpush1.bf16.msra.mxu0 0
        %777 = vmatprep.subr.bf16.mxu0 0
        %778 = vmatpush1.bf16.msra.mxu0 0
        %779 = vmatprep.subr.bf16.mxu0 0
        %780 = vmatpush1.bf16.msra.mxu0 0
        %781 = vmatprep.subr.bf16.mxu0 0
        %782 = vmatpush1.bf16.msra.mxu0 0
        %783 = vmatprep.subr.bf16.mxu0 0
        %784 = vmatpush1.bf16.msra.mxu0 0
        %785 = vmatprep.subr.bf16.mxu0 0
        %786 = vmatpush1.bf16.msra.mxu0 0
        %787 = vmatprep.subr.bf16.mxu0 0
        %788 = vmatpush1.bf16.msra.mxu0 0
        %789 = vmatprep.subr.bf16.mxu0 0
        %790 = vmatpush1.bf16.msra.mxu0 0
        %791 = vmatprep.subr.bf16.mxu0 0
        %792 = vmatpush1.bf16.msra.mxu0 0
        %793 = vmatprep.subr.bf16.mxu0 0
        %794 = vmatpush1.bf16.msra.mxu0 0
        %795 = vmatprep.subr.bf16.mxu0 0
        %796 = vmatpush1.bf16.msra.mxu0 0
        %797 = vmatprep.subr.bf16.mxu0 0
        %798 = vmatpush1.bf16.msra.mxu0 0
        %799 = vmatprep.mubr.bf16.mxu0 0
        %800 = vmatmul.mubr.bf16.gmra.mrb[0].mxu0 %v759
        %v801 = vpop.f32.mrb[0].mxu0
        %v802 = vadd.f32 0.0, %v801
        %v803 = vpop.f32.mrb[0].mxu0
        %v804 = vadd.f32 0.0, %v803
        %v805 = vpop.f32.mrb[0].mxu0
        %v806 = vpop.f32.mrb[0].mxu0
        %807 = vdwg.mxu0
        %v808 = vadd.f32 %v730, %v802
        %v809 = vadd.f32 %v731, %v804
        %810 = vrot.lane.b32.xlu0 %v284, 112
        %v811 = vpop.permute.xlu0 %810
        %812 = vrot.lane.b32.xlu0 %v286, 112
        %v813 = vpop.permute.xlu0 %812
        %vm814 = vcmp.lt.s32.totalorder %v293, 112
        %v815 = vsel %vm814, %v811, %v813
        %v816 = vsel %vm814, %v813, %v811
        %s817 = scalar_lea.vmem %s1, 7
        %v818 = vld [vmem:[%s817] ss:$8 sm:$0x3]
        %v820 = vlaneseq
        %v821 = vshrl.u32 %v820, 7
        %v822 = vsub.s32 0, %v821
        %v823 = vrot.slane %v818, %v822
        %v824 = vlaneseq
        %v825 = vshrl.u32 %v824, 7
        %v826 = vsub.s32 1, %v825
        %v827 = vrot.slane %v818, %v826
        %v830 = vmul.f32 %v815, %v823
        %v831 = vmul.f32 %v816, %v827
        %s832 = scalar_lea.vmem %s2, 28
        %v833 = vld [vmem:[%s832] sm:$0xf]
        %v834 = vpack.c.bf16 %v830, %v830
        %v835 = vpack.c.bf16 %v831, %v831
        %v837 = vsel %vm340, %v833, 0
        %v840 = vsel %vm344, %v834, 0
        %v843 = vsel %vm344, %v835, 0
        %845 = vmatprep.subr.bf16.mxu0 %v843
        %846 = vmatpush1.bf16.msra.mxu0 %v840
        %847 = vmatprep.subr.bf16.mxu0 0
        %848 = vmatpush1.bf16.msra.mxu0 0
        %849 = vmatprep.subr.bf16.mxu0 0
        %850 = vmatpush1.bf16.msra.mxu0 0
        %851 = vmatprep.subr.bf16.mxu0 0
        %852 = vmatpush1.bf16.msra.mxu0 0
        %853 = vmatprep.subr.bf16.mxu0 0
        %854 = vmatpush1.bf16.msra.mxu0 0
        %855 = vmatprep.subr.bf16.mxu0 0
        %856 = vmatpush1.bf16.msra.mxu0 0
        %857 = vmatprep.subr.bf16.mxu0 0
        %858 = vmatpush1.bf16.msra.mxu0 0
        %859 = vmatprep.subr.bf16.mxu0 0
        %860 = vmatpush1.bf16.msra.mxu0 0
        %861 = vmatprep.subr.bf16.mxu0 0
        %862 = vmatpush1.bf16.msra.mxu0 0
        %863 = vmatprep.subr.bf16.mxu0 0
        %864 = vmatpush1.bf16.msra.mxu0 0
        %865 = vmatprep.subr.bf16.mxu0 0
        %866 = vmatpush1.bf16.msra.mxu0 0
        %867 = vmatprep.subr.bf16.mxu0 0
        %868 = vmatpush1.bf16.msra.mxu0 0
        %869 = vmatprep.subr.bf16.mxu0 0
        %870 = vmatpush1.bf16.msra.mxu0 0
        %871 = vmatprep.subr.bf16.mxu0 0
        %872 = vmatpush1.bf16.msra.mxu0 0
        %873 = vmatprep.subr.bf16.mxu0 0
        %874 = vmatpush1.bf16.msra.mxu0 0
        %875 = vmatprep.subr.bf16.mxu0 0
        %876 = vmatpush1.bf16.msra.mxu0 0
        %877 = vmatprep.mubr.bf16.mxu0 0
        %878 = vmatmul.mubr.bf16.gmra.mrb[0].mxu0 %v837
        %v879 = vpop.f32.mrb[0].mxu0
        %v880 = vadd.f32 0.0, %v879
        %v881 = vpop.f32.mrb[0].mxu0
        %v882 = vadd.f32 0.0, %v881
        %v883 = vpop.f32.mrb[0].mxu0
        %v884 = vpop.f32.mrb[0].mxu0
        %885 = vdwg.mxu0
        %v886 = vadd.f32 %v808, %v880
        %v887 = vadd.f32 %v809, %v882
        %888 = vrot.lane.b32.xlu0 %v284, 111
        %v889 = vpop.permute.xlu0 %888
        %890 = vrot.lane.b32.xlu0 %v286, 111
        %v891 = vpop.permute.xlu0 %890
        %vm892 = vcmp.lt.s32.totalorder %v293, 111
        %v893 = vsel %vm892, %v889, %v891
        %v894 = vsel %vm892, %v891, %v889
        %s895 = scalar_lea.vmem %s1, 16
        %v896 = vld [vmem:[%s895] ss:$8 sm:$0x3]
        %v898 = vlaneseq
        %v899 = vshrl.u32 %v898, 7
        %v900 = vsub.s32 0, %v899
        %v901 = vrot.slane %v896, %v900
        %v902 = vlaneseq
        %v903 = vshrl.u32 %v902, 7
        %v904 = vsub.s32 1, %v903
        %v905 = vrot.slane %v896, %v904
        %v908 = vmul.f32 %v893, %v901
        %v909 = vmul.f32 %v894, %v905
        %s910 = scalar_lea.vmem %s2, 32
        %v911 = vld [vmem:[%s910] sm:$0xf]
        %v912 = vpack.c.bf16 %v908, %v908
        %v913 = vpack.c.bf16 %v909, %v909
        %v915 = vsel %vm340, %v911, 0
        %v918 = vsel %vm344, %v912, 0
        %v921 = vsel %vm344, %v913, 0
        %923 = vmatprep.subr.bf16.mxu0 %v921
        %924 = vmatpush1.bf16.msra.mxu0 %v918
        %925 = vmatprep.subr.bf16.mxu0 0
        %926 = vmatpush1.bf16.msra.mxu0 0
        %927 = vmatprep.subr.bf16.mxu0 0
        %928 = vmatpush1.bf16.msra.mxu0 0
        %929 = vmatprep.subr.bf16.mxu0 0
        %930 = vmatpush1.bf16.msra.mxu0 0
        %931 = vmatprep.subr.bf16.mxu0 0
        %932 = vmatpush1.bf16.msra.mxu0 0
        %933 = vmatprep.subr.bf16.mxu0 0
        %934 = vmatpush1.bf16.msra.mxu0 0
        %935 = vmatprep.subr.bf16.mxu0 0
        %936 = vmatpush1.bf16.msra.mxu0 0
        %937 = vmatprep.subr.bf16.mxu0 0
        %938 = vmatpush1.bf16.msra.mxu0 0
        %939 = vmatprep.subr.bf16.mxu0 0
        %940 = vmatpush1.bf16.msra.mxu0 0
        %941 = vmatprep.subr.bf16.mxu0 0
        %942 = vmatpush1.bf16.msra.mxu0 0
        %943 = vmatprep.subr.bf16.mxu0 0
        %944 = vmatpush1.bf16.msra.mxu0 0
        %945 = vmatprep.subr.bf16.mxu0 0
        %946 = vmatpush1.bf16.msra.mxu0 0
        %947 = vmatprep.subr.bf16.mxu0 0
        %948 = vmatpush1.bf16.msra.mxu0 0
        %949 = vmatprep.subr.bf16.mxu0 0
        %950 = vmatpush1.bf16.msra.mxu0 0
        %951 = vmatprep.subr.bf16.mxu0 0
        %952 = vmatpush1.bf16.msra.mxu0 0
        %953 = vmatprep.subr.bf16.mxu0 0
        %954 = vmatpush1.bf16.msra.mxu0 0
        %955 = vmatprep.mubr.bf16.mxu0 0
        %956 = vmatmul.mubr.bf16.gmra.mrb[0].mxu0 %v915
        %v957 = vpop.f32.mrb[0].mxu0
        %v958 = vadd.f32 0.0, %v957
        %v959 = vpop.f32.mrb[0].mxu0
        %v960 = vadd.f32 0.0, %v959
        %v961 = vpop.f32.mrb[0].mxu0
        %v962 = vpop.f32.mrb[0].mxu0
        %963 = vdwg.mxu0
        %v964 = vadd.f32 %v886, %v958
        %v965 = vadd.f32 %v887, %v960
        %v966 = vld [vmem:[%s3] sm:$0xff]
        %968 = vset.pattern.permute.xlu0 0
        %969 = vperm.xlu0 %968, %v966
        %v970 = vpop.permute.xlu0 %969
        %v972 = vadd.f32 %v964, %v970
        %v973 = vadd.f32 %v965, %v970
        %v974 = vmax.f32 %v972, 0.0
        %v975 = vmax.f32 %v973, 0.0
        %v976 = vld [vmem:[%s4] sm:$0xf]
        %v977 = vld [vmem:[%s4 + $0x4] sm:$0xf]
        %v978 = vpack.c.bf16 %v974, %v974
        %v979 = vpack.c.bf16 %v975, %v975
        %v980 = vld [vmem:[%s5] sm:$0xf]
        %v981 = vld [vmem:[%s5 + $0x4] sm:$0xf]
        %v984 = vunpack.c.l.b16 %v980
        %v985 = vunpack.c.l.b16 %v981
        %v986 = vpack.c.b16 %v985, %v984
        %v988 = vsel %vm340, %v986, 0
        %990 = vmatprep.subr.bf16.mxu0 %v609
        %991 = vmatpush1.bf16.msra.mxu0 %v606
        %992 = vmatprep.subr.bf16.mxu0 0
        %993 = vmatpush1.bf16.msra.mxu0 0
        %994 = vmatprep.subr.bf16.mxu0 0
        %995 = vmatpush1.bf16.msra.mxu0 0
        %996 = vmatprep.subr.bf16.mxu0 0
        %997 = vmatpush1.bf16.msra.mxu0 0
        %998 = vmatprep.subr.bf16.mxu0 0
        %999 = vmatpush1.bf16.msra.mxu0 0
        %1000 = vmatprep.subr.bf16.mxu0 0
        %1001 = vmatpush1.bf16.msra.mxu0 0
        %1002 = vmatprep.subr.bf16.mxu0 0
        %1003 = vmatpush1.bf16.msra.mxu0 0
        %1004 = vmatprep.subr.bf16.mxu0 0
        %1005 = vmatpush1.bf16.msra.mxu0 0
        %1006 = vmatprep.subr.bf16.mxu0 0
        %1007 = vmatpush1.bf16.msra.mxu0 0
        %1008 = vmatprep.subr.bf16.mxu0 0
        %1009 = vmatpush1.bf16.msra.mxu0 0
        %1010 = vmatprep.subr.bf16.mxu0 0
        %1011 = vmatpush1.bf16.msra.mxu0 0
        %1012 = vmatprep.subr.bf16.mxu0 0
        %1013 = vmatpush1.bf16.msra.mxu0 0
        %1014 = vmatprep.subr.bf16.mxu0 0
        %1015 = vmatpush1.bf16.msra.mxu0 0
        %1016 = vmatprep.subr.bf16.mxu0 0
        %1017 = vmatpush1.bf16.msra.mxu0 0
        %1018 = vmatprep.subr.bf16.mxu0 0
        %1019 = vmatpush1.bf16.msra.mxu0 0
        %1020 = vmatprep.subr.bf16.mxu0 0
        %1021 = vmatpush1.bf16.msra.mxu0 0
        %1022 = vmatprep.mubr.bf16.mxu0 0
        %1023 = vmatmul.mubr.bf16.gmra.mrb[0].mxu0 %v988
        %v1024 = vpop.f32.mrb[0].mxu0
        %v1025 = vadd.f32 0.0, %v1024
        %v1026 = vpop.f32.mrb[0].mxu0
        %v1027 = vadd.f32 0.0, %v1026
        %v1028 = vpop.f32.mrb[0].mxu0
        %v1029 = vadd.f32 0.0, %v1028
        %v1030 = vpop.f32.mrb[0].mxu0
        %v1031 = vadd.f32 0.0, %v1030
        %1032 = vdwg.mxu0
        %v1035 = vunpack.c.l.b16 %v976
        %v1036 = vunpack.c.l.b16 %v977
        %v1037 = vpack.c.b16 %v1036, %v1035
        %vm1038 = vcmask 64512
        %v1040 = vsel %vm1038, %v1037, 0
        %vm1042 = vcmask 1043456
        %v1044 = vsel %vm1042, %v978, 0
        %v1047 = vsel %vm1042, %v979, 0
        %1049 = vmatprep.subr.bf16.mxu0 %v1047
        %1050 = vmatpush1.bf16.msra.mxu0 %v1044
        %1051 = vmatprep.subr.bf16.mxu0 0
        %1052 = vmatpush1.bf16.msra.mxu0 0
        %1053 = vmatprep.subr.bf16.mxu0 0
        %1054 = vmatpush1.bf16.msra.mxu0 0
        %1055 = vmatprep.subr.bf16.mxu0 0
        %1056 = vmatpush1.bf16.msra.mxu0 0
        %1057 = vmatprep.subr.bf16.mxu0 0
        %1058 = vmatpush1.bf16.msra.mxu0 0
        %1059 = vmatprep.subr.bf16.mxu0 0
        %1060 = vmatpush1.bf16.msra.mxu0 0
        %1061 = vmatprep.subr.bf16.mxu0 0
        %1062 = vmatpush1.bf16.msra.mxu0 0
        %1063 = vmatprep.subr.bf16.mxu0 0
        %1064 = vmatpush1.bf16.msra.mxu0 0
        %1065 = vmatprep.subr.bf16.mxu0 0
        %1066 = vmatpush1.bf16.msra.mxu0 0
        %1067 = vmatprep.subr.bf16.mxu0 0
        %1068 = vmatpush1.bf16.msra.mxu0 0
        %1069 = vmatprep.subr.bf16.mxu0 0
        %1070 = vmatpush1.bf16.msra.mxu0 0
        %1071 = vmatprep.subr.bf16.mxu0 0
        %1072 = vmatpush1.bf16.msra.mxu0 0
        %1073 = vmatprep.subr.bf16.mxu0 0
        %1074 = vmatpush1.bf16.msra.mxu0 0
        %1075 = vmatprep.subr.bf16.mxu0 0
        %1076 = vmatpush1.bf16.msra.mxu0 0
        %1077 = vmatprep.subr.bf16.mxu0 0
        %1078 = vmatpush1.bf16.msra.mxu0 0
        %1079 = vmatprep.subr.bf16.mxu0 0
        %1080 = vmatpush1.bf16.msra.mxu0 0
        %1081 = vmatprep.mubr.bf16.mxu0 0
        %1082 = vmatmul.mubr.bf16.gmra.mrb[0].mxu0 %v1040
        %v1083 = vpop.f32.mrb[0].mxu0
        %v1084 = vadd.f32 %v1025, %v1083
        %v1085 = vpop.f32.mrb[0].mxu0
        %v1086 = vadd.f32 %v1027, %v1085
        %v1087 = vpop.f32.mrb[0].mxu0
        %v1088 = vadd.f32 %v1029, %v1087
        %v1089 = vpop.f32.mrb[0].mxu0
        %v1090 = vadd.f32 %v1031, %v1089
        %1091 = vdwg.mxu0
        %v1092 = vld [vmem:[%s6] sm:$0xff]
        %v1093 = vld [vmem:[%s6 + $0x8] sm:$0xff]
        %1095 = vset.pattern.permute.xlu0 0
        %1096 = vperm.xlu0 %1095, %v1092
        %v1097 = vpop.permute.xlu0 %1096
        %1100 = vset.pattern.permute.xlu0 0
        %1101 = vperm.xlu0 %1100, %v1093
        %v1102 = vpop.permute.xlu0 %1101
        %v1104 = vadd.f32 %v1084, %v1097
        %v1105 = vadd.f32 %v1086, %v1097
        %v1106 = vadd.f32 %v1088, %v1102
        %v1107 = vadd.f32 %v1090, %v1102
        %v1108 = vmax.f32 %v1104, 0.0
        %v1109 = vmax.f32 %v1105, 0.0
        %v1110 = vmax.f32 %v1106, 0.0
        %v1111 = vmax.f32 %v1107, 0.0
        %1112 = vst [vmem:[%s274] sm:$0xff] %v1108
        %1113 = vst [vmem:[%s274 + $0x8] sm:$0xff] %v1109
        %1114 = vst [vmem:[%s274 + $0x10] sm:$0xff] %v1110
        %1115 = vst [vmem:[%s274 + $0x18] sm:$0xff] %v1111
        %s1116 = scalar_lea.vmem %s280, 8
        %v1117 = vld [vmem:[%s1116] sm:$0xff]
        %v1119 = vcombine.high %v1117, %v1117
        %1121 = vrot.lane.b32.xlu0 %v1117, 17
        %v1122 = vpop.permute.xlu0 %1121
        %1123 = vrot.lane.b32.xlu0 %v1119, 17
        %v1124 = vpop.permute.xlu0 %1123
        %v1125 = vsel %vm294, %v1122, %v1124
        %v1126 = vsel %vm294, %v1124, %v1122
        %v1127 = vld [vmem:[%s1] ss:$8 sm:$0x3]
        %v1129 = vlaneseq
        %v1130 = vshrl.u32 %v1129, 7
        %v1131 = vsub.s32 0, %v1130
        %v1132 = vrot.slane %v1127, %v1131
        %v1133 = vlaneseq
        %v1134 = vshrl.u32 %v1133, 7
        %v1135 = vsub.s32 1, %v1134
        %v1136 = vrot.slane %v1127, %v1135
        %v1139 = vmul.f32 %v1126, %v1132
        %v1140 = vmul.f32 %v1125, %v1136
        %v1141 = vld [vmem:[%s2] sm:$0xf]
        %v1142 = vpack.c.bf16 %v1139, %v1139
        %v1143 = vpack.c.bf16 %v1140, %v1140
        %1144 = vrot.lane.b32.xlu0 %v1117, 16
        %v1145 = vpop.permute.xlu0 %1144
        %1146 = vrot.lane.b32.xlu0 %v1119, 16
        %v1147 = vpop.permute.xlu0 %1146
        %v1148 = vsel %vm318, %v1145, %v1147
        %v1149 = vsel %vm318, %v1147, %v1145
        %v1150 = vld [vmem:[%s321] ss:$8 sm:$0x3]
        %v1152 = vlaneseq
        %v1153 = vshrl.u32 %v1152, 7
        %v1154 = vsub.s32 0, %v1153
        %v1155 = vrot.slane %v1150, %v1154
        %v1156 = vlaneseq
        %v1157 = vshrl.u32 %v1156, 7
        %v1158 = vsub.s32 1, %v1157
        %v1159 = vrot.slane %v1150, %v1158
        %v1162 = vmul.f32 %v1149, %v1155
        %v1163 = vmul.f32 %v1148, %v1159
        %v1164 = vld [vmem:[%s336] sm:$0xf]
        %v1165 = vpack.c.bf16 %v1162, %v1162
        %v1166 = vpack.c.bf16 %v1163, %v1163
        %v1168 = vsel %vm340, %v1164, 0
        %v1171 = vsel %vm344, %v1165, 0
        %v1174 = vsel %vm344, %v1166, 0
        %1176 = vmatprep.subr.bf16.mxu0 %v1174
        %1177 = vmatpush1.bf16.msra.mxu0 %v1171
        %1178 = vmatprep.subr.bf16.mxu0 0
        %1179 = vmatpush1.bf16.msra.mxu0 0
        %1180 = vmatprep.subr.bf16.mxu0 0
        %1181 = vmatpush1.bf16.msra.mxu0 0
        %1182 = vmatprep.subr.bf16.mxu0 0
        %1183 = vmatpush1.bf16.msra.mxu0 0
        %1184 = vmatprep.subr.bf16.mxu0 0
        %1185 = vmatpush1.bf16.msra.mxu0 0
        %1186 = vmatprep.subr.bf16.mxu0 0
        %1187 = vmatpush1.bf16.msra.mxu0 0
        %1188 = vmatprep.subr.bf16.mxu0 0
        %1189 = vmatpush1.bf16.msra.mxu0 0
        %1190 = vmatprep.subr.bf16.mxu0 0
        %1191 = vmatpush1.bf16.msra.mxu0 0
        %1192 = vmatprep.subr.bf16.mxu0 0
        %1193 = vmatpush1.bf16.msra.mxu0 0
        %1194 = vmatprep.subr.bf16.mxu0 0
        %1195 = vmatpush1.bf16.msra.mxu0 0
        %1196 = vmatprep.subr.bf16.mxu0 0
        %1197 = vmatpush1.bf16.msra.mxu0 0
        %1198 = vmatprep.subr.bf16.mxu0 0
        %1199 = vmatpush1.bf16.msra.mxu0 0
        %1200 = vmatprep.subr.bf16.mxu0 0
        %1201 = vmatpush1.bf16.msra.mxu0 0
        %1202 = vmatprep.subr.bf16.mxu0 0
        %1203 = vmatpush1.bf16.msra.mxu0 0
        %1204 = vmatprep.subr.bf16.mxu0 0
        %1205 = vmatpush1.bf16.msra.mxu0 0
        %1206 = vmatprep.subr.bf16.mxu0 0
        %1207 = vmatpush1.bf16.msra.mxu0 0
        %1208 = vmatprep.mubr.bf16.mxu0 0
        %1209 = vmatmul.mubr.bf16.gmra.mrb[0].mxu0 %v1168
        %v1210 = vpop.f32.mrb[0].mxu0
        %v1211 = vadd.f32 0.0, %v1210
        %v1212 = vpop.f32.mrb[0].mxu0
        %v1213 = vadd.f32 0.0, %v1212
        %v1214 = vpop.f32.mrb[0].mxu0
        %v1215 = vpop.f32.mrb[0].mxu0
        %1216 = vdwg.mxu0
        %v1218 = vsel %vm340, %v1141, 0
        %v1221 = vsel %vm344, %v1142, 0
        %v1224 = vsel %vm344, %v1143, 0
        %1226 = vmatprep.subr.bf16.mxu0 %v1224
        %1227 = vmatpush1.bf16.msra.mxu0 %v1221
        %1228 = vmatprep.subr.bf16.mxu0 0
        %1229 = vmatpush1.bf16.msra.mxu0 0
        %1230 = vmatprep.subr.bf16.mxu0 0
        %1231 = vmatpush1.bf16.msra.mxu0 0
        %1232 = vmatprep.subr.bf16.mxu0 0
        %1233 = vmatpush1.bf16.msra.mxu0 0
        %1234 = vmatprep.subr.bf16.mxu0 0
        %1235 = vmatpush1.bf16.msra.mxu0 0
        %1236 = vmatprep.subr.bf16.mxu0 0
        %1237 = vmatpush1.bf16.msra.mxu0 0
        %1238 = vmatprep.subr.bf16.mxu0 0
        %1239 = vmatpush1.bf16.msra.mxu0 0
        %1240 = vmatprep.subr.bf16.mxu0 0
        %1241 = vmatpush1.bf16.msra.mxu0 0
        %1242 = vmatprep.subr.bf16.mxu0 0
        %1243 = vmatpush1.bf16.msra.mxu0 0
        %1244 = vmatprep.subr.bf16.mxu0 0
        %1245 = vmatpush1.bf16.msra.mxu0 0
        %1246 = vmatprep.subr.bf16.mxu0 0
        %1247 = vmatpush1.bf16.msra.mxu0 0
        %1248 = vmatprep.subr.bf16.mxu0 0
        %1249 = vmatpush1.bf16.msra.mxu0 0
        %1250 = vmatprep.subr.bf16.mxu0 0
        %1251 = vmatpush1.bf16.msra.mxu0 0
        %1252 = vmatprep.subr.bf16.mxu0 0
        %1253 = vmatpush1.bf16.msra.mxu0 0
        %1254 = vmatprep.subr.bf16.mxu0 0
        %1255 = vmatpush1.bf16.msra.mxu0 0
        %1256 = vmatprep.subr.bf16.mxu0 0
        %1257 = vmatpush1.bf16.msra.mxu0 0
        %1258 = vmatprep.mubr.bf16.mxu0 0
        %1259 = vmatmul.mubr.bf16.gmra.mrb[0].mxu0 %v1218
        %v1260 = vpop.f32.mrb[0].mxu0
        %v1261 = vadd.f32 %v1211, %v1260
        %v1262 = vpop.f32.mrb[0].mxu0
        %v1263 = vadd.f32 %v1213, %v1262
        %v1264 = vpop.f32.mrb[0].mxu0
        %v1265 = vpop.f32.mrb[0].mxu0
        %1266 = vdwg.mxu0
        %1267 = vrot.lane.b32.xlu0 %v1117, 15
        %v1268 = vpop.permute.xlu0 %1267
        %1269 = vrot.lane.b32.xlu0 %v1119, 15
        %v1270 = vpop.permute.xlu0 %1269
        %v1271 = vsel %vm446, %v1268, %v1270
        %v1272 = vsel %vm446, %v1270, %v1268
        %v1273 = vld [vmem:[%s449] ss:$8 sm:$0x3]
        %v1275 = vlaneseq
        %v1276 = vshrl.u32 %v1275, 7
        %v1277 = vsub.s32 0, %v1276
        %v1278 = vrot.slane %v1273, %v1277
        %v1279 = vlaneseq
        %v1280 = vshrl.u32 %v1279, 7
        %v1281 = vsub.s32 1, %v1280
        %v1282 = vrot.slane %v1273, %v1281
        %v1285 = vmul.f32 %v1272, %v1278
        %v1286 = vmul.f32 %v1271, %v1282
        %v1287 = vld [vmem:[%s464] sm:$0xf]
        %v1288 = vpack.c.bf16 %v1285, %v1285
        %v1289 = vpack.c.bf16 %v1286, %v1286
        %v1291 = vsel %vm340, %v1287, 0
        %v1294 = vsel %vm344, %v1288, 0
        %v1297 = vsel %vm344, %v1289, 0
        %1299 = vmatprep.subr.bf16.mxu0 %v1297
        %1300 = vmatpush1.bf16.msra.mxu0 %v1294
        %1301 = vmatprep.subr.bf16.mxu0 0
        %1302 = vmatpush1.bf16.msra.mxu0 0
        %1303 = vmatprep.subr.bf16.mxu0 0
        %1304 = vmatpush1.bf16.msra.mxu0 0
        %1305 = vmatprep.subr.bf16.mxu0 0
        %1306 = vmatpush1.bf16.msra.mxu0 0
        %1307 = vmatprep.subr.bf16.mxu0 0
        %1308 = vmatpush1.bf16.msra.mxu0 0
        %1309 = vmatprep.subr.bf16.mxu0 0
        %1310 = vmatpush1.bf16.msra.mxu0 0
        %1311 = vmatprep.subr.bf16.mxu0 0
        %1312 = vmatpush1.bf16.msra.mxu0 0
        %1313 = vmatprep.subr.bf16.mxu0 0
        %1314 = vmatpush1.bf16.msra.mxu0 0
        %1315 = vmatprep.subr.bf16.mxu0 0
        %1316 = vmatpush1.bf16.msra.mxu0 0
        %1317 = vmatprep.subr.bf16.mxu0 0
        %1318 = vmatpush1.bf16.msra.mxu0 0
        %1319 = vmatprep.subr.bf16.mxu0 0
        %1320 = vmatpush1.bf16.msra.mxu0 0
        %1321 = vmatprep.subr.bf16.mxu0 0
        %1322 = vmatpush1.bf16.msra.mxu0 0
        %1323 = vmatprep.subr.bf16.mxu0 0
        %1324 = vmatpush1.bf16.msra.mxu0 0
        %1325 = vmatprep.subr.bf16.mxu0 0
        %1326 = vmatpush1.bf16.msra.mxu0 0
        %1327 = vmatprep.subr.bf16.mxu0 0
        %1328 = vmatpush1.bf16.msra.mxu0 0
        %1329 = vmatprep.subr.bf16.mxu0 0
        %1330 = vmatpush1.bf16.msra.mxu0 0
        %1331 = vmatprep.mubr.bf16.mxu0 0
        %1332 = vmatmul.mubr.bf16.gmra.mrb[0].mxu0 %v1291
        %v1333 = vpop.f32.mrb[0].mxu0
        %v1334 = vadd.f32 0.0, %v1333
        %v1335 = vpop.f32.mrb[0].mxu0
        %v1336 = vadd.f32 0.0, %v1335
        %v1337 = vpop.f32.mrb[0].mxu0
        %v1338 = vpop.f32.mrb[0].mxu0
        %1339 = vdwg.mxu0
        %v1340 = vadd.f32 %v1261, %v1334
        %v1341 = vadd.f32 %v1263, %v1336
        %1342 = vrot.lane.b32.xlu0 %v1117, 1
        %v1343 = vpop.permute.xlu0 %1342
        %1344 = vrot.lane.b32.xlu0 %v1119, 1
        %v1345 = vpop.permute.xlu0 %1344
        %v1346 = vsel %vm524, %v1343, %v1345
        %v1347 = vsel %vm524, %v1345, %v1343
        %v1348 = vld [vmem:[%s527] ss:$8 sm:$0x3]
        %v1350 = vlaneseq
        %v1351 = vshrl.u32 %v1350, 7
        %v1352 = vsub.s32 0, %v1351
        %v1353 = vrot.slane %v1348, %v1352
        %v1354 = vlaneseq
        %v1355 = vshrl.u32 %v1354, 7
        %v1356 = vsub.s32 1, %v1355
        %v1357 = vrot.slane %v1348, %v1356
        %v1360 = vmul.f32 %v1347, %v1353
        %v1361 = vmul.f32 %v1346, %v1357
        %v1362 = vld [vmem:[%s542] sm:$0xf]
        %v1363 = vpack.c.bf16 %v1360, %v1360
        %v1364 = vpack.c.bf16 %v1361, %v1361
        %v1366 = vsel %vm340, %v1362, 0
        %v1369 = vsel %vm344, %v1363, 0
        %v1372 = vsel %vm344, %v1364, 0
        %1374 = vmatprep.subr.bf16.mxu0 %v1372
        %1375 = vmatpush1.bf16.msra.mxu0 %v1369
        %1376 = vmatprep.subr.bf16.mxu0 0
        %1377 = vmatpush1.bf16.msra.mxu0 0
        %1378 = vmatprep.subr.bf16.mxu0 0
        %1379 = vmatpush1.bf16.msra.mxu0 0
        %1380 = vmatprep.subr.bf16.mxu0 0
        %1381 = vmatpush1.bf16.msra.mxu0 0
        %1382 = vmatprep.subr.bf16.mxu0 0
        %1383 = vmatpush1.bf16.msra.mxu0 0
        %1384 = vmatprep.subr.bf16.mxu0 0
        %1385 = vmatpush1.bf16.msra.mxu0 0
        %1386 = vmatprep.subr.bf16.mxu0 0
        %1387 = vmatpush1.bf16.msra.mxu0 0
        %1388 = vmatprep.subr.bf16.mxu0 0
        %1389 = vmatpush1.bf16.msra.mxu0 0
        %1390 = vmatprep.subr.bf16.mxu0 0
        %1391 = vmatpush1.bf16.msra.mxu0 0
        %1392 = vmatprep.subr.bf16.mxu0 0
        %1393 = vmatpush1.bf16.msra.mxu0 0
        %1394 = vmatprep.subr.bf16.mxu0 0
        %1395 = vmatpush1.bf16.msra.mxu0 0
        %1396 = vmatprep.subr.bf16.mxu0 0
        %1397 = vmatpush1.bf16.msra.mxu0 0
        %1398 = vmatprep.subr.bf16.mxu0 0
        %1399 = vmatpush1.bf16.msra.mxu0 0
        %1400 = vmatprep.subr.bf16.mxu0 0
        %1401 = vmatpush1.bf16.msra.mxu0 0
        %1402 = vmatprep.subr.bf16.mxu0 0
        %1403 = vmatpush1.bf16.msra.mxu0 0
        %1404 = vmatprep.subr.bf16.mxu0 0
        %1405 = vmatpush1.bf16.msra.mxu0 0
        %1406 = vmatprep.mubr.bf16.mxu0 0
        %1407 = vmatmul.mubr.bf16.gmra.mrb[0].mxu0 %v1366
        %v1408 = vpop.f32.mrb[0].mxu0
        %v1409 = vadd.f32 0.0, %v1408
        %v1410 = vpop.f32.mrb[0].mxu0
        %v1411 = vadd.f32 0.0, %v1410
        %v1412 = vpop.f32.mrb[0].mxu0
        %v1413 = vpop.f32.mrb[0].mxu0
        %1414 = vdwg.mxu0
        %v1415 = vadd.f32 %v1340, %v1409
        %v1416 = vadd.f32 %v1341, %v1411
        %v1417 = vld [vmem:[%s598] sm:$0xf]
        %v1418 = vpack.c.bf16 %v1117, %v1117
        %v1419 = vpack.c.bf16 %v1119, %v1119
        %v1421 = vsel %vm340, %v1417, 0
        %v1424 = vsel %vm344, %v1418, 0
        %v1427 = vsel %vm344, %v1419, 0
        %1429 = vmatprep.subr.bf16.mxu0 %v1427
        %1430 = vmatpush1.bf16.msra.mxu0 %v1424
        %1431 = vmatprep.subr.bf16.mxu0 0
        %1432 = vmatpush1.bf16.msra.mxu0 0
        %1433 = vmatprep.subr.bf16.mxu0 0
        %1434 = vmatpush1.bf16.msra.mxu0 0
        %1435 = vmatprep.subr.bf16.mxu0 0
        %1436 = vmatpush1.bf16.msra.mxu0 0
        %1437 = vmatprep.subr.bf16.mxu0 0
        %1438 = vmatpush1.bf16.msra.mxu0 0
        %1439 = vmatprep.subr.bf16.mxu0 0
        %1440 = vmatpush1.bf16.msra.mxu0 0
        %1441 = vmatprep.subr.bf16.mxu0 0
        %1442 = vmatpush1.bf16.msra.mxu0 0
        %1443 = vmatprep.subr.bf16.mxu0 0
        %1444 = vmatpush1.bf16.msra.mxu0 0
        %1445 = vmatprep.subr.bf16.mxu0 0
        %1446 = vmatpush1.bf16.msra.mxu0 0
        %1447 = vmatprep.subr.bf16.mxu0 0
        %1448 = vmatpush1.bf16.msra.mxu0 0
        %1449 = vmatprep.subr.bf16.mxu0 0
        %1450 = vmatpush1.bf16.msra.mxu0 0
        %1451 = vmatprep.subr.bf16.mxu0 0
        %1452 = vmatpush1.bf16.msra.mxu0 0
        %1453 = vmatprep.subr.bf16.mxu0 0
        %1454 = vmatpush1.bf16.msra.mxu0 0
        %1455 = vmatprep.subr.bf16.mxu0 0
        %1456 = vmatpush1.bf16.msra.mxu0 0
        %1457 = vmatprep.subr.bf16.mxu0 0
        %1458 = vmatpush1.bf16.msra.mxu0 0
        %1459 = vmatprep.subr.bf16.mxu0 0
        %1460 = vmatpush1.bf16.msra.mxu0 0
        %1461 = vmatprep.mubr.bf16.mxu0 0
        %1462 = vmatmul.mubr.bf16.gmra.mrb[0].mxu0 %v1421
        %v1463 = vpop.f32.mrb[0].mxu0
        %v1464 = vadd.f32 0.0, %v1463
        %v1465 = vpop.f32.mrb[0].mxu0
        %v1466 = vadd.f32 0.0, %v1465
        %v1467 = vpop.f32.mrb[0].mxu0
        %v1468 = vpop.f32.mrb[0].mxu0
        %1469 = vdwg.mxu0
        %v1470 = vadd.f32 %v1415, %v1464
        %v1471 = vadd.f32 %v1416, %v1466
        %1472 = vrot.lane.b32.xlu0 %v1117, 127
        %v1473 = vpop.permute.xlu0 %1472
        %1474 = vrot.lane.b32.xlu0 %v1119, 127
        %v1475 = vpop.permute.xlu0 %1474
        %v1476 = vsel %vm658, %v1473, %v1475
        %v1477 = vsel %vm658, %v1475, %v1473
        %v1478 = vld [vmem:[%s661] ss:$8 sm:$0x3]
        %v1480 = vlaneseq
        %v1481 = vshrl.u32 %v1480, 7
        %v1482 = vsub.s32 0, %v1481
        %v1483 = vrot.slane %v1478, %v1482
        %v1484 = vlaneseq
        %v1485 = vshrl.u32 %v1484, 7
        %v1486 = vsub.s32 1, %v1485
        %v1487 = vrot.slane %v1478, %v1486
        %v1490 = vmul.f32 %v1476, %v1483
        %v1491 = vmul.f32 %v1477, %v1487
        %v1492 = vld [vmem:[%s676] sm:$0xf]
        %v1493 = vpack.c.bf16 %v1490, %v1490
        %v1494 = vpack.c.bf16 %v1491, %v1491
        %v1496 = vsel %vm340, %v1492, 0
        %v1499 = vsel %vm344, %v1493, 0
        %v1502 = vsel %vm344, %v1494, 0
        %1504 = vmatprep.subr.bf16.mxu0 %v1502
        %1505 = vmatpush1.bf16.msra.mxu0 %v1499
        %1506 = vmatprep.subr.bf16.mxu0 0
        %1507 = vmatpush1.bf16.msra.mxu0 0
        %1508 = vmatprep.subr.bf16.mxu0 0
        %1509 = vmatpush1.bf16.msra.mxu0 0
        %1510 = vmatprep.subr.bf16.mxu0 0
        %1511 = vmatpush1.bf16.msra.mxu0 0
        %1512 = vmatprep.subr.bf16.mxu0 0
        %1513 = vmatpush1.bf16.msra.mxu0 0
        %1514 = vmatprep.subr.bf16.mxu0 0
        %1515 = vmatpush1.bf16.msra.mxu0 0
        %1516 = vmatprep.subr.bf16.mxu0 0
        %1517 = vmatpush1.bf16.msra.mxu0 0
        %1518 = vmatprep.subr.bf16.mxu0 0
        %1519 = vmatpush1.bf16.msra.mxu0 0
        %1520 = vmatprep.subr.bf16.mxu0 0
        %1521 = vmatpush1.bf16.msra.mxu0 0
        %1522 = vmatprep.subr.bf16.mxu0 0
        %1523 = vmatpush1.bf16.msra.mxu0 0
        %1524 = vmatprep.subr.bf16.mxu0 0
        %1525 = vmatpush1.bf16.msra.mxu0 0
        %1526 = vmatprep.subr.bf16.mxu0 0
        %1527 = vmatpush1.bf16.msra.mxu0 0
        %1528 = vmatprep.subr.bf16.mxu0 0
        %1529 = vmatpush1.bf16.msra.mxu0 0
        %1530 = vmatprep.subr.bf16.mxu0 0
        %1531 = vmatpush1.bf16.msra.mxu0 0
        %1532 = vmatprep.subr.bf16.mxu0 0
        %1533 = vmatpush1.bf16.msra.mxu0 0
        %1534 = vmatprep.subr.bf16.mxu0 0
        %1535 = vmatpush1.bf16.msra.mxu0 0
        %1536 = vmatprep.mubr.bf16.mxu0 0
        %1537 = vmatmul.mubr.bf16.gmra.mrb[0].mxu0 %v1496
        %v1538 = vpop.f32.mrb[0].mxu0
        %v1539 = vadd.f32 0.0, %v1538
        %v1540 = vpop.f32.mrb[0].mxu0
        %v1541 = vadd.f32 0.0, %v1540
        %v1542 = vpop.f32.mrb[0].mxu0
        %v1543 = vpop.f32.mrb[0].mxu0
        %1544 = vdwg.mxu0
        %v1545 = vadd.f32 %v1470, %v1539
        %v1546 = vadd.f32 %v1471, %v1541
        %1547 = vrot.lane.b32.xlu0 %v1117, 113
        %v1548 = vpop.permute.xlu0 %1547
        %1549 = vrot.lane.b32.xlu0 %v1119, 113
        %v1550 = vpop.permute.xlu0 %1549
        %v1551 = vsel %vm736, %v1548, %v1550
        %v1552 = vsel %vm736, %v1550, %v1548
        %v1553 = vld [vmem:[%s739] ss:$8 sm:$0x3]
        %v1555 = vlaneseq
        %v1556 = vshrl.u32 %v1555, 7
        %v1557 = vsub.s32 0, %v1556
        %v1558 = vrot.slane %v1553, %v1557
        %v1559 = vlaneseq
        %v1560 = vshrl.u32 %v1559, 7
        %v1561 = vsub.s32 1, %v1560
        %v1562 = vrot.slane %v1553, %v1561
        %v1565 = vmul.f32 %v1551, %v1558
        %v1566 = vmul.f32 %v1552, %v1562
        %v1567 = vld [vmem:[%s754] sm:$0xf]
        %v1568 = vpack.c.bf16 %v1565, %v1565
        %v1569 = vpack.c.bf16 %v1566, %v1566
        %v1571 = vsel %vm340, %v1567, 0
        %v1574 = vsel %vm344, %v1568, 0
        %v1577 = vsel %vm344, %v1569, 0
        %1579 = vmatprep.subr.bf16.mxu0 %v1577
        %1580 = vmatpush1.bf16.msra.mxu0 %v1574
        %1581 = vmatprep.subr.bf16.mxu0 0
        %1582 = vmatpush1.bf16.msra.mxu0 0
        %1583 = vmatprep.subr.bf16.mxu0 0
        %1584 = vmatpush1.bf16.msra.mxu0 0
        %1585 = vmatprep.subr.bf16.mxu0 0
        %1586 = vmatpush1.bf16.msra.mxu0 0
        %1587 = vmatprep.subr.bf16.mxu0 0
        %1588 = vmatpush1.bf16.msra.mxu0 0
        %1589 = vmatprep.subr.bf16.mxu0 0
        %1590 = vmatpush1.bf16.msra.mxu0 0
        %1591 = vmatprep.subr.bf16.mxu0 0
        %1592 = vmatpush1.bf16.msra.mxu0 0
        %1593 = vmatprep.subr.bf16.mxu0 0
        %1594 = vmatpush1.bf16.msra.mxu0 0
        %1595 = vmatprep.subr.bf16.mxu0 0
        %1596 = vmatpush1.bf16.msra.mxu0 0
        %1597 = vmatprep.subr.bf16.mxu0 0
        %1598 = vmatpush1.bf16.msra.mxu0 0
        %1599 = vmatprep.subr.bf16.mxu0 0
        %1600 = vmatpush1.bf16.msra.mxu0 0
        %1601 = vmatprep.subr.bf16.mxu0 0
        %1602 = vmatpush1.bf16.msra.mxu0 0
        %1603 = vmatprep.subr.bf16.mxu0 0
        %1604 = vmatpush1.bf16.msra.mxu0 0
        %1605 = vmatprep.subr.bf16.mxu0 0
        %1606 = vmatpush1.bf16.msra.mxu0 0
        %1607 = vmatprep.subr.bf16.mxu0 0
        %1608 = vmatpush1.bf16.msra.mxu0 0
        %1609 = vmatprep.subr.bf16.mxu0 0
        %1610 = vmatpush1.bf16.msra.mxu0 0
        %1611 = vmatprep.mubr.bf16.mxu0 0
        %1612 = vmatmul.mubr.bf16.gmra.mrb[0].mxu0 %v1571
        %v1613 = vpop.f32.mrb[0].mxu0
        %v1614 = vadd.f32 0.0, %v1613
        %v1615 = vpop.f32.mrb[0].mxu0
        %v1616 = vadd.f32 0.0, %v1615
        %v1617 = vpop.f32.mrb[0].mxu0
        %v1618 = vpop.f32.mrb[0].mxu0
        %1619 = vdwg.mxu0
        %v1620 = vadd.f32 %v1545, %v1614
        %v1621 = vadd.f32 %v1546, %v1616
        %1622 = vrot.lane.b32.xlu0 %v1117, 112
        %v1623 = vpop.permute.xlu0 %1622
        %1624 = vrot.lane.b32.xlu0 %v1119, 112
        %v1625 = vpop.permute.xlu0 %1624
        %v1626 = vsel %vm814, %v1623, %v1625
        %v1627 = vsel %vm814, %v1625, %v1623
        %v1628 = vld [vmem:[%s817] ss:$8 sm:$0x3]
        %v1630 = vlaneseq
        %v1631 = vshrl.u32 %v1630, 7
        %v1632 = vsub.s32 0, %v1631
        %v1633 = vrot.slane %v1628, %v1632
        %v1634 = vlaneseq
        %v1635 = vshrl.u32 %v1634, 7
        %v1636 = vsub.s32 1, %v1635
        %v1637 = vrot.slane %v1628, %v1636
        %v1640 = vmul.f32 %v1626, %v1633
        %v1641 = vmul.f32 %v1627, %v1637
        %v1642 = vld [vmem:[%s832] sm:$0xf]
        %v1643 = vpack.c.bf16 %v1640, %v1640
        %v1644 = vpack.c.bf16 %v1641, %v1641
        %v1646 = vsel %vm340, %v1642, 0
        %v1649 = vsel %vm344, %v1643, 0
        %v1652 = vsel %vm344, %v1644, 0
        %1654 = vmatprep.subr.bf16.mxu0 %v1652
        %1655 = vmatpush1.bf16.msra.mxu0 %v1649
        %1656 = vmatprep.subr.bf16.mxu0 0
        %1657 = vmatpush1.bf16.msra.mxu0 0
        %1658 = vmatprep.subr.bf16.mxu0 0
        %1659 = vmatpush1.bf16.msra.mxu0 0
        %1660 = vmatprep.subr.bf16.mxu0 0
        %1661 = vmatpush1.bf16.msra.mxu0 0
        %1662 = vmatprep.subr.bf16.mxu0 0
        %1663 = vmatpush1.bf16.msra.mxu0 0
        %1664 = vmatprep.subr.bf16.mxu0 0
        %1665 = vmatpush1.bf16.msra.mxu0 0
        %1666 = vmatprep.subr.bf16.mxu0 0
        %1667 = vmatpush1.bf16.msra.mxu0 0
        %1668 = vmatprep.subr.bf16.mxu0 0
        %1669 = vmatpush1.bf16.msra.mxu0 0
        %1670 = vmatprep.subr.bf16.mxu0 0
        %1671 = vmatpush1.bf16.msra.mxu0 0
        %1672 = vmatprep.subr.bf16.mxu0 0
        %1673 = vmatpush1.bf16.msra.mxu0 0
        %1674 = vmatprep.subr.bf16.mxu0 0
        %1675 = vmatpush1.bf16.msra.mxu0 0
        %1676 = vmatprep.subr.bf16.mxu0 0
        %1677 = vmatpush1.bf16.msra.mxu0 0
        %1678 = vmatprep.subr.bf16.mxu0 0
        %1679 = vmatpush1.bf16.msra.mxu0 0
        %1680 = vmatprep.subr.bf16.mxu0 0
        %1681 = vmatpush1.bf16.msra.mxu0 0
        %1682 = vmatprep.subr.bf16.mxu0 0
        %1683 = vmatpush1.bf16.msra.mxu0 0
        %1684 = vmatprep.subr.bf16.mxu0 0
        %1685 = vmatpush1.bf16.msra.mxu0 0
        %1686 = vmatprep.mubr.bf16.mxu0 0
        %1687 = vmatmul.mubr.bf16.gmra.mrb[0].mxu0 %v1646
        %v1688 = vpop.f32.mrb[0].mxu0
        %v1689 = vadd.f32 0.0, %v1688
        %v1690 = vpop.f32.mrb[0].mxu0
        %v1691 = vadd.f32 0.0, %v1690
        %v1692 = vpop.f32.mrb[0].mxu0
        %v1693 = vpop.f32.mrb[0].mxu0
        %1694 = vdwg.mxu0
        %v1695 = vadd.f32 %v1620, %v1689
        %v1696 = vadd.f32 %v1621, %v1691
        %1697 = vrot.lane.b32.xlu0 %v1117, 111
        %v1698 = vpop.permute.xlu0 %1697
        %1699 = vrot.lane.b32.xlu0 %v1119, 111
        %v1700 = vpop.permute.xlu0 %1699
        %v1701 = vsel %vm892, %v1698, %v1700
        %v1702 = vsel %vm892, %v1700, %v1698
        %v1703 = vld [vmem:[%s895] ss:$8 sm:$0x3]
        %v1705 = vlaneseq
        %v1706 = vshrl.u32 %v1705, 7
        %v1707 = vsub.s32 0, %v1706
        %v1708 = vrot.slane %v1703, %v1707
        %v1709 = vlaneseq
        %v1710 = vshrl.u32 %v1709, 7
        %v1711 = vsub.s32 1, %v1710
        %v1712 = vrot.slane %v1703, %v1711
        %v1715 = vmul.f32 %v1701, %v1708
        %v1716 = vmul.f32 %v1702, %v1712
        %v1717 = vld [vmem:[%s910] sm:$0xf]
        %v1718 = vpack.c.bf16 %v1715, %v1715
        %v1719 = vpack.c.bf16 %v1716, %v1716
        %v1721 = vsel %vm340, %v1717, 0
        %v1724 = vsel %vm344, %v1718, 0
        %v1727 = vsel %vm344, %v1719, 0
        %1729 = vmatprep.subr.bf16.mxu0 %v1727
        %1730 = vmatpush1.bf16.msra.mxu0 %v1724
        %1731 = vmatprep.subr.bf16.mxu0 0
        %1732 = vmatpush1.bf16.msra.mxu0 0
        %1733 = vmatprep.subr.bf16.mxu0 0
        %1734 = vmatpush1.bf16.msra.mxu0 0
        %1735 = vmatprep.subr.bf16.mxu0 0
        %1736 = vmatpush1.bf16.msra.mxu0 0
        %1737 = vmatprep.subr.bf16.mxu0 0
        %1738 = vmatpush1.bf16.msra.mxu0 0
        %1739 = vmatprep.subr.bf16.mxu0 0
        %1740 = vmatpush1.bf16.msra.mxu0 0
        %1741 = vmatprep.subr.bf16.mxu0 0
        %1742 = vmatpush1.bf16.msra.mxu0 0
        %1743 = vmatprep.subr.bf16.mxu0 0
        %1744 = vmatpush1.bf16.msra.mxu0 0
        %1745 = vmatprep.subr.bf16.mxu0 0
        %1746 = vmatpush1.bf16.msra.mxu0 0
        %1747 = vmatprep.subr.bf16.mxu0 0
        %1748 = vmatpush1.bf16.msra.mxu0 0
        %1749 = vmatprep.subr.bf16.mxu0 0
        %1750 = vmatpush1.bf16.msra.mxu0 0
        %1751 = vmatprep.subr.bf16.mxu0 0
        %1752 = vmatpush1.bf16.msra.mxu0 0
        %1753 = vmatprep.subr.bf16.mxu0 0
        %1754 = vmatpush1.bf16.msra.mxu0 0
        %1755 = vmatprep.subr.bf16.mxu0 0
        %1756 = vmatpush1.bf16.msra.mxu0 0
        %1757 = vmatprep.subr.bf16.mxu0 0
        %1758 = vmatpush1.bf16.msra.mxu0 0
        %1759 = vmatprep.subr.bf16.mxu0 0
        %1760 = vmatpush1.bf16.msra.mxu0 0
        %1761 = vmatprep.mubr.bf16.mxu0 0
        %1762 = vmatmul.mubr.bf16.gmra.mrb[0].mxu0 %v1721
        %v1763 = vpop.f32.mrb[0].mxu0
        %v1764 = vadd.f32 0.0, %v1763
        %v1765 = vpop.f32.mrb[0].mxu0
        %v1766 = vadd.f32 0.0, %v1765
        %v1767 = vpop.f32.mrb[0].mxu0
        %v1768 = vpop.f32.mrb[0].mxu0
        %1769 = vdwg.mxu0
        %v1770 = vadd.f32 %v1695, %v1764
        %v1771 = vadd.f32 %v1696, %v1766
        %v1772 = vld [vmem:[%s3] sm:$0xff]
        %1774 = vset.pattern.permute.xlu0 0
        %1775 = vperm.xlu0 %1774, %v1772
        %v1776 = vpop.permute.xlu0 %1775
        %v1778 = vadd.f32 %v1770, %v1776
        %v1779 = vadd.f32 %v1771, %v1776
        %v1780 = vmax.f32 %v1778, 0.0
        %v1781 = vmax.f32 %v1779, 0.0
        %v1782 = vld [vmem:[%s4] sm:$0xf]
        %v1783 = vld [vmem:[%s4 + $0x4] sm:$0xf]
        %v1784 = vpack.c.bf16 %v1780, %v1780
        %v1785 = vpack.c.bf16 %v1781, %v1781
        %v1786 = vld [vmem:[%s5] sm:$0xf]
        %v1787 = vld [vmem:[%s5 + $0x4] sm:$0xf]
        %v1790 = vunpack.c.l.b16 %v1786
        %v1791 = vunpack.c.l.b16 %v1787
        %v1792 = vpack.c.b16 %v1791, %v1790
        %v1794 = vsel %vm340, %v1792, 0
        %1796 = vmatprep.subr.bf16.mxu0 %v1427
        %1797 = vmatpush1.bf16.msra.mxu0 %v1424
        %1798 = vmatprep.subr.bf16.mxu0 0
        %1799 = vmatpush1.bf16.msra.mxu0 0
        %1800 = vmatprep.subr.bf16.mxu0 0
        %1801 = vmatpush1.bf16.msra.mxu0 0
        %1802 = vmatprep.subr.bf16.mxu0 0
        %1803 = vmatpush1.bf16.msra.mxu0 0
        %1804 = vmatprep.subr.bf16.mxu0 0
        %1805 = vmatpush1.bf16.msra.mxu0 0
        %1806 = vmatprep.subr.bf16.mxu0 0
        %1807 = vmatpush1.bf16.msra.mxu0 0
        %1808 = vmatprep.subr.bf16.mxu0 0
        %1809 = vmatpush1.bf16.msra.mxu0 0
        %1810 = vmatprep.subr.bf16.mxu0 0
        %1811 = vmatpush1.bf16.msra.mxu0 0
        %1812 = vmatprep.subr.bf16.mxu0 0
        %1813 = vmatpush1.bf16.msra.mxu0 0
        %1814 = vmatprep.subr.bf16.mxu0 0
        %1815 = vmatpush1.bf16.msra.mxu0 0
        %1816 = vmatprep.subr.bf16.mxu0 0
        %1817 = vmatpush1.bf16.msra.mxu0 0
        %1818 = vmatprep.subr.bf16.mxu0 0
        %1819 = vmatpush1.bf16.msra.mxu0 0
        %1820 = vmatprep.subr.bf16.mxu0 0
        %1821 = vmatpush1.bf16.msra.mxu0 0
        %1822 = vmatprep.subr.bf16.mxu0 0
        %1823 = vmatpush1.bf16.msra.mxu0 0
        %1824 = vmatprep.subr.bf16.mxu0 0
        %1825 = vmatpush1.bf16.msra.mxu0 0
        %1826 = vmatprep.subr.bf16.mxu0 0
        %1827 = vmatpush1.bf16.msra.mxu0 0
        %1828 = vmatprep.mubr.bf16.mxu0 0
        %1829 = vmatmul.mubr.bf16.gmra.mrb[0].mxu0 %v1794
        %v1830 = vpop.f32.mrb[0].mxu0
        %v1831 = vadd.f32 0.0, %v1830
        %v1832 = vpop.f32.mrb[0].mxu0
        %v1833 = vadd.f32 0.0, %v1832
        %v1834 = vpop.f32.mrb[0].mxu0
        %v1835 = vadd.f32 0.0, %v1834
        %v1836 = vpop.f32.mrb[0].mxu0
        %v1837 = vadd.f32 0.0, %v1836
        %1838 = vdwg.mxu0
        %v1841 = vunpack.c.l.b16 %v1782
        %v1842 = vunpack.c.l.b16 %v1783
        %v1843 = vpack.c.b16 %v1842, %v1841
        %v1845 = vsel %vm1038, %v1843, 0
        %v1848 = vsel %vm1042, %v1784, 0
        %v1851 = vsel %vm1042, %v1785, 0
        %1853 = vmatprep.subr.bf16.mxu0 %v1851
        %1854 = vmatpush1.bf16.msra.mxu0 %v1848
        %1855 = vmatprep.subr.bf16.mxu0 0
        %1856 = vmatpush1.bf16.msra.mxu0 0
        %1857 = vmatprep.subr.bf16.mxu0 0
        %1858 = vmatpush1.bf16.msra.mxu0 0
        %1859 = vmatprep.subr.bf16.mxu0 0
        %1860 = vmatpush1.bf16.msra.mxu0 0
        %1861 = vmatprep.subr.bf16.mxu0 0
        %1862 = vmatpush1.bf16.msra.mxu0 0
        %1863 = vmatprep.subr.bf16.mxu0 0
        %1864 = vmatpush1.bf16.msra.mxu0 0
        %1865 = vmatprep.subr.bf16.mxu0 0
        %1866 = vmatpush1.bf16.msra.mxu0 0
        %1867 = vmatprep.subr.bf16.mxu0 0
        %1868 = vmatpush1.bf16.msra.mxu0 0
        %1869 = vmatprep.subr.bf16.mxu0 0
        %1870 = vmatpush1.bf16.msra.mxu0 0
        %1871 = vmatprep.subr.bf16.mxu0 0
        %1872 = vmatpush1.bf16.msra.mxu0 0
        %1873 = vmatprep.subr.bf16.mxu0 0
        %1874 = vmatpush1.bf16.msra.mxu0 0
        %1875 = vmatprep.subr.bf16.mxu0 0
        %1876 = vmatpush1.bf16.msra.mxu0 0
        %1877 = vmatprep.subr.bf16.mxu0 0
        %1878 = vmatpush1.bf16.msra.mxu0 0
        %1879 = vmatprep.subr.bf16.mxu0 0
        %1880 = vmatpush1.bf16.msra.mxu0 0
        %1881 = vmatprep.subr.bf16.mxu0 0
        %1882 = vmatpush1.bf16.msra.mxu0 0
        %1883 = vmatprep.subr.bf16.mxu0 0
        %1884 = vmatpush1.bf16.msra.mxu0 0
        %1885 = vmatprep.mubr.bf16.mxu0 0
        %1886 = vmatmul.mubr.bf16.gmra.mrb[0].mxu0 %v1845
        %v1887 = vpop.f32.mrb[0].mxu0
        %v1888 = vadd.f32 %v1831, %v1887
        %v1889 = vpop.f32.mrb[0].mxu0
        %v1890 = vadd.f32 %v1833, %v1889
        %v1891 = vpop.f32.mrb[0].mxu0
        %v1892 = vadd.f32 %v1835, %v1891
        %v1893 = vpop.f32.mrb[0].mxu0
        %v1894 = vadd.f32 %v1837, %v1893
        %1895 = vdwg.mxu0
        %v1896 = vld [vmem:[%s6] sm:$0xff]
        %v1897 = vld [vmem:[%s6 + $0x8] sm:$0xff]
        %1899 = vset.pattern.permute.xlu0 0
        %1900 = vperm.xlu0 %1899, %v1896
        %v1901 = vpop.permute.xlu0 %1900
        %1904 = vset.pattern.permute.xlu0 0
        %1905 = vperm.xlu0 %1904, %v1897
        %v1906 = vpop.permute.xlu0 %1905
        %v1908 = vadd.f32 %v1888, %v1901
        %v1909 = vadd.f32 %v1890, %v1901
        %v1910 = vadd.f32 %v1892, %v1906
        %v1911 = vadd.f32 %v1894, %v1906
        %v1912 = vmax.f32 %v1908, 0.0
        %v1913 = vmax.f32 %v1909, 0.0
        %v1914 = vmax.f32 %v1910, 0.0
        %v1915 = vmax.f32 %v1911, 0.0
        %s1916 = scalar_lea.vmem %s274, 32 [#allocation2]
        %1917 = vst [vmem:[%s1916] sm:$0xff] %v1912
        %1918 = vst [vmem:[%s1916 + $0x8] sm:$0xff] %v1913
        %1919 = vst [vmem:[%s1916 + $0x10] sm:$0xff] %v1914
        %1920 = vst [vmem:[%s1916 + $0x18] sm:$0xff] %v1915
        %s1921 = scalar_lea.vmem %s280, 16
        %v1922 = vld [vmem:[%s1921] sm:$0xff]
        %v1924 = vcombine.high %v1922, %v1922
        %1926 = vrot.lane.b32.xlu0 %v1922, 17
        %v1927 = vpop.permute.xlu0 %1926
        %1928 = vrot.lane.b32.xlu0 %v1924, 17
        %v1929 = vpop.permute.xlu0 %1928
        %v1930 = vsel %vm294, %v1927, %v1929
        %v1931 = vsel %vm294, %v1929, %v1927
        %v1932 = vld [vmem:[%s1] ss:$8 sm:$0x3]
        %v1934 = vlaneseq
        %v1935 = vshrl.u32 %v1934, 7
        %v1936 = vsub.s32 0, %v1935
        %v1937 = vrot.slane %v1932, %v1936
        %v1938 = vlaneseq
        %v1939 = vshrl.u32 %v1938, 7
        %v1940 = vsub.s32 1, %v1939
        %v1941 = vrot.slane %v1932, %v1940
        %v1944 = vmul.f32 %v1931, %v1937
        %v1945 = vmul.f32 %v1930, %v1941
        %v1946 = vld [vmem:[%s2] sm:$0xf]
        %v1947 = vpack.c.bf16 %v1944, %v1944
        %v1948 = vpack.c.bf16 %v1945, %v1945
        %1949 = vrot.lane.b32.xlu0 %v1922, 16
        %v1950 = vpop.permute.xlu0 %1949
        %1951 = vrot.lane.b32.xlu0 %v1924, 16
        %v1952 = vpop.permute.xlu0 %1951
        %v1953 = vsel %vm318, %v1950, %v1952
        %v1954 = vsel %vm318, %v1952, %v1950
        %v1955 = vld [vmem:[%s321] ss:$8 sm:$0x3]
        %v1957 = vlaneseq
        %v1958 = vshrl.u32 %v1957, 7
        %v1959 = vsub.s32 0, %v1958
        %v1960 = vrot.slane %v1955, %v1959
        %v1961 = vlaneseq
        %v1962 = vshrl.u32 %v1961, 7
        %v1963 = vsub.s32 1, %v1962
        %v1964 = vrot.slane %v1955, %v1963
        %v1967 = vmul.f32 %v1954, %v1960
        %v1968 = vmul.f32 %v1953, %v1964
        %v1969 = vld [vmem:[%s336] sm:$0xf]
        %v1970 = vpack.c.bf16 %v1967, %v1967
        %v1971 = vpack.c.bf16 %v1968, %v1968
        %v1973 = vsel %vm340, %v1969, 0
        %v1976 = vsel %vm344, %v1970, 0
        %v1979 = vsel %vm344, %v1971, 0
        %1981 = vmatprep.subr.bf16.mxu0 %v1979
        %1982 = vmatpush1.bf16.msra.mxu0 %v1976
        %1983 = vmatprep.subr.bf16.mxu0 0
        %1984 = vmatpush1.bf16.msra.mxu0 0
        %1985 = vmatprep.subr.bf16.mxu0 0
        %1986 = vmatpush1.bf16.msra.mxu0 0
        %1987 = vmatprep.subr.bf16.mxu0 0
        %1988 = vmatpush1.bf16.msra.mxu0 0
        %1989 = vmatprep.subr.bf16.mxu0 0
        %1990 = vmatpush1.bf16.msra.mxu0 0
        %1991 = vmatprep.subr.bf16.mxu0 0
        %1992 = vmatpush1.bf16.msra.mxu0 0
        %1993 = vmatprep.subr.bf16.mxu0 0
        %1994 = vmatpush1.bf16.msra.mxu0 0
        %1995 = vmatprep.subr.bf16.mxu0 0
        %1996 = vmatpush1.bf16.msra.mxu0 0
        %1997 = vmatprep.subr.bf16.mxu0 0
        %1998 = vmatpush1.bf16.msra.mxu0 0
        %1999 = vmatprep.subr.bf16.mxu0 0
        %2000 = vmatpush1.bf16.msra.mxu0 0
        %2001 = vmatprep.subr.bf16.mxu0 0
        %2002 = vmatpush1.bf16.msra.mxu0 0
        %2003 = vmatprep.subr.bf16.mxu0 0
        %2004 = vmatpush1.bf16.msra.mxu0 0
        %2005 = vmatprep.subr.bf16.mxu0 0
        %2006 = vmatpush1.bf16.msra.mxu0 0
        %2007 = vmatprep.subr.bf16.mxu0 0
        %2008 = vmatpush1.bf16.msra.mxu0 0
        %2009 = vmatprep.subr.bf16.mxu0 0
        %2010 = vmatpush1.bf16.msra.mxu0 0
        %2011 = vmatprep.subr.bf16.mxu0 0
        %2012 = vmatpush1.bf16.msra.mxu0 0
        %2013 = vmatprep.mubr.bf16.mxu0 0
        %2014 = vmatmul.mubr.bf16.gmra.mrb[0].mxu0 %v1973
        %v2015 = vpop.f32.mrb[0].mxu0
        %v2016 = vadd.f32 0.0, %v2015
        %v2017 = vpop.f32.mrb[0].mxu0
        %v2018 = vadd.f32 0.0, %v2017
        %v2019 = vpop.f32.mrb[0].mxu0
        %v2020 = vpop.f32.mrb[0].mxu0
        %2021 = vdwg.mxu0
        %v2023 = vsel %vm340, %v1946, 0
        %v2026 = vsel %vm344, %v1947, 0
        %v2029 = vsel %vm344, %v1948, 0
        %2031 = vmatprep.subr.bf16.mxu0 %v2029
        %2032 = vmatpush1.bf16.msra.mxu0 %v2026
        %2033 = vmatprep.subr.bf16.mxu0 0
        %2034 = vmatpush1.bf16.msra.mxu0 0
        %2035 = vmatprep.subr.bf16.mxu0 0
        %2036 = vmatpush1.bf16.msra.mxu0 0
        %2037 = vmatprep.subr.bf16.mxu0 0
        %2038 = vmatpush1.bf16.msra.mxu0 0
        %2039 = vmatprep.subr.bf16.mxu0 0
        %2040 = vmatpush1.bf16.msra.mxu0 0
        %2041 = vmatprep.subr.bf16.mxu0 0
        %2042 = vmatpush1.bf16.msra.mxu0 0
        %2043 = vmatprep.subr.bf16.mxu0 0
        %2044 = vmatpush1.bf16.msra.mxu0 0
        %2045 = vmatprep.subr.bf16.mxu0 0
        %2046 = vmatpush1.bf16.msra.mxu0 0
        %2047 = vmatprep.subr.bf16.mxu0 0
        %2048 = vmatpush1.bf16.msra.mxu0 0
        %2049 = vmatprep.subr.bf16.mxu0 0
        %2050 = vmatpush1.bf16.msra.mxu0 0
        %2051 = vmatprep.subr.bf16.mxu0 0
        %2052 = vmatpush1.bf16.msra.mxu0 0
        %2053 = vmatprep.subr.bf16.mxu0 0
        %2054 = vmatpush1.bf16.msra.mxu0 0
        %2055 = vmatprep.subr.bf16.mxu0 0
        %2056 = vmatpush1.bf16.msra.mxu0 0
        %2057 = vmatprep.subr.bf16.mxu0 0
        %2058 = vmatpush1.bf16.msra.mxu0 0
        %2059 = vmatprep.subr.bf16.mxu0 0
        %2060 = vmatpush1.bf16.msra.mxu0 0
        %2061 = vmatprep.subr.bf16.mxu0 0
        %2062 = vmatpush1.bf16.msra.mxu0 0
        %2063 = vmatprep.mubr.bf16.mxu0 0
        %2064 = vmatmul.mubr.bf16.gmra.mrb[0].mxu0 %v2023
        %v2065 = vpop.f32.mrb[0].mxu0
        %v2066 = vadd.f32 %v2016, %v2065
        %v2067 = vpop.f32.mrb[0].mxu0
        %v2068 = vadd.f32 %v2018, %v2067
        %v2069 = vpop.f32.mrb[0].mxu0
        %v2070 = vpop.f32.mrb[0].mxu0
        %2071 = vdwg.mxu0
        %2072 = vrot.lane.b32.xlu0 %v1922, 15
        %v2073 = vpop.permute.xlu0 %2072
        %2074 = vrot.lane.b32.xlu0 %v1924, 15
        %v2075 = vpop.permute.xlu0 %2074
        %v2076 = vsel %vm446, %v2073, %v2075
        %v2077 = vsel %vm446, %v2075, %v2073
        %v2078 = vld [vmem:[%s449] ss:$8 sm:$0x3]
        %v2080 = vlaneseq
        %v2081 = vshrl.u32 %v2080, 7
        %v2082 = vsub.s32 0, %v2081
        %v2083 = vrot.slane %v2078, %v2082
        %v2084 = vlaneseq
        %v2085 = vshrl.u32 %v2084, 7
        %v2086 = vsub.s32 1, %v2085
        %v2087 = vrot.slane %v2078, %v2086
        %v2090 = vmul.f32 %v2077, %v2083
        %v2091 = vmul.f32 %v2076, %v2087
        %v2092 = vld [vmem:[%s464] sm:$0xf]
        %v2093 = vpack.c.bf16 %v2090, %v2090
        %v2094 = vpack.c.bf16 %v2091, %v2091
        %v2096 = vsel %vm340, %v2092, 0
        %v2099 = vsel %vm344, %v2093, 0
        %v2102 = vsel %vm344, %v2094, 0
        %2104 = vmatprep.subr.bf16.mxu0 %v2102
        %2105 = vmatpush1.bf16.msra.mxu0 %v2099
        %2106 = vmatprep.subr.bf16.mxu0 0
        %2107 = vmatpush1.bf16.msra.mxu0 0
        %2108 = vmatprep.subr.bf16.mxu0 0
        %2109 = vmatpush1.bf16.msra.mxu0 0
        %2110 = vmatprep.subr.bf16.mxu0 0
        %2111 = vmatpush1.bf16.msra.mxu0 0
        %2112 = vmatprep.subr.bf16.mxu0 0
        %2113 = vmatpush1.bf16.msra.mxu0 0
        %2114 = vmatprep.subr.bf16.mxu0 0
        %2115 = vmatpush1.bf16.msra.mxu0 0
        %2116 = vmatprep.subr.bf16.mxu0 0
        %2117 = vmatpush1.bf16.msra.mxu0 0
        %2118 = vmatprep.subr.bf16.mxu0 0
        %2119 = vmatpush1.bf16.msra.mxu0 0
        %2120 = vmatprep.subr.bf16.mxu0 0
        %2121 = vmatpush1.bf16.msra.mxu0 0
        %2122 = vmatprep.subr.bf16.mxu0 0
        %2123 = vmatpush1.bf16.msra.mxu0 0
        %2124 = vmatprep.subr.bf16.mxu0 0
        %2125 = vmatpush1.bf16.msra.mxu0 0
        %2126 = vmatprep.subr.bf16.mxu0 0
        %2127 = vmatpush1.bf16.msra.mxu0 0
        %2128 = vmatprep.subr.bf16.mxu0 0
        %2129 = vmatpush1.bf16.msra.mxu0 0
        %2130 = vmatprep.subr.bf16.mxu0 0
        %2131 = vmatpush1.bf16.msra.mxu0 0
        %2132 = vmatprep.subr.bf16.mxu0 0
        %2133 = vmatpush1.bf16.msra.mxu0 0
        %2134 = vmatprep.subr.bf16.mxu0 0
        %2135 = vmatpush1.bf16.msra.mxu0 0
        %2136 = vmatprep.mubr.bf16.mxu0 0
        %2137 = vmatmul.mubr.bf16.gmra.mrb[0].mxu0 %v2096
        %v2138 = vpop.f32.mrb[0].mxu0
        %v2139 = vadd.f32 0.0, %v2138
        %v2140 = vpop.f32.mrb[0].mxu0
        %v2141 = vadd.f32 0.0, %v2140
        %v2142 = vpop.f32.mrb[0].mxu0
        %v2143 = vpop.f32.mrb[0].mxu0
        %2144 = vdwg.mxu0
        %v2145 = vadd.f32 %v2066, %v2139
        %v2146 = vadd.f32 %v2068, %v2141
        %2147 = vrot.lane.b32.xlu0 %v1922, 1
        %v2148 = vpop.permute.xlu0 %2147
        %2149 = vrot.lane.b32.xlu0 %v1924, 1
        %v2150 = vpop.permute.xlu0 %2149
        %v2151 = vsel %vm524, %v2148, %v2150
        %v2152 = vsel %vm524, %v2150, %v2148
        %v2153 = vld [vmem:[%s527] ss:$8 sm:$0x3]
        %v2155 = vlaneseq
        %v2156 = vshrl.u32 %v2155, 7
        %v2157 = vsub.s32 0, %v2156
        %v2158 = vrot.slane %v2153, %v2157
        %v2159 = vlaneseq
        %v2160 = vshrl.u32 %v2159, 7
        %v2161 = vsub.s32 1, %v2160
        %v2162 = vrot.slane %v2153, %v2161
        %v2165 = vmul.f32 %v2152, %v2158
        %v2166 = vmul.f32 %v2151, %v2162
        %v2167 = vld [vmem:[%s542] sm:$0xf]
        %v2168 = vpack.c.bf16 %v2165, %v2165
        %v2169 = vpack.c.bf16 %v2166, %v2166
        %v2171 = vsel %vm340, %v2167, 0
        %v2174 = vsel %vm344, %v2168, 0
        %v2177 = vsel %vm344, %v2169, 0
        %2179 = vmatprep.subr.bf16.mxu0 %v2177
        %2180 = vmatpush1.bf16.msra.mxu0 %v2174
        %2181 = vmatprep.subr.bf16.mxu0 0
        %2182 = vmatpush1.bf16.msra.mxu0 0
        %2183 = vmatprep.subr.bf16.mxu0 0
        %2184 = vmatpush1.bf16.msra.mxu0 0
        %2185 = vmatprep.subr.bf16.mxu0 0
        %2186 = vmatpush1.bf16.msra.mxu0 0
        %2187 = vmatprep.subr.bf16.mxu0 0
        %2188 = vmatpush1.bf16.msra.mxu0 0
        %2189 = vmatprep.subr.bf16.mxu0 0
        %2190 = vmatpush1.bf16.msra.mxu0 0
        %2191 = vmatprep.subr.bf16.mxu0 0
        %2192 = vmatpush1.bf16.msra.mxu0 0
        %2193 = vmatprep.subr.bf16.mxu0 0
        %2194 = vmatpush1.bf16.msra.mxu0 0
        %2195 = vmatprep.subr.bf16.mxu0 0
        %2196 = vmatpush1.bf16.msra.mxu0 0
        %2197 = vmatprep.subr.bf16.mxu0 0
        %2198 = vmatpush1.bf16.msra.mxu0 0
        %2199 = vmatprep.subr.bf16.mxu0 0
        %2200 = vmatpush1.bf16.msra.mxu0 0
        %2201 = vmatprep.subr.bf16.mxu0 0
        %2202 = vmatpush1.bf16.msra.mxu0 0
        %2203 = vmatprep.subr.bf16.mxu0 0
        %2204 = vmatpush1.bf16.msra.mxu0 0
        %2205 = vmatprep.subr.bf16.mxu0 0
        %2206 = vmatpush1.bf16.msra.mxu0 0
        %2207 = vmatprep.subr.bf16.mxu0 0
        %2208 = vmatpush1.bf16.msra.mxu0 0
        %2209 = vmatprep.subr.bf16.mxu0 0
        %2210 = vmatpush1.bf16.msra.mxu0 0
        %2211 = vmatprep.mubr.bf16.mxu0 0
        %2212 = vmatmul.mubr.bf16.gmra.mrb[0].mxu0 %v2171
        %v2213 = vpop.f32.mrb[0].mxu0
        %v2214 = vadd.f32 0.0, %v2213
        %v2215 = vpop.f32.mrb[0].mxu0
        %v2216 = vadd.f32 0.0, %v2215
        %v2217 = vpop.f32.mrb[0].mxu0
        %v2218 = vpop.f32.mrb[0].mxu0
        %2219 = vdwg.mxu0
        %v2220 = vadd.f32 %v2145, %v2214
        %v2221 = vadd.f32 %v2146, %v2216
        %v2222 = vld [vmem:[%s598] sm:$0xf]
        %v2223 = vpack.c.bf16 %v1922, %v1922
        %v2224 = vpack.c.bf16 %v1924, %v1924
        %v2226 = vsel %vm340, %v2222, 0
        %v2229 = vsel %vm344, %v2223, 0
        %v2232 = vsel %vm344, %v2224, 0
        %2234 = vmatprep.subr.bf16.mxu0 %v2232
        %2235 = vmatpush1.bf16.msra.mxu0 %v2229
        %2236 = vmatprep.subr.bf16.mxu0 0
        %2237 = vmatpush1.bf16.msra.mxu0 0
        %2238 = vmatprep.subr.bf16.mxu0 0
        %2239 = vmatpush1.bf16.msra.mxu0 0
        %2240 = vmatprep.subr.bf16.mxu0 0
        %2241 = vmatpush1.bf16.msra.mxu0 0
        %2242 = vmatprep.subr.bf16.mxu0 0
        %2243 = vmatpush1.bf16.msra.mxu0 0
        %2244 = vmatprep.subr.bf16.mxu0 0
        %2245 = vmatpush1.bf16.msra.mxu0 0
        %2246 = vmatprep.subr.bf16.mxu0 0
        %2247 = vmatpush1.bf16.msra.mxu0 0
        %2248 = vmatprep.subr.bf16.mxu0 0
        %2249 = vmatpush1.bf16.msra.mxu0 0
        %2250 = vmatprep.subr.bf16.mxu0 0
        %2251 = vmatpush1.bf16.msra.mxu0 0
        %2252 = vmatprep.subr.bf16.mxu0 0
        %2253 = vmatpush1.bf16.msra.mxu0 0
        %2254 = vmatprep.subr.bf16.mxu0 0
        %2255 = vmatpush1.bf16.msra.mxu0 0
        %2256 = vmatprep.subr.bf16.mxu0 0
        %2257 = vmatpush1.bf16.msra.mxu0 0
        %2258 = vmatprep.subr.bf16.mxu0 0
        %2259 = vmatpush1.bf16.msra.mxu0 0
        %2260 = vmatprep.subr.bf16.mxu0 0
        %2261 = vmatpush1.bf16.msra.mxu0 0
        %2262 = vmatprep.subr.bf16.mxu0 0
        %2263 = vmatpush1.bf16.msra.mxu0 0
        %2264 = vmatprep.subr.bf16.mxu0 0
        %2265 = vmatpush1.bf16.msra.mxu0 0
        %2266 = vmatprep.mubr.bf16.mxu0 0
        %2267 = vmatmul.mubr.bf16.gmra.mrb[0].mxu0 %v2226
        %v2268 = vpop.f32.mrb[0].mxu0
        %v2269 = vadd.f32 0.0, %v2268
        %v2270 = vpop.f32.mrb[0].mxu0
        %v2271 = vadd.f32 0.0, %v2270
        %v2272 = vpop.f32.mrb[0].mxu0
        %v2273 = vpop.f32.mrb[0].mxu0
        %2274 = vdwg.mxu0
        %v2275 = vadd.f32 %v2220, %v2269
        %v2276 = vadd.f32 %v2221, %v2271
        %2277 = vrot.lane.b32.xlu0 %v1922, 127
        %v2278 = vpop.permute.xlu0 %2277
        %2279 = vrot.lane.b32.xlu0 %v1924, 127
        %v2280 = vpop.permute.xlu0 %2279
        %v2281 = vsel %vm658, %v2278, %v2280
        %v2282 = vsel %vm658, %v2280, %v2278
        %v2283 = vld [vmem:[%s661] ss:$8 sm:$0x3]
        %v2285 = vlaneseq
        %v2286 = vshrl.u32 %v2285, 7
        %v2287 = vsub.s32 0, %v2286
        %v2288 = vrot.slane %v2283, %v2287
        %v2289 = vlaneseq
        %v2290 = vshrl.u32 %v2289, 7
        %v2291 = vsub.s32 1, %v2290
        %v2292 = vrot.slane %v2283, %v2291
        %v2295 = vmul.f32 %v2281, %v2288
        %v2296 = vmul.f32 %v2282, %v2292
        %v2297 = vld [vmem:[%s676] sm:$0xf]
        %v2298 = vpack.c.bf16 %v2295, %v2295
        %v2299 = vpack.c.bf16 %v2296, %v2296
        %v2301 = vsel %vm340, %v2297, 0
        %v2304 = vsel %vm344, %v2298, 0
        %v2307 = vsel %vm344, %v2299, 0
        %2309 = vmatprep.subr.bf16.mxu0 %v2307
        %2310 = vmatpush1.bf16.msra.mxu0 %v2304
        %2311 = vmatprep.subr.bf16.mxu0 0
        %2312 = vmatpush1.bf16.msra.mxu0 0
        %2313 = vmatprep.subr.bf16.mxu0 0
        %2314 = vmatpush1.bf16.msra.mxu0 0
        %2315 = vmatprep.subr.bf16.mxu0 0
        %2316 = vmatpush1.bf16.msra.mxu0 0
        %2317 = vmatprep.subr.bf16.mxu0 0
        %2318 = vmatpush1.bf16.msra.mxu0 0
        %2319 = vmatprep.subr.bf16.mxu0 0
        %2320 = vmatpush1.bf16.msra.mxu0 0
        %2321 = vmatprep.subr.bf16.mxu0 0
        %2322 = vmatpush1.bf16.msra.mxu0 0
        %2323 = vmatprep.subr.bf16.mxu0 0
        %2324 = vmatpush1.bf16.msra.mxu0 0
        %2325 = vmatprep.subr.bf16.mxu0 0
        %2326 = vmatpush1.bf16.msra.mxu0 0
        %2327 = vmatprep.subr.bf16.mxu0 0
        %2328 = vmatpush1.bf16.msra.mxu0 0
        %2329 = vmatprep.subr.bf16.mxu0 0
        %2330 = vmatpush1.bf16.msra.mxu0 0
        %2331 = vmatprep.subr.bf16.mxu0 0
        %2332 = vmatpush1.bf16.msra.mxu0 0
        %2333 = vmatprep.subr.bf16.mxu0 0
        %2334 = vmatpush1.bf16.msra.mxu0 0
        %2335 = vmatprep.subr.bf16.mxu0 0
        %2336 = vmatpush1.bf16.msra.mxu0 0
        %2337 = vmatprep.subr.bf16.mxu0 0
        %2338 = vmatpush1.bf16.msra.mxu0 0
        %2339 = vmatprep.subr.bf16.mxu0 0
        %2340 = vmatpush1.bf16.msra.mxu0 0
        %2341 = vmatprep.mubr.bf16.mxu0 0
        %2342 = vmatmul.mubr.bf16.gmra.mrb[0].mxu0 %v2301
        %v2343 = vpop.f32.mrb[0].mxu0
        %v2344 = vadd.f32 0.0, %v2343
        %v2345 = vpop.f32.mrb[0].mxu0
        %v2346 = vadd.f32 0.0, %v2345
        %v2347 = vpop.f32.mrb[0].mxu0
        %v2348 = vpop.f32.mrb[0].mxu0
        %2349 = vdwg.mxu0
        %v2350 = vadd.f32 %v2275, %v2344
        %v2351 = vadd.f32 %v2276, %v2346
        %2352 = vrot.lane.b32.xlu0 %v1922, 113
        %v2353 = vpop.permute.xlu0 %2352
        %2354 = vrot.lane.b32.xlu0 %v1924, 113
        %v2355 = vpop.permute.xlu0 %2354
        %v2356 = vsel %vm736, %v2353, %v2355
        %v2357 = vsel %vm736, %v2355, %v2353
        %v2358 = vld [vmem:[%s739] ss:$8 sm:$0x3]
        %v2360 = vlaneseq
        %v2361 = vshrl.u32 %v2360, 7
        %v2362 = vsub.s32 0, %v2361
        %v2363 = vrot.slane %v2358, %v2362
        %v2364 = vlaneseq
        %v2365 = vshrl.u32 %v2364, 7
        %v2366 = vsub.s32 1, %v2365
        %v2367 = vrot.slane %v2358, %v2366
        %v2370 = vmul.f32 %v2356, %v2363
        %v2371 = vmul.f32 %v2357, %v2367
        %v2372 = vld [vmem:[%s754] sm:$0xf]
        %v2373 = vpack.c.bf16 %v2370, %v2370
        %v2374 = vpack.c.bf16 %v2371, %v2371
        %v2376 = vsel %vm340, %v2372, 0
        %v2379 = vsel %vm344, %v2373, 0
        %v2382 = vsel %vm344, %v2374, 0
        %2384 = vmatprep.subr.bf16.mxu0 %v2382
        %2385 = vmatpush1.bf16.msra.mxu0 %v2379
        %2386 = vmatprep.subr.bf16.mxu0 0
        %2387 = vmatpush1.bf16.msra.mxu0 0
        %2388 = vmatprep.subr.bf16.mxu0 0
        %2389 = vmatpush1.bf16.msra.mxu0 0
        %2390 = vmatprep.subr.bf16.mxu0 0
        %2391 = vmatpush1.bf16.msra.mxu0 0
        %2392 = vmatprep.subr.bf16.mxu0 0
        %2393 = vmatpush1.bf16.msra.mxu0 0
        %2394 = vmatprep.subr.bf16.mxu0 0
        %2395 = vmatpush1.bf16.msra.mxu0 0
        %2396 = vmatprep.subr.bf16.mxu0 0
        %2397 = vmatpush1.bf16.msra.mxu0 0
        %2398 = vmatprep.subr.bf16.mxu0 0
        %2399 = vmatpush1.bf16.msra.mxu0 0
        %2400 = vmatprep.subr.bf16.mxu0 0
        %2401 = vmatpush1.bf16.msra.mxu0 0
        %2402 = vmatprep.subr.bf16.mxu0 0
        %2403 = vmatpush1.bf16.msra.mxu0 0
        %2404 = vmatprep.subr.bf16.mxu0 0
        %2405 = vmatpush1.bf16.msra.mxu0 0
        %2406 = vmatprep.subr.bf16.mxu0 0
        %2407 = vmatpush1.bf16.msra.mxu0 0
        %2408 = vmatprep.subr.bf16.mxu0 0
        %2409 = vmatpush1.bf16.msra.mxu0 0
        %2410 = vmatprep.subr.bf16.mxu0 0
        %2411 = vmatpush1.bf16.msra.mxu0 0
        %2412 = vmatprep.subr.bf16.mxu0 0
        %2413 = vmatpush1.bf16.msra.mxu0 0
        %2414 = vmatprep.subr.bf16.mxu0 0
        %2415 = vmatpush1.bf16.msra.mxu0 0
        %2416 = vmatprep.mubr.bf16.mxu0 0
        %2417 = vmatmul.mubr.bf16.gmra.mrb[0].mxu0 %v2376
        %v2418 = vpop.f32.mrb[0].mxu0
        %v2419 = vadd.f32 0.0, %v2418
        %v2420 = vpop.f32.mrb[0].mxu0
        %v2421 = vadd.f32 0.0, %v2420
        %v2422 = vpop.f32.mrb[0].mxu0
        %v2423 = vpop.f32.mrb[0].mxu0
        %2424 = vdwg.mxu0
        %v2425 = vadd.f32 %v2350, %v2419
        %v2426 = vadd.f32 %v2351, %v2421
        %2427 = vrot.lane.b32.xlu0 %v1922, 112
        %v2428 = vpop.permute.xlu0 %2427
        %2429 = vrot.lane.b32.xlu0 %v1924, 112
        %v2430 = vpop.permute.xlu0 %2429
        %v2431 = vsel %vm814, %v2428, %v2430
        %v2432 = vsel %vm814, %v2430, %v2428
        %v2433 = vld [vmem:[%s817] ss:$8 sm:$0x3]
        %v2435 = vlaneseq
        %v2436 = vshrl.u32 %v2435, 7
        %v2437 = vsub.s32 0, %v2436
        %v2438 = vrot.slane %v2433, %v2437
        %v2439 = vlaneseq
        %v2440 = vshrl.u32 %v2439, 7
        %v2441 = vsub.s32 1, %v2440
        %v2442 = vrot.slane %v2433, %v2441
        %v2445 = vmul.f32 %v2431, %v2438
        %v2446 = vmul.f32 %v2432, %v2442
        %v2447 = vld [vmem:[%s832] sm:$0xf]
        %v2448 = vpack.c.bf16 %v2445, %v2445
        %v2449 = vpack.c.bf16 %v2446, %v2446
        %v2451 = vsel %vm340, %v2447, 0
        %v2454 = vsel %vm344, %v2448, 0
        %v2457 = vsel %vm344, %v2449, 0
        %2459 = vmatprep.subr.bf16.mxu0 %v2457
        %2460 = vmatpush1.bf16.msra.mxu0 %v2454
        %2461 = vmatprep.subr.bf16.mxu0 0
        %2462 = vmatpush1.bf16.msra.mxu0 0
        %2463 = vmatprep.subr.bf16.mxu0 0
        %2464 = vmatpush1.bf16.msra.mxu0 0
        %2465 = vmatprep.subr.bf16.mxu0 0
        %2466 = vmatpush1.bf16.msra.mxu0 0
        %2467 = vmatprep.subr.bf16.mxu0 0
        %2468 = vmatpush1.bf16.msra.mxu0 0
        %2469 = vmatprep.subr.bf16.mxu0 0
        %2470 = vmatpush1.bf16.msra.mxu0 0
        %2471 = vmatprep.subr.bf16.mxu0 0
        %2472 = vmatpush1.bf16.msra.mxu0 0
        %2473 = vmatprep.subr.bf16.mxu0 0
        %2474 = vmatpush1.bf16.msra.mxu0 0
        %2475 = vmatprep.subr.bf16.mxu0 0
        %2476 = vmatpush1.bf16.msra.mxu0 0
        %2477 = vmatprep.subr.bf16.mxu0 0
        %2478 = vmatpush1.bf16.msra.mxu0 0
        %2479 = vmatprep.subr.bf16.mxu0 0
        %2480 = vmatpush1.bf16.msra.mxu0 0
        %2481 = vmatprep.subr.bf16.mxu0 0
        %2482 = vmatpush1.bf16.msra.mxu0 0
        %2483 = vmatprep.subr.bf16.mxu0 0
        %2484 = vmatpush1.bf16.msra.mxu0 0
        %2485 = vmatprep.subr.bf16.mxu0 0
        %2486 = vmatpush1.bf16.msra.mxu0 0
        %2487 = vmatprep.subr.bf16.mxu0 0
        %2488 = vmatpush1.bf16.msra.mxu0 0
        %2489 = vmatprep.subr.bf16.mxu0 0
        %2490 = vmatpush1.bf16.msra.mxu0 0
        %2491 = vmatprep.mubr.bf16.mxu0 0
        %2492 = vmatmul.mubr.bf16.gmra.mrb[0].mxu0 %v2451
        %v2493 = vpop.f32.mrb[0].mxu0
        %v2494 = vadd.f32 0.0, %v2493
        %v2495 = vpop.f32.mrb[0].mxu0
        %v2496 = vadd.f32 0.0, %v2495
        %v2497 = vpop.f32.mrb[0].mxu0
        %v2498 = vpop.f32.mrb[0].mxu0
        %2499 = vdwg.mxu0
        %v2500 = vadd.f32 %v2425, %v2494
        %v2501 = vadd.f32 %v2426, %v2496
        %2502 = vrot.lane.b32.xlu0 %v1922, 111
        %v2503 = vpop.permute.xlu0 %2502
        %2504 = vrot.lane.b32.xlu0 %v1924, 111
        %v2505 = vpop.permute.xlu0 %2504
        %v2506 = vsel %vm892, %v2503, %v2505
        %v2507 = vsel %vm892, %v2505, %v2503
        %v2508 = vld [vmem:[%s895] ss:$8 sm:$0x3]
        %v2510 = vlaneseq
        %v2511 = vshrl.u32 %v2510, 7
        %v2512 = vsub.s32 0, %v2511
        %v2513 = vrot.slane %v2508, %v2512
        %v2514 = vlaneseq
        %v2515 = vshrl.u32 %v2514, 7
        %v2516 = vsub.s32 1, %v2515
        %v2517 = vrot.slane %v2508, %v2516
        %v2520 = vmul.f32 %v2506, %v2513
        %v2521 = vmul.f32 %v2507, %v2517
        %v2522 = vld [vmem:[%s910] sm:$0xf]
        %v2523 = vpack.c.bf16 %v2520, %v2520
        %v2524 = vpack.c.bf16 %v2521, %v2521
        %v2526 = vsel %vm340, %v2522, 0
        %v2529 = vsel %vm344, %v2523, 0
        %v2532 = vsel %vm344, %v2524, 0
        %2534 = vmatprep.subr.bf16.mxu0 %v2532
        %2535 = vmatpush1.bf16.msra.mxu0 %v2529
        %2536 = vmatprep.subr.bf16.mxu0 0
        %2537 = vmatpush1.bf16.msra.mxu0 0
        %2538 = vmatprep.subr.bf16.mxu0 0
        %2539 = vmatpush1.bf16.msra.mxu0 0
        %2540 = vmatprep.subr.bf16.mxu0 0
        %2541 = vmatpush1.bf16.msra.mxu0 0
        %2542 = vmatprep.subr.bf16.mxu0 0
        %2543 = vmatpush1.bf16.msra.mxu0 0
        %2544 = vmatprep.subr.bf16.mxu0 0
        %2545 = vmatpush1.bf16.msra.mxu0 0
        %2546 = vmatprep.subr.bf16.mxu0 0
        %2547 = vmatpush1.bf16.msra.mxu0 0
        %2548 = vmatprep.subr.bf16.mxu0 0
        %2549 = vmatpush1.bf16.msra.mxu0 0
        %2550 = vmatprep.subr.bf16.mxu0 0
        %2551 = vmatpush1.bf16.msra.mxu0 0
        %2552 = vmatprep.subr.bf16.mxu0 0
        %2553 = vmatpush1.bf16.msra.mxu0 0
        %2554 = vmatprep.subr.bf16.mxu0 0
        %2555 = vmatpush1.bf16.msra.mxu0 0
        %2556 = vmatprep.subr.bf16.mxu0 0
        %2557 = vmatpush1.bf16.msra.mxu0 0
        %2558 = vmatprep.subr.bf16.mxu0 0
        %2559 = vmatpush1.bf16.msra.mxu0 0
        %2560 = vmatprep.subr.bf16.mxu0 0
        %2561 = vmatpush1.bf16.msra.mxu0 0
        %2562 = vmatprep.subr.bf16.mxu0 0
        %2563 = vmatpush1.bf16.msra.mxu0 0
        %2564 = vmatprep.subr.bf16.mxu0 0
        %2565 = vmatpush1.bf16.msra.mxu0 0
        %2566 = vmatprep.mubr.bf16.mxu0 0
        %2567 = vmatmul.mubr.bf16.gmra.mrb[0].mxu0 %v2526
        %v2568 = vpop.f32.mrb[0].mxu0
        %v2569 = vadd.f32 0.0, %v2568
        %v2570 = vpop.f32.mrb[0].mxu0
        %v2571 = vadd.f32 0.0, %v2570
        %v2572 = vpop.f32.mrb[0].mxu0
        %v2573 = vpop.f32.mrb[0].mxu0
        %2574 = vdwg.mxu0
        %v2575 = vadd.f32 %v2500, %v2569
        %v2576 = vadd.f32 %v2501, %v2571
        %v2577 = vld [vmem:[%s3] sm:$0xff]
        %2579 = vset.pattern.permute.xlu0 0
        %2580 = vperm.xlu0 %2579, %v2577
        %v2581 = vpop.permute.xlu0 %2580
        %v2583 = vadd.f32 %v2575, %v2581
        %v2584 = vadd.f32 %v2576, %v2581
        %v2585 = vmax.f32 %v2583, 0.0
        %v2586 = vmax.f32 %v2584, 0.0
        %v2587 = vld [vmem:[%s4] sm:$0xf]
        %v2588 = vld [vmem:[%s4 + $0x4] sm:$0xf]
        %v2589 = vpack.c.bf16 %v2585, %v2585
        %v2590 = vpack.c.bf16 %v2586, %v2586
        %v2591 = vld [vmem:[%s5] sm:$0xf]
        %v2592 = vld [vmem:[%s5 + $0x4] sm:$0xf]
        %v2595 = vunpack.c.l.b16 %v2591
        %v2596 = vunpack.c.l.b16 %v2592
        %v2597 = vpack.c.b16 %v2596, %v2595
        %v2599 = vsel %vm340, %v2597, 0
        %2601 = vmatprep.subr.bf16.mxu0 %v2232
        %2602 = vmatpush1.bf16.msra.mxu0 %v2229
        %2603 = vmatprep.subr.bf16.mxu0 0
        %2604 = vmatpush1.bf16.msra.mxu0 0
        %2605 = vmatprep.subr.bf16.mxu0 0
        %2606 = vmatpush1.bf16.msra.mxu0 0
        %2607 = vmatprep.subr.bf16.mxu0 0
        %2608 = vmatpush1.bf16.msra.mxu0 0
        %2609 = vmatprep.subr.bf16.mxu0 0
        %2610 = vmatpush1.bf16.msra.mxu0 0
        %2611 = vmatprep.subr.bf16.mxu0 0
        %2612 = vmatpush1.bf16.msra.mxu0 0
        %2613 = vmatprep.subr.bf16.mxu0 0
        %2614 = vmatpush1.bf16.msra.mxu0 0
        %2615 = vmatprep.subr.bf16.mxu0 0
        %2616 = vmatpush1.bf16.msra.mxu0 0
        %2617 = vmatprep.subr.bf16.mxu0 0
        %2618 = vmatpush1.bf16.msra.mxu0 0
        %2619 = vmatprep.subr.bf16.mxu0 0
        %2620 = vmatpush1.bf16.msra.mxu0 0
        %2621 = vmatprep.subr.bf16.mxu0 0
        %2622 = vmatpush1.bf16.msra.mxu0 0
        %2623 = vmatprep.subr.bf16.mxu0 0
        %2624 = vmatpush1.bf16.msra.mxu0 0
        %2625 = vmatprep.subr.bf16.mxu0 0
        %2626 = vmatpush1.bf16.msra.mxu0 0
        %2627 = vmatprep.subr.bf16.mxu0 0
        %2628 = vmatpush1.bf16.msra.mxu0 0
        %2629 = vmatprep.subr.bf16.mxu0 0
        %2630 = vmatpush1.bf16.msra.mxu0 0
        %2631 = vmatprep.subr.bf16.mxu0 0
        %2632 = vmatpush1.bf16.msra.mxu0 0
        %2633 = vmatprep.mubr.bf16.mxu0 0
        %2634 = vmatmul.mubr.bf16.gmra.mrb[0].mxu0 %v2599
        %v2635 = vpop.f32.mrb[0].mxu0
        %v2636 = vadd.f32 0.0, %v2635
        %v2637 = vpop.f32.mrb[0].mxu0
        %v2638 = vadd.f32 0.0, %v2637
        %v2639 = vpop.f32.mrb[0].mxu0
        %v2640 = vadd.f32 0.0, %v2639
        %v2641 = vpop.f32.mrb[0].mxu0
        %v2642 = vadd.f32 0.0, %v2641
        %2643 = vdwg.mxu0
        %v2646 = vunpack.c.l.b16 %v2587
        %v2647 = vunpack.c.l.b16 %v2588
        %v2648 = vpack.c.b16 %v2647, %v2646
        %v2650 = vsel %vm1038, %v2648, 0
        %v2653 = vsel %vm1042, %v2589, 0
        %v2656 = vsel %vm1042, %v2590, 0
        %2658 = vmatprep.subr.bf16.mxu0 %v2656
        %2659 = vmatpush1.bf16.msra.mxu0 %v2653
        %2660 = vmatprep.subr.bf16.mxu0 0
        %2661 = vmatpush1.bf16.msra.mxu0 0
        %2662 = vmatprep.subr.bf16.mxu0 0
        %2663 = vmatpush1.bf16.msra.mxu0 0
        %2664 = vmatprep.subr.bf16.mxu0 0
        %2665 = vmatpush1.bf16.msra.mxu0 0
        %2666 = vmatprep.subr.bf16.mxu0 0
        %2667 = vmatpush1.bf16.msra.mxu0 0
        %2668 = vmatprep.subr.bf16.mxu0 0
        %2669 = vmatpush1.bf16.msra.mxu0 0
        %2670 = vmatprep.subr.bf16.mxu0 0
        %2671 = vmatpush1.bf16.msra.mxu0 0
        %2672 = vmatprep.subr.bf16.mxu0 0
        %2673 = vmatpush1.bf16.msra.mxu0 0
        %2674 = vmatprep.subr.bf16.mxu0 0
        %2675 = vmatpush1.bf16.msra.mxu0 0
        %2676 = vmatprep.subr.bf16.mxu0 0
        %2677 = vmatpush1.bf16.msra.mxu0 0
        %2678 = vmatprep.subr.bf16.mxu0 0
        %2679 = vmatpush1.bf16.msra.mxu0 0
        %2680 = vmatprep.subr.bf16.mxu0 0
        %2681 = vmatpush1.bf16.msra.mxu0 0
        %2682 = vmatprep.subr.bf16.mxu0 0
        %2683 = vmatpush1.bf16.msra.mxu0 0
        %2684 = vmatprep.subr.bf16.mxu0 0
        %2685 = vmatpush1.bf16.msra.mxu0 0
        %2686 = vmatprep.subr.bf16.mxu0 0
        %2687 = vmatpush1.bf16.msra.mxu0 0
        %2688 = vmatprep.subr.bf16.mxu0 0
        %2689 = vmatpush1.bf16.msra.mxu0 0
        %2690 = vmatprep.mubr.bf16.mxu0 0
        %2691 = vmatmul.mubr.bf16.gmra.mrb[0].mxu0 %v2650
        %v2692 = vpop.f32.mrb[0].mxu0
        %v2693 = vadd.f32 %v2636, %v2692
        %v2694 = vpop.f32.mrb[0].mxu0
        %v2695 = vadd.f32 %v2638, %v2694
        %v2696 = vpop.f32.mrb[0].mxu0
        %v2697 = vadd.f32 %v2640, %v2696
        %v2698 = vpop.f32.mrb[0].mxu0
        %v2699 = vadd.f32 %v2642, %v2698
        %2700 = vdwg.mxu0
        %v2701 = vld [vmem:[%s6] sm:$0xff]
        %v2702 = vld [vmem:[%s6 + $0x8] sm:$0xff]
        %2704 = vset.pattern.permute.xlu0 0
        %2705 = vperm.xlu0 %2704, %v2701
        %v2706 = vpop.permute.xlu0 %2705
        %2709 = vset.pattern.permute.xlu0 0
        %2710 = vperm.xlu0 %2709, %v2702
        %v2711 = vpop.permute.xlu0 %2710
        %v2713 = vadd.f32 %v2693, %v2706
        %v2714 = vadd.f32 %v2695, %v2706
        %v2715 = vadd.f32 %v2697, %v2711
        %v2716 = vadd.f32 %v2699, %v2711
        %v2717 = vmax.f32 %v2713, 0.0
        %v2718 = vmax.f32 %v2714, 0.0
        %v2719 = vmax.f32 %v2715, 0.0
        %v2720 = vmax.f32 %v2716, 0.0
        %s2721 = scalar_lea.vmem %s274, 64 [#allocation2]
        %2722 = vst [vmem:[%s2721] sm:$0xff] %v2717
        %2723 = vst [vmem:[%s2721 + $0x8] sm:$0xff] %v2718
        %2724 = vst [vmem:[%s2721 + $0x10] sm:$0xff] %v2719
        %2725 = vst [vmem:[%s2721 + $0x18] sm:$0xff] %v2720
        %s2726 = scalar_lea.vmem %s280, 24
        %v2727 = vld [vmem:[%s2726] sm:$0xff]
        %v2729 = vcombine.high %v2727, %v2727
        %2731 = vrot.lane.b32.xlu0 %v2727, 17
        %v2732 = vpop.permute.xlu0 %2731
        %2733 = vrot.lane.b32.xlu0 %v2729, 17
        %v2734 = vpop.permute.xlu0 %2733
        %v2735 = vsel %vm294, %v2732, %v2734
        %v2736 = vsel %vm294, %v2734, %v2732
        %v2737 = vld [vmem:[%s1] ss:$8 sm:$0x3]
        %v2739 = vlaneseq
        %v2740 = vshrl.u32 %v2739, 7
        %v2741 = vsub.s32 0, %v2740
        %v2742 = vrot.slane %v2737, %v2741
        %v2743 = vlaneseq
        %v2744 = vshrl.u32 %v2743, 7
        %v2745 = vsub.s32 1, %v2744
        %v2746 = vrot.slane %v2737, %v2745
        %v2749 = vmul.f32 %v2736, %v2742
        %v2750 = vmul.f32 %v2735, %v2746
        %v2751 = vld [vmem:[%s2] sm:$0xf]
        %v2752 = vpack.c.bf16 %v2749, %v2749
        %v2753 = vpack.c.bf16 %v2750, %v2750
        %2754 = vrot.lane.b32.xlu0 %v2727, 16
        %v2755 = vpop.permute.xlu0 %2754
        %2756 = vrot.lane.b32.xlu0 %v2729, 16
        %v2757 = vpop.permute.xlu0 %2756
        %v2758 = vsel %vm318, %v2755, %v2757
        %v2759 = vsel %vm318, %v2757, %v2755
        %v2760 = vld [vmem:[%s321] ss:$8 sm:$0x3]
        %v2762 = vlaneseq
        %v2763 = vshrl.u32 %v2762, 7
        %v2764 = vsub.s32 0, %v2763
        %v2765 = vrot.slane %v2760, %v2764
        %v2766 = vlaneseq
        %v2767 = vshrl.u32 %v2766, 7
        %v2768 = vsub.s32 1, %v2767
        %v2769 = vrot.slane %v2760, %v2768
        %v2772 = vmul.f32 %v2759, %v2765
        %v2773 = vmul.f32 %v2758, %v2769
        %v2774 = vld [vmem:[%s336] sm:$0xf]
        %v2775 = vpack.c.bf16 %v2772, %v2772
        %v2776 = vpack.c.bf16 %v2773, %v2773
        %v2778 = vsel %vm340, %v2774, 0
        %v2781 = vsel %vm344, %v2775, 0
        %v2784 = vsel %vm344, %v2776, 0
        %2786 = vmatprep.subr.bf16.mxu0 %v2784
        %2787 = vmatpush1.bf16.msra.mxu0 %v2781
        %2788 = vmatprep.subr.bf16.mxu0 0
        %2789 = vmatpush1.bf16.msra.mxu0 0
        %2790 = vmatprep.subr.bf16.mxu0 0
        %2791 = vmatpush1.bf16.msra.mxu0 0
        %2792 = vmatprep.subr.bf16.mxu0 0
        %2793 = vmatpush1.bf16.msra.mxu0 0
        %2794 = vmatprep.subr.bf16.mxu0 0
        %2795 = vmatpush1.bf16.msra.mxu0 0
        %2796 = vmatprep.subr.bf16.mxu0 0
        %2797 = vmatpush1.bf16.msra.mxu0 0
        %2798 = vmatprep.subr.bf16.mxu0 0
        %2799 = vmatpush1.bf16.msra.mxu0 0
        %2800 = vmatprep.subr.bf16.mxu0 0
        %2801 = vmatpush1.bf16.msra.mxu0 0
        %2802 = vmatprep.subr.bf16.mxu0 0
        %2803 = vmatpush1.bf16.msra.mxu0 0
        %2804 = vmatprep.subr.bf16.mxu0 0
        %2805 = vmatpush1.bf16.msra.mxu0 0
        %2806 = vmatprep.subr.bf16.mxu0 0
        %2807 = vmatpush1.bf16.msra.mxu0 0
        %2808 = vmatprep.subr.bf16.mxu0 0
        %2809 = vmatpush1.bf16.msra.mxu0 0
        %2810 = vmatprep.subr.bf16.mxu0 0
        %2811 = vmatpush1.bf16.msra.mxu0 0
        %2812 = vmatprep.subr.bf16.mxu0 0
        %2813 = vmatpush1.bf16.msra.mxu0 0
        %2814 = vmatprep.subr.bf16.mxu0 0
        %2815 = vmatpush1.bf16.msra.mxu0 0
        %2816 = vmatprep.subr.bf16.mxu0 0
        %2817 = vmatpush1.bf16.msra.mxu0 0
        %2818 = vmatprep.mubr.bf16.mxu0 0
        %2819 = vmatmul.mubr.bf16.gmra.mrb[0].mxu0 %v2778
        %v2820 = vpop.f32.mrb[0].mxu0
        %v2821 = vadd.f32 0.0, %v2820
        %v2822 = vpop.f32.mrb[0].mxu0
        %v2823 = vadd.f32 0.0, %v2822
        %v2824 = vpop.f32.mrb[0].mxu0
        %v2825 = vpop.f32.mrb[0].mxu0
        %2826 = vdwg.mxu0
        %v2828 = vsel %vm340, %v2751, 0
        %v2831 = vsel %vm344, %v2752, 0
        %v2834 = vsel %vm344, %v2753, 0
        %2836 = vmatprep.subr.bf16.mxu0 %v2834
        %2837 = vmatpush1.bf16.msra.mxu0 %v2831
        %2838 = vmatprep.subr.bf16.mxu0 0
        %2839 = vmatpush1.bf16.msra.mxu0 0
        %2840 = vmatprep.subr.bf16.mxu0 0
        %2841 = vmatpush1.bf16.msra.mxu0 0
        %2842 = vmatprep.subr.bf16.mxu0 0
        %2843 = vmatpush1.bf16.msra.mxu0 0
        %2844 = vmatprep.subr.bf16.mxu0 0
        %2845 = vmatpush1.bf16.msra.mxu0 0
        %2846 = vmatprep.subr.bf16.mxu0 0
        %2847 = vmatpush1.bf16.msra.mxu0 0
        %2848 = vmatprep.subr.bf16.mxu0 0
        %2849 = vmatpush1.bf16.msra.mxu0 0
        %2850 = vmatprep.subr.bf16.mxu0 0
        %2851 = vmatpush1.bf16.msra.mxu0 0
        %2852 = vmatprep.subr.bf16.mxu0 0
        %2853 = vmatpush1.bf16.msra.mxu0 0
        %2854 = vmatprep.subr.bf16.mxu0 0
        %2855 = vmatpush1.bf16.msra.mxu0 0
        %2856 = vmatprep.subr.bf16.mxu0 0
        %2857 = vmatpush1.bf16.msra.mxu0 0
        %2858 = vmatprep.subr.bf16.mxu0 0
        %2859 = vmatpush1.bf16.msra.mxu0 0
        %2860 = vmatprep.subr.bf16.mxu0 0
        %2861 = vmatpush1.bf16.msra.mxu0 0
        %2862 = vmatprep.subr.bf16.mxu0 0
        %2863 = vmatpush1.bf16.msra.mxu0 0
        %2864 = vmatprep.subr.bf16.mxu0 0
        %2865 = vmatpush1.bf16.msra.mxu0 0
        %2866 = vmatprep.subr.bf16.mxu0 0
        %2867 = vmatpush1.bf16.msra.mxu0 0
        %2868 = vmatprep.mubr.bf16.mxu0 0
        %2869 = vmatmul.mubr.bf16.gmra.mrb[0].mxu0 %v2828
        %v2870 = vpop.f32.mrb[0].mxu0
        %v2871 = vadd.f32 %v2821, %v2870
        %v2872 = vpop.f32.mrb[0].mxu0
        %v2873 = vadd.f32 %v2823, %v2872
        %v2874 = vpop.f32.mrb[0].mxu0
        %v2875 = vpop.f32.mrb[0].mxu0
        %2876 = vdwg.mxu0
        %2877 = vrot.lane.b32.xlu0 %v2727, 15
        %v2878 = vpop.permute.xlu0 %2877
        %2879 = vrot.lane.b32.xlu0 %v2729, 15
        %v2880 = vpop.permute.xlu0 %2879
        %v2881 = vsel %vm446, %v2878, %v2880
        %v2882 = vsel %vm446, %v2880, %v2878
        %v2883 = vld [vmem:[%s449] ss:$8 sm:$0x3]
        %v2885 = vlaneseq
        %v2886 = vshrl.u32 %v2885, 7
        %v2887 = vsub.s32 0, %v2886
        %v2888 = vrot.slane %v2883, %v2887
        %v2889 = vlaneseq
        %v2890 = vshrl.u32 %v2889, 7
        %v2891 = vsub.s32 1, %v2890
        %v2892 = vrot.slane %v2883, %v2891
        %v2895 = vmul.f32 %v2882, %v2888
        %v2896 = vmul.f32 %v2881, %v2892
        %v2897 = vld [vmem:[%s464] sm:$0xf]
        %v2898 = vpack.c.bf16 %v2895, %v2895
        %v2899 = vpack.c.bf16 %v2896, %v2896
        %v2901 = vsel %vm340, %v2897, 0
        %v2904 = vsel %vm344, %v2898, 0
        %v2907 = vsel %vm344, %v2899, 0
        %2909 = vmatprep.subr.bf16.mxu0 %v2907
        %2910 = vmatpush1.bf16.msra.mxu0 %v2904
        %2911 = vmatprep.subr.bf16.mxu0 0
        %2912 = vmatpush1.bf16.msra.mxu0 0
        %2913 = vmatprep.subr.bf16.mxu0 0
        %2914 = vmatpush1.bf16.msra.mxu0 0
        %2915 = vmatprep.subr.bf16.mxu0 0
        %2916 = vmatpush1.bf16.msra.mxu0 0
        %2917 = vmatprep.subr.bf16.mxu0 0
        %2918 = vmatpush1.bf16.msra.mxu0 0
        %2919 = vmatprep.subr.bf16.mxu0 0
        %2920 = vmatpush1.bf16.msra.mxu0 0
        %2921 = vmatprep.subr.bf16.mxu0 0
        %2922 = vmatpush1.bf16.msra.mxu0 0
        %2923 = vmatprep.subr.bf16.mxu0 0
        %2924 = vmatpush1.bf16.msra.mxu0 0
        %2925 = vmatprep.subr.bf16.mxu0 0
        %2926 = vmatpush1.bf16.msra.mxu0 0
        %2927 = vmatprep.subr.bf16.mxu0 0
        %2928 = vmatpush1.bf16.msra.mxu0 0
        %2929 = vmatprep.subr.bf16.mxu0 0
        %2930 = vmatpush1.bf16.msra.mxu0 0
        %2931 = vmatprep.subr.bf16.mxu0 0
        %2932 = vmatpush1.bf16.msra.mxu0 0
        %2933 = vmatprep.subr.bf16.mxu0 0
        %2934 = vmatpush1.bf16.msra.mxu0 0
        %2935 = vmatprep.subr.bf16.mxu0 0
        %2936 = vmatpush1.bf16.msra.mxu0 0
        %2937 = vmatprep.subr.bf16.mxu0 0
        %2938 = vmatpush1.bf16.msra.mxu0 0
        %2939 = vmatprep.subr.bf16.mxu0 0
        %2940 = vmatpush1.bf16.msra.mxu0 0
        %2941 = vmatprep.mubr.bf16.mxu0 0
        %2942 = vmatmul.mubr.bf16.gmra.mrb[0].mxu0 %v2901
        %v2943 = vpop.f32.mrb[0].mxu0
        %v2944 = vadd.f32 0.0, %v2943
        %v2945 = vpop.f32.mrb[0].mxu0
        %v2946 = vadd.f32 0.0, %v2945
        %v2947 = vpop.f32.mrb[0].mxu0
        %v2948 = vpop.f32.mrb[0].mxu0
        %2949 = vdwg.mxu0
        %v2950 = vadd.f32 %v2871, %v2944
        %v2951 = vadd.f32 %v2873, %v2946
        %2952 = vrot.lane.b32.xlu0 %v2727, 1
        %v2953 = vpop.permute.xlu0 %2952
        %2954 = vrot.lane.b32.xlu0 %v2729, 1
        %v2955 = vpop.permute.xlu0 %2954
        %v2956 = vsel %vm524, %v2953, %v2955
        %v2957 = vsel %vm524, %v2955, %v2953
        %v2958 = vld [vmem:[%s527] ss:$8 sm:$0x3]
        %v2960 = vlaneseq
        %v2961 = vshrl.u32 %v2960, 7
        %v2962 = vsub.s32 0, %v2961
        %v2963 = vrot.slane %v2958, %v2962
        %v2964 = vlaneseq
        %v2965 = vshrl.u32 %v2964, 7
        %v2966 = vsub.s32 1, %v2965
        %v2967 = vrot.slane %v2958, %v2966
        %v2970 = vmul.f32 %v2957, %v2963
        %v2971 = vmul.f32 %v2956, %v2967
        %v2972 = vld [vmem:[%s542] sm:$0xf]
        %v2973 = vpack.c.bf16 %v2970, %v2970
        %v2974 = vpack.c.bf16 %v2971, %v2971
        %v2976 = vsel %vm340, %v2972, 0
        %v2979 = vsel %vm344, %v2973, 0
        %v2982 = vsel %vm344, %v2974, 0
        %2984 = vmatprep.subr.bf16.mxu0 %v2982
        %2985 = vmatpush1.bf16.msra.mxu0 %v2979
        %2986 = vmatprep.subr.bf16.mxu0 0
        %2987 = vmatpush1.bf16.msra.mxu0 0
        %2988 = vmatprep.subr.bf16.mxu0 0
        %2989 = vmatpush1.bf16.msra.mxu0 0
        %2990 = vmatprep.subr.bf16.mxu0 0
        %2991 = vmatpush1.bf16.msra.mxu0 0
        %2992 = vmatprep.subr.bf16.mxu0 0
        %2993 = vmatpush1.bf16.msra.mxu0 0
        %2994 = vmatprep.subr.bf16.mxu0 0
        %2995 = vmatpush1.bf16.msra.mxu0 0
        %2996 = vmatprep.subr.bf16.mxu0 0
        %2997 = vmatpush1.bf16.msra.mxu0 0
        %2998 = vmatprep.subr.bf16.mxu0 0
        %2999 = vmatpush1.bf16.msra.mxu0 0
        %3000 = vmatprep.subr.bf16.mxu0 0
        %3001 = vmatpush1.bf16.msra.mxu0 0
        %3002 = vmatprep.subr.bf16.mxu0 0
        %3003 = vmatpush1.bf16.msra.mxu0 0
        %3004 = vmatprep.subr.bf16.mxu0 0
        %3005 = vmatpush1.bf16.msra.mxu0 0
        %3006 = vmatprep.subr.bf16.mxu0 0
        %3007 = vmatpush1.bf16.msra.mxu0 0
        %3008 = vmatprep.subr.bf16.mxu0 0
        %3009 = vmatpush1.bf16.msra.mxu0 0
        %3010 = vmatprep.subr.bf16.mxu0 0
        %3011 = vmatpush1.bf16.msra.mxu0 0
        %3012 = vmatprep.subr.bf16.mxu0 0
        %3013 = vmatpush1.bf16.msra.mxu0 0
        %3014 = vmatprep.subr.bf16.mxu0 0
        %3015 = vmatpush1.bf16.msra.mxu0 0
        %3016 = vmatprep.mubr.bf16.mxu0 0
        %3017 = vmatmul.mubr.bf16.gmra.mrb[0].mxu0 %v2976
        %v3018 = vpop.f32.mrb[0].mxu0
        %v3019 = vadd.f32 0.0, %v3018
        %v3020 = vpop.f32.mrb[0].mxu0
        %v3021 = vadd.f32 0.0, %v3020
        %v3022 = vpop.f32.mrb[0].mxu0
        %v3023 = vpop.f32.mrb[0].mxu0
        %3024 = vdwg.mxu0
        %v3025 = vadd.f32 %v2950, %v3019
        %v3026 = vadd.f32 %v2951, %v3021
        %v3027 = vld [vmem:[%s598] sm:$0xf]
        %v3028 = vpack.c.bf16 %v2727, %v2727
        %v3029 = vpack.c.bf16 %v2729, %v2729
        %v3031 = vsel %vm340, %v3027, 0
        %v3034 = vsel %vm344, %v3028, 0
        %v3037 = vsel %vm344, %v3029, 0
        %3039 = vmatprep.subr.bf16.mxu0 %v3037
        %3040 = vmatpush1.bf16.msra.mxu0 %v3034
        %3041 = vmatprep.subr.bf16.mxu0 0
        %3042 = vmatpush1.bf16.msra.mxu0 0
        %3043 = vmatprep.subr.bf16.mxu0 0
        %3044 = vmatpush1.bf16.msra.mxu0 0
        %3045 = vmatprep.subr.bf16.mxu0 0
        %3046 = vmatpush1.bf16.msra.mxu0 0
        %3047 = vmatprep.subr.bf16.mxu0 0
        %3048 = vmatpush1.bf16.msra.mxu0 0
        %3049 = vmatprep.subr.bf16.mxu0 0
        %3050 = vmatpush1.bf16.msra.mxu0 0
        %3051 = vmatprep.subr.bf16.mxu0 0
        %3052 = vmatpush1.bf16.msra.mxu0 0
        %3053 = vmatprep.subr.bf16.mxu0 0
        %3054 = vmatpush1.bf16.msra.mxu0 0
        %3055 = vmatprep.subr.bf16.mxu0 0
        %3056 = vmatpush1.bf16.msra.mxu0 0
        %3057 = vmatprep.subr.bf16.mxu0 0
        %3058 = vmatpush1.bf16.msra.mxu0 0
        %3059 = vmatprep.subr.bf16.mxu0 0
        %3060 = vmatpush1.bf16.msra.mxu0 0
        %3061 = vmatprep.subr.bf16.mxu0 0
        %3062 = vmatpush1.bf16.msra.mxu0 0
        %3063 = vmatprep.subr.bf16.mxu0 0
        %3064 = vmatpush1.bf16.msra.mxu0 0
        %3065 = vmatprep.subr.bf16.mxu0 0
        %3066 = vmatpush1.bf16.msra.mxu0 0
        %3067 = vmatprep.subr.bf16.mxu0 0
        %3068 = vmatpush1.bf16.msra.mxu0 0
        %3069 = vmatprep.subr.bf16.mxu0 0
        %3070 = vmatpush1.bf16.msra.mxu0 0
        %3071 = vmatprep.mubr.bf16.mxu0 0
        %3072 = vmatmul.mubr.bf16.gmra.mrb[0].mxu0 %v3031
        %v3073 = vpop.f32.mrb[0].mxu0
        %v3074 = vadd.f32 0.0, %v3073
        %v3075 = vpop.f32.mrb[0].mxu0
        %v3076 = vadd.f32 0.0, %v3075
        %v3077 = vpop.f32.mrb[0].mxu0
        %v3078 = vpop.f32.mrb[0].mxu0
        %3079 = vdwg.mxu0
        %v3080 = vadd.f32 %v3025, %v3074
        %v3081 = vadd.f32 %v3026, %v3076
        %3082 = vrot.lane.b32.xlu0 %v2727, 127
        %v3083 = vpop.permute.xlu0 %3082
        %3084 = vrot.lane.b32.xlu0 %v2729, 127
        %v3085 = vpop.permute.xlu0 %3084
        %v3086 = vsel %vm658, %v3083, %v3085
        %v3087 = vsel %vm658, %v3085, %v3083
        %v3088 = vld [vmem:[%s661] ss:$8 sm:$0x3]
        %v3090 = vlaneseq
        %v3091 = vshrl.u32 %v3090, 7
        %v3092 = vsub.s32 0, %v3091
        %v3093 = vrot.slane %v3088, %v3092
        %v3094 = vlaneseq
        %v3095 = vshrl.u32 %v3094, 7
        %v3096 = vsub.s32 1, %v3095
        %v3097 = vrot.slane %v3088, %v3096
        %v3100 = vmul.f32 %v3086, %v3093
        %v3101 = vmul.f32 %v3087, %v3097
        %v3102 = vld [vmem:[%s676] sm:$0xf]
        %v3103 = vpack.c.bf16 %v3100, %v3100
        %v3104 = vpack.c.bf16 %v3101, %v3101
        %v3106 = vsel %vm340, %v3102, 0
        %v3109 = vsel %vm344, %v3103, 0
        %v3112 = vsel %vm344, %v3104, 0
        %3114 = vmatprep.subr.bf16.mxu0 %v3112
        %3115 = vmatpush1.bf16.msra.mxu0 %v3109
        %3116 = vmatprep.subr.bf16.mxu0 0
        %3117 = vmatpush1.bf16.msra.mxu0 0
        %3118 = vmatprep.subr.bf16.mxu0 0
        %3119 = vmatpush1.bf16.msra.mxu0 0
        %3120 = vmatprep.subr.bf16.mxu0 0
        %3121 = vmatpush1.bf16.msra.mxu0 0
        %3122 = vmatprep.subr.bf16.mxu0 0
        %3123 = vmatpush1.bf16.msra.mxu0 0
        %3124 = vmatprep.subr.bf16.mxu0 0
        %3125 = vmatpush1.bf16.msra.mxu0 0
        %3126 = vmatprep.subr.bf16.mxu0 0
        %3127 = vmatpush1.bf16.msra.mxu0 0
        %3128 = vmatprep.subr.bf16.mxu0 0
        %3129 = vmatpush1.bf16.msra.mxu0 0
        %3130 = vmatprep.subr.bf16.mxu0 0
        %3131 = vmatpush1.bf16.msra.mxu0 0
        %3132 = vmatprep.subr.bf16.mxu0 0
        %3133 = vmatpush1.bf16.msra.mxu0 0
        %3134 = vmatprep.subr.bf16.mxu0 0
        %3135 = vmatpush1.bf16.msra.mxu0 0
        %3136 = vmatprep.subr.bf16.mxu0 0
        %3137 = vmatpush1.bf16.msra.mxu0 0
        %3138 = vmatprep.subr.bf16.mxu0 0
        %3139 = vmatpush1.bf16.msra.mxu0 0
        %3140 = vmatprep.subr.bf16.mxu0 0
        %3141 = vmatpush1.bf16.msra.mxu0 0
        %3142 = vmatprep.subr.bf16.mxu0 0
        %3143 = vmatpush1.bf16.msra.mxu0 0
        %3144 = vmatprep.subr.bf16.mxu0 0
        %3145 = vmatpush1.bf16.msra.mxu0 0
        %3146 = vmatprep.mubr.bf16.mxu0 0
        %3147 = vmatmul.mubr.bf16.gmra.mrb[0].mxu0 %v3106
        %v3148 = vpop.f32.mrb[0].mxu0
        %v3149 = vadd.f32 0.0, %v3148
        %v3150 = vpop.f32.mrb[0].mxu0
        %v3151 = vadd.f32 0.0, %v3150
        %v3152 = vpop.f32.mrb[0].mxu0
        %v3153 = vpop.f32.mrb[0].mxu0
        %3154 = vdwg.mxu0
        %v3155 = vadd.f32 %v3080, %v3149
        %v3156 = vadd.f32 %v3081, %v3151
        %3157 = vrot.lane.b32.xlu0 %v2727, 113
        %v3158 = vpop.permute.xlu0 %3157
        %3159 = vrot.lane.b32.xlu0 %v2729, 113
        %v3160 = vpop.permute.xlu0 %3159
        %v3161 = vsel %vm736, %v3158, %v3160
        %v3162 = vsel %vm736, %v3160, %v3158
        %v3163 = vld [vmem:[%s739] ss:$8 sm:$0x3]
        %v3165 = vlaneseq
        %v3166 = vshrl.u32 %v3165, 7
        %v3167 = vsub.s32 0, %v3166
        %v3168 = vrot.slane %v3163, %v3167
        %v3169 = vlaneseq
        %v3170 = vshrl.u32 %v3169, 7
        %v3171 = vsub.s32 1, %v3170
        %v3172 = vrot.slane %v3163, %v3171
        %v3175 = vmul.f32 %v3161, %v3168
        %v3176 = vmul.f32 %v3162, %v3172
        %v3177 = vld [vmem:[%s754] sm:$0xf]
        %v3178 = vpack.c.bf16 %v3175, %v3175
        %v3179 = vpack.c.bf16 %v3176, %v3176
        %v3181 = vsel %vm340, %v3177, 0
        %v3184 = vsel %vm344, %v3178, 0
        %v3187 = vsel %vm344, %v3179, 0
        %3189 = vmatprep.subr.bf16.mxu0 %v3187
        %3190 = vmatpush1.bf16.msra.mxu0 %v3184
        %3191 = vmatprep.subr.bf16.mxu0 0
        %3192 = vmatpush1.bf16.msra.mxu0 0
        %3193 = vmatprep.subr.bf16.mxu0 0
        %3194 = vmatpush1.bf16.msra.mxu0 0
        %3195 = vmatprep.subr.bf16.mxu0 0
        %3196 = vmatpush1.bf16.msra.mxu0 0
        %3197 = vmatprep.subr.bf16.mxu0 0
        %3198 = vmatpush1.bf16.msra.mxu0 0
        %3199 = vmatprep.subr.bf16.mxu0 0
        %3200 = vmatpush1.bf16.msra.mxu0 0
        %3201 = vmatprep.subr.bf16.mxu0 0
        %3202 = vmatpush1.bf16.msra.mxu0 0
        %3203 = vmatprep.subr.bf16.mxu0 0
        %3204 = vmatpush1.bf16.msra.mxu0 0
        %3205 = vmatprep.subr.bf16.mxu0 0
        %3206 = vmatpush1.bf16.msra.mxu0 0
        %3207 = vmatprep.subr.bf16.mxu0 0
        %3208 = vmatpush1.bf16.msra.mxu0 0
        %3209 = vmatprep.subr.bf16.mxu0 0
        %3210 = vmatpush1.bf16.msra.mxu0 0
        %3211 = vmatprep.subr.bf16.mxu0 0
        %3212 = vmatpush1.bf16.msra.mxu0 0
        %3213 = vmatprep.subr.bf16.mxu0 0
        %3214 = vmatpush1.bf16.msra.mxu0 0
        %3215 = vmatprep.subr.bf16.mxu0 0
        %3216 = vmatpush1.bf16.msra.mxu0 0
        %3217 = vmatprep.subr.bf16.mxu0 0
        %3218 = vmatpush1.bf16.msra.mxu0 0
        %3219 = vmatprep.subr.bf16.mxu0 0
        %3220 = vmatpush1.bf16.msra.mxu0 0
        %3221 = vmatprep.mubr.bf16.mxu0 0
        %3222 = vmatmul.mubr.bf16.gmra.mrb[0].mxu0 %v3181
        %v3223 = vpop.f32.mrb[0].mxu0
        %v3224 = vadd.f32 0.0, %v3223
        %v3225 = vpop.f32.mrb[0].mxu0
        %v3226 = vadd.f32 0.0, %v3225
        %v3227 = vpop.f32.mrb[0].mxu0
        %v3228 = vpop.f32.mrb[0].mxu0
        %3229 = vdwg.mxu0
        %v3230 = vadd.f32 %v3155, %v3224
        %v3231 = vadd.f32 %v3156, %v3226
        %3232 = vrot.lane.b32.xlu0 %v2727, 112
        %v3233 = vpop.permute.xlu0 %3232
        %3234 = vrot.lane.b32.xlu0 %v2729, 112
        %v3235 = vpop.permute.xlu0 %3234
        %v3236 = vsel %vm814, %v3233, %v3235
        %v3237 = vsel %vm814, %v3235, %v3233
        %v3238 = vld [vmem:[%s817] ss:$8 sm:$0x3]
        %v3240 = vlaneseq
        %v3241 = vshrl.u32 %v3240, 7
        %v3242 = vsub.s32 0, %v3241
        %v3243 = vrot.slane %v3238, %v3242
        %v3244 = vlaneseq
        %v3245 = vshrl.u32 %v3244, 7
        %v3246 = vsub.s32 1, %v3245
        %v3247 = vrot.slane %v3238, %v3246
        %v3250 = vmul.f32 %v3236, %v3243
        %v3251 = vmul.f32 %v3237, %v3247
        %v3252 = vld [vmem:[%s832] sm:$0xf]
        %v3253 = vpack.c.bf16 %v3250, %v3250
        %v3254 = vpack.c.bf16 %v3251, %v3251
        %v3256 = vsel %vm340, %v3252, 0
        %v3259 = vsel %vm344, %v3253, 0
        %v3262 = vsel %vm344, %v3254, 0
        %3264 = vmatprep.subr.bf16.mxu0 %v3262
        %3265 = vmatpush1.bf16.msra.mxu0 %v3259
        %3266 = vmatprep.subr.bf16.mxu0 0
        %3267 = vmatpush1.bf16.msra.mxu0 0
        %3268 = vmatprep.subr.bf16.mxu0 0
        %3269 = vmatpush1.bf16.msra.mxu0 0
        %3270 = vmatprep.subr.bf16.mxu0 0
        %3271 = vmatpush1.bf16.msra.mxu0 0
        %3272 = vmatprep.subr.bf16.mxu0 0
        %3273 = vmatpush1.bf16.msra.mxu0 0
        %3274 = vmatprep.subr.bf16.mxu0 0
        %3275 = vmatpush1.bf16.msra.mxu0 0
        %3276 = vmatprep.subr.bf16.mxu0 0
        %3277 = vmatpush1.bf16.msra.mxu0 0
        %3278 = vmatprep.subr.bf16.mxu0 0
        %3279 = vmatpush1.bf16.msra.mxu0 0
        %3280 = vmatprep.subr.bf16.mxu0 0
        %3281 = vmatpush1.bf16.msra.mxu0 0
        %3282 = vmatprep.subr.bf16.mxu0 0
        %3283 = vmatpush1.bf16.msra.mxu0 0
        %3284 = vmatprep.subr.bf16.mxu0 0
        %3285 = vmatpush1.bf16.msra.mxu0 0
        %3286 = vmatprep.subr.bf16.mxu0 0
        %3287 = vmatpush1.bf16.msra.mxu0 0
        %3288 = vmatprep.subr.bf16.mxu0 0
        %3289 = vmatpush1.bf16.msra.mxu0 0
        %3290 = vmatprep.subr.bf16.mxu0 0
        %3291 = vmatpush1.bf16.msra.mxu0 0
        %3292 = vmatprep.subr.bf16.mxu0 0
        %3293 = vmatpush1.bf16.msra.mxu0 0
        %3294 = vmatprep.subr.bf16.mxu0 0
        %3295 = vmatpush1.bf16.msra.mxu0 0
        %3296 = vmatprep.mubr.bf16.mxu0 0
        %3297 = vmatmul.mubr.bf16.gmra.mrb[0].mxu0 %v3256
        %v3298 = vpop.f32.mrb[0].mxu0
        %v3299 = vadd.f32 0.0, %v3298
        %v3300 = vpop.f32.mrb[0].mxu0
        %v3301 = vadd.f32 0.0, %v3300
        %v3302 = vpop.f32.mrb[0].mxu0
        %v3303 = vpop.f32.mrb[0].mxu0
        %3304 = vdwg.mxu0
        %v3305 = vadd.f32 %v3230, %v3299
        %v3306 = vadd.f32 %v3231, %v3301
        %3307 = vrot.lane.b32.xlu0 %v2727, 111
        %v3308 = vpop.permute.xlu0 %3307
        %3309 = vrot.lane.b32.xlu0 %v2729, 111
        %v3310 = vpop.permute.xlu0 %3309
        %v3311 = vsel %vm892, %v3308, %v3310
        %v3312 = vsel %vm892, %v3310, %v3308
        %v3313 = vld [vmem:[%s895] ss:$8 sm:$0x3]
        %v3315 = vlaneseq
        %v3316 = vshrl.u32 %v3315, 7
        %v3317 = vsub.s32 0, %v3316
        %v3318 = vrot.slane %v3313, %v3317
        %v3319 = vlaneseq
        %v3320 = vshrl.u32 %v3319, 7
        %v3321 = vsub.s32 1, %v3320
        %v3322 = vrot.slane %v3313, %v3321
        %v3325 = vmul.f32 %v3311, %v3318
        %v3326 = vmul.f32 %v3312, %v3322
        %v3327 = vld [vmem:[%s910] sm:$0xf]
        %v3328 = vpack.c.bf16 %v3325, %v3325
        %v3329 = vpack.c.bf16 %v3326, %v3326
        %v3331 = vsel %vm340, %v3327, 0
        %v3334 = vsel %vm344, %v3328, 0
        %v3337 = vsel %vm344, %v3329, 0
        %3339 = vmatprep.subr.bf16.mxu0 %v3337
        %3340 = vmatpush1.bf16.msra.mxu0 %v3334
        %3341 = vmatprep.subr.bf16.mxu0 0
        %3342 = vmatpush1.bf16.msra.mxu0 0
        %3343 = vmatprep.subr.bf16.mxu0 0
        %3344 = vmatpush1.bf16.msra.mxu0 0
        %3345 = vmatprep.subr.bf16.mxu0 0
        %3346 = vmatpush1.bf16.msra.mxu0 0
        %3347 = vmatprep.subr.bf16.mxu0 0
        %3348 = vmatpush1.bf16.msra.mxu0 0
        %3349 = vmatprep.subr.bf16.mxu0 0
        %3350 = vmatpush1.bf16.msra.mxu0 0
        %3351 = vmatprep.subr.bf16.mxu0 0
        %3352 = vmatpush1.bf16.msra.mxu0 0
        %3353 = vmatprep.subr.bf16.mxu0 0
        %3354 = vmatpush1.bf16.msra.mxu0 0
        %3355 = vmatprep.subr.bf16.mxu0 0
        %3356 = vmatpush1.bf16.msra.mxu0 0
        %3357 = vmatprep.subr.bf16.mxu0 0
        %3358 = vmatpush1.bf16.msra.mxu0 0
        %3359 = vmatprep.subr.bf16.mxu0 0
        %3360 = vmatpush1.bf16.msra.mxu0 0
        %3361 = vmatprep.subr.bf16.mxu0 0
        %3362 = vmatpush1.bf16.msra.mxu0 0
        %3363 = vmatprep.subr.bf16.mxu0 0
        %3364 = vmatpush1.bf16.msra.mxu0 0
        %3365 = vmatprep.subr.bf16.mxu0 0
        %3366 = vmatpush1.bf16.msra.mxu0 0
        %3367 = vmatprep.subr.bf16.mxu0 0
        %3368 = vmatpush1.bf16.msra.mxu0 0
        %3369 = vmatprep.subr.bf16.mxu0 0
        %3370 = vmatpush1.bf16.msra.mxu0 0
        %3371 = vmatprep.mubr.bf16.mxu0 0
        %3372 = vmatmul.mubr.bf16.gmra.mrb[0].mxu0 %v3331
        %v3373 = vpop.f32.mrb[0].mxu0
        %v3374 = vadd.f32 0.0, %v3373
        %v3375 = vpop.f32.mrb[0].mxu0
        %v3376 = vadd.f32 0.0, %v3375
        %v3377 = vpop.f32.mrb[0].mxu0
        %v3378 = vpop.f32.mrb[0].mxu0
        %3379 = vdwg.mxu0
        %v3380 = vadd.f32 %v3305, %v3374
        %v3381 = vadd.f32 %v3306, %v3376
        %v3382 = vld [vmem:[%s3] sm:$0xff]
        %3384 = vset.pattern.permute.xlu0 0
        %3385 = vperm.xlu0 %3384, %v3382
        %v3386 = vpop.permute.xlu0 %3385
        %v3388 = vadd.f32 %v3380, %v3386
        %v3389 = vadd.f32 %v3381, %v3386
        %v3390 = vmax.f32 %v3388, 0.0
        %v3391 = vmax.f32 %v3389, 0.0
        %v3392 = vld [vmem:[%s4] sm:$0xf]
        %v3393 = vld [vmem:[%s4 + $0x4] sm:$0xf]
        %v3394 = vpack.c.bf16 %v3390, %v3390
        %v3395 = vpack.c.bf16 %v3391, %v3391
        %v3396 = vld [vmem:[%s5] sm:$0xf]
        %v3397 = vld [vmem:[%s5 + $0x4] sm:$0xf]
        %v3400 = vunpack.c.l.b16 %v3396
        %v3401 = vunpack.c.l.b16 %v3397
        %v3402 = vpack.c.b16 %v3401, %v3400
        %v3404 = vsel %vm340, %v3402, 0
        %3406 = vmatprep.subr.bf16.mxu0 %v3037
        %3407 = vmatpush1.bf16.msra.mxu0 %v3034
        %3408 = vmatprep.subr.bf16.mxu0 0
        %3409 = vmatpush1.bf16.msra.mxu0 0
        %3410 = vmatprep.subr.bf16.mxu0 0
        %3411 = vmatpush1.bf16.msra.mxu0 0
        %3412 = vmatprep.subr.bf16.mxu0 0
        %3413 = vmatpush1.bf16.msra.mxu0 0
        %3414 = vmatprep.subr.bf16.mxu0 0
        %3415 = vmatpush1.bf16.msra.mxu0 0
        %3416 = vmatprep.subr.bf16.mxu0 0
        %3417 = vmatpush1.bf16.msra.mxu0 0
        %3418 = vmatprep.subr.bf16.mxu0 0
        %3419 = vmatpush1.bf16.msra.mxu0 0
        %3420 = vmatprep.subr.bf16.mxu0 0
        %3421 = vmatpush1.bf16.msra.mxu0 0
        %3422 = vmatprep.subr.bf16.mxu0 0
        %3423 = vmatpush1.bf16.msra.mxu0 0
        %3424 = vmatprep.subr.bf16.mxu0 0
        %3425 = vmatpush1.bf16.msra.mxu0 0
        %3426 = vmatprep.subr.bf16.mxu0 0
        %3427 = vmatpush1.bf16.msra.mxu0 0
        %3428 = vmatprep.subr.bf16.mxu0 0
        %3429 = vmatpush1.bf16.msra.mxu0 0
        %3430 = vmatprep.subr.bf16.mxu0 0
        %3431 = vmatpush1.bf16.msra.mxu0 0
        %3432 = vmatprep.subr.bf16.mxu0 0
        %3433 = vmatpush1.bf16.msra.mxu0 0
        %3434 = vmatprep.subr.bf16.mxu0 0
        %3435 = vmatpush1.bf16.msra.mxu0 0
        %3436 = vmatprep.subr.bf16.mxu0 0
        %3437 = vmatpush1.bf16.msra.mxu0 0
        %3438 = vmatprep.mubr.bf16.mxu0 0
        %3439 = vmatmul.mubr.bf16.gmra.mrb[0].mxu0 %v3404
        %v3440 = vpop.f32.mrb[0].mxu0
        %v3441 = vadd.f32 0.0, %v3440
        %v3442 = vpop.f32.mrb[0].mxu0
        %v3443 = vadd.f32 0.0, %v3442
        %v3444 = vpop.f32.mrb[0].mxu0
        %v3445 = vadd.f32 0.0, %v3444
        %v3446 = vpop.f32.mrb[0].mxu0
        %v3447 = vadd.f32 0.0, %v3446
        %3448 = vdwg.mxu0
        %v3451 = vunpack.c.l.b16 %v3392
        %v3452 = vunpack.c.l.b16 %v3393
        %v3453 = vpack.c.b16 %v3452, %v3451
        %v3455 = vsel %vm1038, %v3453, 0
        %v3458 = vsel %vm1042, %v3394, 0
        %v3461 = vsel %vm1042, %v3395, 0
        %3463 = vmatprep.subr.bf16.mxu0 %v3461
        %3464 = vmatpush1.bf16.msra.mxu0 %v3458
        %3465 = vmatprep.subr.bf16.mxu0 0
        %3466 = vmatpush1.bf16.msra.mxu0 0
        %3467 = vmatprep.subr.bf16.mxu0 0
        %3468 = vmatpush1.bf16.msra.mxu0 0
        %3469 = vmatprep.subr.bf16.mxu0 0
        %3470 = vmatpush1.bf16.msra.mxu0 0
        %3471 = vmatprep.subr.bf16.mxu0 0
        %3472 = vmatpush1.bf16.msra.mxu0 0
        %3473 = vmatprep.subr.bf16.mxu0 0
        %3474 = vmatpush1.bf16.msra.mxu0 0
        %3475 = vmatprep.subr.bf16.mxu0 0
        %3476 = vmatpush1.bf16.msra.mxu0 0
        %3477 = vmatprep.subr.bf16.mxu0 0
        %3478 = vmatpush1.bf16.msra.mxu0 0
        %3479 = vmatprep.subr.bf16.mxu0 0
        %3480 = vmatpush1.bf16.msra.mxu0 0
        %3481 = vmatprep.subr.bf16.mxu0 0
        %3482 = vmatpush1.bf16.msra.mxu0 0
        %3483 = vmatprep.subr.bf16.mxu0 0
        %3484 = vmatpush1.bf16.msra.mxu0 0
        %3485 = vmatprep.subr.bf16.mxu0 0
        %3486 = vmatpush1.bf16.msra.mxu0 0
        %3487 = vmatprep.subr.bf16.mxu0 0
        %3488 = vmatpush1.bf16.msra.mxu0 0
        %3489 = vmatprep.subr.bf16.mxu0 0
        %3490 = vmatpush1.bf16.msra.mxu0 0
        %3491 = vmatprep.subr.bf16.mxu0 0
        %3492 = vmatpush1.bf16.msra.mxu0 0
        %3493 = vmatprep.subr.bf16.mxu0 0
        %3494 = vmatpush1.bf16.msra.mxu0 0
        %3495 = vmatprep.mubr.bf16.mxu0 0
        %3496 = vmatmul.mubr.bf16.gmra.mrb[0].mxu0 %v3455
        %v3497 = vpop.f32.mrb[0].mxu0
        %v3498 = vadd.f32 %v3441, %v3497
        %v3499 = vpop.f32.mrb[0].mxu0
        %v3500 = vadd.f32 %v3443, %v3499
        %v3501 = vpop.f32.mrb[0].mxu0
        %v3502 = vadd.f32 %v3445, %v3501
        %v3503 = vpop.f32.mrb[0].mxu0
        %v3504 = vadd.f32 %v3447, %v3503
        %3505 = vdwg.mxu0
        %v3506 = vld [vmem:[%s6] sm:$0xff]
        %v3507 = vld [vmem:[%s6 + $0x8] sm:$0xff]
        %3509 = vset.pattern.permute.xlu0 0
        %3510 = vperm.xlu0 %3509, %v3506
        %v3511 = vpop.permute.xlu0 %3510
        %3514 = vset.pattern.permute.xlu0 0
        %3515 = vperm.xlu0 %3514, %v3507
        %v3516 = vpop.permute.xlu0 %3515
        %v3518 = vadd.f32 %v3498, %v3511
        %v3519 = vadd.f32 %v3500, %v3511
        %v3520 = vadd.f32 %v3502, %v3516
        %v3521 = vadd.f32 %v3504, %v3516
        %v3522 = vmax.f32 %v3518, 0.0
        %v3523 = vmax.f32 %v3519, 0.0
        %v3524 = vmax.f32 %v3520, 0.0
        %v3525 = vmax.f32 %v3521, 0.0
        %s3526 = scalar_lea.vmem %s274, 96 [#allocation2]
        %3527 = vst [vmem:[%s3526] sm:$0xff] %v3522
        %3528 = vst [vmem:[%s3526 + $0x8] sm:$0xff] %v3523
        %3529 = vst [vmem:[%s3526 + $0x10] sm:$0xff] %v3524
        %3530 = vst [vmem:[%s3526 + $0x18] sm:$0xff] %v3525
        %s3531 = sand.u32 %s181, 1
        %s3532 = scalar_lea.sflag [#allocation3], %s3531
        %s3533 = sand.u32 %s181, 1
        %s3534 = smul.addr %s3533, 128
        %s3535 = scalar_lea.vmem [#allocation2], %s3534
        // Predicated region
        $region49: #{tpu_custom_call.1} parent=47 // pred_check
          %p3536 = pneg %p191
        $region50: #{tpu_custom_call.1} parent=47 // pred_check_branch
          %3538 = sbr.rel (%p3536) target = $region52
        $region51: #{tpu_custom_call.1} parent=47 // pred_region
          %s3539 = smul.u32 4, %s21
          %s3541 = ssub.s32 2048, 2048
          %3542 = vsyncadd %s3532, %s3541
          %s3543 = smul.addr %s3539, 4
          %s3544 = smul.addr %s3543, 128
          %s3545 = scalar_lea.hbm %s7, %s3544
          %s3546 = sshll.u32 %s3535, 4
          %s3547 = int_to_ptr.vmem [resolvable:$true] %s3546
          %3552 = dma.vmem_to_hbm [thread:$0]  %s3547, 2048, %s3545, %s3532, 256, 256, 16
        $region52: #{tpu_custom_call.1} parent=47 // pred_fallthru
          _
      $region48: #{tpu_custom_call.1} parent=5 // pred_fallthru
        _
      %p3553 = scmp.le.s32.totalorder 2, %s16
      // Predicated region
      $region53: #{tpu_custom_call.1} parent=5 // pred_check
        %p3554 = pneg %p3553
      $region54: #{tpu_custom_call.1} parent=5 // pred_check_branch
        %3556 = sbr.rel (%p3554) target = $region56
      $region55: #{tpu_custom_call.1} parent=5 // pred_region
        %s3557 = ssub.s32 %s16, 2
        // Predicated region
        $region57: #{tpu_custom_call.1} parent=55 // pred_check
          %p3558 = pneg %p197
        $region58: #{tpu_custom_call.1} parent=55 // pred_check_branch
          %3560 = sbr.rel (%p3558) target = $region60
        $region59: #{tpu_custom_call.1} parent=55 // pred_region
          %s3561 = sand.u32 %s182, 1
          %s3562 = scalar_lea.sflag [#allocation3], %s3561
          %s3563 = sand.u32 %s182, 1
          %s3564 = smul.addr %s3563, 128
          %s3565 = scalar_lea.vmem [#allocation2], %s3564
          %3566 = dma.done %s3562, 2048
        $region60: #{tpu_custom_call.1} parent=55 // pred_fallthru
          _
      $region56: #{tpu_custom_call.1} parent=5 // pred_fallthru
        _
    $region6: #{tpu_custom_call.1} parent=1 // loop_footer
      %s20 = sadd.s32 1, %s16
    $region7: #{tpu_custom_call.1} parent=1 // loop_footer_branch
      %15 = sbr.rel target = $region3
    $region8: #{tpu_custom_call.1} parent=1 // loop_exit
      _
    %3567 = vsyncpa [#allocation3], 1
    %s3568 = scalar_lea.sflag [#allocation3], 1
    %3569 = vsyncpa %s3568, 1

</llo_original>
